<compile_context>
chip_gen: v7x
topology: tpu7x:2x2x1
jax: 0.10.0
libtpu: 0.0.40
codegen_flags: <defaults>
</compile_context>

<pallas_src>
import functools
import math

import jax
import jax.numpy as jnp
import numpy as np
from jax import lax
from jax.experimental import pallas as pl
from jax.experimental.pallas import tpu as pltpu

_SQRT2 = float(math.sqrt(2.0))


def _round_up(v, m):
    return (v + m - 1) // m * m


def _pick_tn(n_pad):
    # 256 matches the 256-wide MXU N dim on v6e/v7x; fall back to 128.
    return 256 if n_pad % 256 == 0 else 128


def _pick_tm(mw, tn):
    """M tile: multiple of 16, f32 acc tile <= ~128 KB, minimal row padding."""
    cap = max(16, ((128 * 1024) // (tn * 4)) // 16 * 16)
    if mw <= cap:
        return _round_up(mw, 16)
    best_tm, best_pad = cap, _round_up(mw, cap)
    for tm in range(cap, 15, -16):
        pad = _round_up(mw, tm)
        if pad < best_pad:
            best_tm, best_pad = tm, pad
    return best_tm


# ----------------------------------------------------------------------------
# Pallas kernel: implicit-GEMM 3x3 conv (kx folded into K) + bias + leaky*sqrt2
# ----------------------------------------------------------------------------
def _conv_taps_kernel(x_ref, w_ref, b_ref, o_ref, *, taps, tm):
    # x_ref: (n_ph, rows, 3*Cin) bf16 -- whole kw-folded activation slab, VMEM
    #        resident (constant block index across the grid).
    # w_ref: (3, 3*Cin, tn) bf16 -- ky-major weights, EqualConv scale pre-folded.
    # b_ref: (1, tn) f32         -- FusedLeakyReLU bias.
    # o_ref: (tm, tn)            -- one (M, Cout) output tile.
    i = pl.program_id(0)                       # M-tile index (outer grid axis)
    base = i * tm
    acc = None
    for t, (ph, off) in enumerate(taps):       # 3 ky taps, unrolled
        start = pl.multiple_of(base + off, 8)  # off and tm are 8-aligned
        xs = x_ref[ph, pl.ds(start, tm), :]
        contrib = jnp.dot(xs, w_ref[t], preferred_element_type=jnp.float32)
        acc = contrib if acc is None else acc + contrib
    y = acc + b_ref[...]                                    # FusedLeakyReLU bias
    y = jnp.where(y >= 0.0, y, 0.2 * y) * _SQRT2            # leaky(0.2) * sqrt(2)
    o_ref[...] = y.astype(o_ref.dtype)


def _build_slab(x, stride, ho, wo, w_pitch, tm):
    """Partial im2col (kx folded into channels) of the padded NHWC input.

    x: (B, Hp, Wp, Cp) bf16 with conv padding applied, Cp % 8 == 0.
    Returns (slab, taps, mw, mw_pad, hq) where
      slab : (n_ph, mw_pad + max_off, 3*Cp) bf16,
      taps : 3 (phase, row_offset) pairs (one per ky),
      output wide-row r = b*hq*w_pitch + y*w_pitch + x and tap ky reads
      slab[phase, r + row_offset, :].
    """
    B, Hp, Wp, Cp = x.shape
    if stride == 1:
        hq = Hp                                        # ho + 2 halo rows / image
        need_w = w_pitch + 2
        xw = jnp.pad(x, ((0, 0), (0, 0), (0, max(0, need_w - Wp)), (0, 0)))
        xw = xw[:, :, :need_w, :]
        slab = jnp.concatenate([xw[:, :, d:d + w_pitch, :] for d in range(3)],
                               axis=-1)[None]          # (1, B, hq, w_pitch, 3Cp)
        taps = [(0, d * w_pitch) for d in range(3)]
    elif stride == 2:
        hq = ho + 1
        need_w = 2 * w_pitch + 2
        xw = jnp.pad(x, ((0, 0), (0, 0), (0, max(0, need_w - Wp)), (0, 0)))
        xw = xw[:, :, :need_w, :]
        phases = []
        for py in range(2):                            # row-parity phase split
            rows = xw[:, py::2, :, :]
            rows = jnp.pad(rows, ((0, 0), (0, hq - rows.shape[1]), (0, 0), (0, 0)))
            phases.append(jnp.concatenate(
                [rows[:, :, d:d + 2 * w_pitch:2, :] for d in range(3)], axis=-1))
        slab = jnp.stack(phases, axis=0)               # (2, B, hq, w_pitch, 3Cp)
        taps = [(dy % 2, (dy // 2) * w_pitch) for dy in range(3)]
    else:
        raise ValueError(f"unsupported stride {stride}")

    n_ph = slab.shape[0]
    mw = B * hq * w_pitch
    mw_pad = _round_up(mw, tm)
    max_off = max(off for _, off in taps)
    slab = slab.reshape(n_ph, mw, 3 * Cp)
    slab = jnp.pad(slab, ((0, 0), (0, mw_pad + max_off - mw), (0, 0)))
    return slab, taps, mw, mw_pad, hq


def equal_conv3x3_fused_lrelu(x_nhwc, weight, bias, *, stride, pad,
                              out_dtype=jnp.float32):
    """EqualConv2d(3x3, stride, pad, bias=False) + FusedLeakyReLU(bias), NHWC."""
    B, H, W, Cin = x_nhwc.shape
    Cout = weight.shape[0]
    scale = 1.0 / math.sqrt(Cin * 9)                   # EqualConv2d scale

    x = x_nhwc.astype(jnp.bfloat16)
    if pad:
        x = jnp.pad(x, ((0, 0), (pad, pad), (pad, pad), (0, 0)))
    Hp, Wp = x.shape[1], x.shape[2]
    Ho = (Hp - 3) // stride + 1
    Wo = (Wp - 3) // stride + 1

    Cp = _round_up(Cin, 8)
    if Cp != Cin:
        x = jnp.pad(x, ((0, 0), (0, 0), (0, 0), (0, Cp - Cin)))

    n_pad = _round_up(Cout, 128)
    tn = _pick_tn(n_pad)
    w_pitch = _round_up(Wo, 8)                         # 8-aligned row pitch
    hq0 = Hp if stride == 1 else Ho + 1
    tm = _pick_tm(B * hq0 * w_pitch, tn)

    slab, taps, mw, mw_pad, hq = _build_slab(x, stride, Ho, Wo, w_pitch, tm)
    k3 = slab.shape[-1]                                # 3 * Cp contraction depth

    # weights: (Cout, Cin, ky, kx) -> (ky, kx*Cp, n_pad), scale folded, bf16.
    wk = (weight.astype(jnp.float32) * scale).transpose(2, 3, 1, 0)
    wk = jnp.pad(wk, ((0, 0), (0, 0), (0, Cp - Cin), (0, n_pad - Cout)))
    wmat = wk.reshape(3, 3 * Cp, n_pad).astype(jnp.bfloat16)
    b2d = jnp.pad(bias.astype(jnp.float32).reshape(1, Cout),
                  ((0, 0), (0, n_pad - Cout)))

    num_m = mw_pad // tm
    num_n = n_pad // tn

    # VMEM budget from the actual footprint (slab + double-buffered weight /
    # bias / output tiles), with 2x headroom; bounded for the 64 MiB v7x part.
    slab_bytes = slab.size * 2
    blk_bytes = 3 * k3 * tn * 2 + tn * 4 + tm * tn * jnp.dtype(out_dtype).itemsize
    vmem_limit = int(min(64 << 20, max(32 << 20, 2 * (2 * slab_bytes + 2 * blk_bytes))))

    kern = functools.partial(_conv_taps_kernel, taps=tuple(taps), tm=tm)
    out = pl.pallas_call(
        kern,
        out_shape=jax.ShapeDtypeStruct((mw_pad, n_pad), out_dtype),
        grid_spec=pltpu.PrefetchScalarGridSpec(
            num_scalar_prefetch=0,
            grid=(num_m, num_n),
            in_specs=[
                pl.BlockSpec(slab.shape, lambda i, j: (0, 0, 0)),
                pl.BlockSpec((3, k3, tn), lambda i, j: (0, 0, j)),
                pl.BlockSpec((1, tn), lambda i, j: (0, j)),
            ],
            out_specs=pl.BlockSpec((tm, tn), lambda i, j: (i, j)),
        ),
        compiler_params=pltpu.CompilerParams(
            dimension_semantics=("parallel", "parallel"),
            vmem_limit_bytes=vmem_limit),
    )(slab, wmat, b2d)

    return out[:mw].reshape(B, hq, w_pitch, n_pad)[:, :Ho, :Wo, :Cout]


# ----------------------------------------------------------------------------
# Blur (upfirdn2d with outer([1,3,3,1])/64, pad=(2,2)) -- XLA-fusable glue, bf16
# ----------------------------------------------------------------------------
_BLUR_1D = np.array([1.0, 3.0, 3.0, 1.0], np.float32)
_BLUR_1D = _BLUR_1D / _BLUR_1D.sum()                   # separable /8 per axis


def blur_pad22(x_nhwc):
    """Blur layer preceding the stride-2 conv; (B,H,W,C) -> (B,H+1,W+1,C) bf16."""
    B, H, W, C = x_nhwc.shape
    x = x_nhwc.astype(jnp.float32)                     # f32 math, bf16 storage
    xh = jnp.pad(x, ((0, 0), (2, 2), (0, 0), (0, 0)))
    ho = H + 1
    yh = sum(float(_BLUR_1D[i]) * xh[:, i:i + ho, :, :] for i in range(4))
    yw = jnp.pad(yh, ((0, 0), (0, 0), (2, 2), (0, 0)))
    wo = W + 1
    y = sum(float(_BLUR_1D[j]) * yw[:, :, j:j + wo, :] for j in range(4))
    return y.astype(jnp.bfloat16)


# ----------------------------------------------------------------------------
# ConvBlock forward (NCHW in / NCHW out, matching the PyTorch module)
# ----------------------------------------------------------------------------
def conv_block_forward(params, x_nchw):
    x = jnp.transpose(x_nchw, (0, 2, 3, 1))                        # NCHW -> NHWC
    # conv1: ConvLayer(Cin, Cin, 3): EqualConv2d(pad=1, s=1) + FusedLeakyReLU
    x = equal_conv3x3_fused_lrelu(x, params['conv1_w'], params['conv1_b'],
                                  stride=1, pad=1, out_dtype=jnp.bfloat16)
    # conv2: ConvLayer(Cin, Cout, 3, downsample=True):
    #        Blur(pad=(2,2)) -> EqualConv2d(s=2, pad=0) -> FusedLeakyReLU
    x = blur_pad22(x)
    x = equal_conv3x3_fused_lrelu(x, params['conv2_w'], params['conv2_b'],
                                  stride=2, pad=0, out_dtype=jnp.float32)
    return jnp.transpose(x, (0, 3, 1, 2))                          # NHWC -> NCHW


# ----------------------------------------------------------------------------
# Pure-JAX f32 reference mirroring the PyTorch module (for a tolerance check)
# ----------------------------------------------------------------------------
def _conv_block_reference(params, x_nchw):
    def equal_conv(x, w, stride, pad):
        s = 1.0 / math.sqrt(w.shape[1] * w.shape[2] * w.shape[3])
        return lax.conv_general_dilated(
            x, w * s, (stride, stride), [(pad, pad), (pad, pad)],
            dimension_numbers=('NCHW', 'OIHW', 'NCHW'))

    def fused_lrelu(x, b):
        x = x + b.reshape(1, -1, 1, 1)
        return jnp.where(x >= 0, x, 0.2 * x) * _SQRT2

    def blur(x):
        b1 = jnp.asarray(_BLUR_1D, jnp.float32)
        k2 = jnp.outer(b1, b1)
        c = x.shape[1]
        kd = jnp.broadcast_to(k2, (c, 1, 4, 4))
        return lax.conv_general_dilated(
            x, kd, (1, 1), [(2, 2), (2, 2)],
            dimension_numbers=('NCHW', 'OIHW', 'NCHW'), feature_group_count=c)

    y = fused_lrelu(equal_conv(x_nchw, params['conv1_w'], 1, 1), params['conv1_b'])
    y = blur(y)
    y = fused_lrelu(equal_conv(y, params['conv2_w'], 2, 0), params['conv2_b'])
    return y


# ----------------------------------------------------------------------------
if __name__ == "__main__":
    # TODO(synk): spectral_norm (sn=True) branch of ConvLayer is not implemented
    # (default sn=False / EqualConv2d path only).
    B, C_IN, C_OUT, H, W = 2, 128, 256, 16, 16
    key = jax.random.PRNGKey(0)
    kw1, kb1, kw2, kb2, kx = jax.random.split(key, 5)

    params = {
        'conv1_w': jax.random.normal(kw1, (C_IN, C_IN, 3, 3), jnp.float32),
        'conv1_b': 0.1 * jax.random.normal(kb1, (C_IN,), jnp.float32),
        'conv2_w': jax.random.normal(kw2, (C_OUT, C_IN, 3, 3), jnp.float32),
        'conv2_b': 0.1 * jax.random.normal(kb2, (C_OUT,), jnp.float32),
    }
    x = jax.random.normal(kx, (B, C_IN, H, W), jnp.float32)

    fwd = jax.jit(functools.partial(conv_block_forward, params))
    y = fwd(x)
    jax.block_until_ready(y)
    assert y.shape == (B, C_OUT, H // 2, W // 2) and y.dtype == jnp.float32

    # bf16 activations/weights with f32 accumulation -> loose tolerance vs f32 ref.
    ref = jax.jit(functools.partial(_conv_block_reference, params))(x)
    err = float(jnp.max(jnp.abs(y - ref)))
    bound = 0.05 * float(jnp.max(jnp.abs(ref))) + 0.15
    assert err <= bound, f"max abs err {err:.4f} > {bound:.4f}"
    print("KERNEL_OK")
</pallas_src>

<mosaic_0001>
module attributes {stable_mosaic.version = 11 : i64} {
  func.func @_conv_taps_kernel(%arg0: i32, %arg1: i32, %arg2: memref<1x608x384xbf16, #tpu.memory_space<vmem>>, %arg3: memref<3x384x128xbf16, #tpu.memory_space<vmem>>, %arg4: memref<1x128xf32, #tpu.memory_space<vmem>>, %arg5: memref<192x128xbf16, #tpu.memory_space<vmem>>) attributes {dimension_semantics = [#tpu.dimension_semantics<parallel>, #tpu.dimension_semantics<parallel>], iteration_bounds = array<i64: 3, 1>, scalar_prefetch = 0 : i64, scratch_operands = 0 : i64, tpu.core_type = #tpu.core_type<tc>, window_params = [{pipeline_mode = #tpu.pipeline_mode<synchronous>, transform_indices = @transform_0, window_bounds = array<i64: 1, 608, 384>}, {transform_indices = @transform_1, window_bounds = array<i64: 3, 384, 128>}, {transform_indices = @transform_2, window_bounds = array<i64: 1, 128>}, {transform_indices = @transform_3, window_bounds = array<i64: 192, 128>}]} {
    %c192_i32 = arith.constant 192 : i32
    %0 = arith.muli %arg0, %c192_i32 : i32
    %c0_i32 = arith.constant 0 : i32
    %1 = arith.addi %0, %c0_i32 : i32
    %2 = tpu.assume_multiple %1, 8 : i32
    %c0 = arith.constant 0 : index
    %3 = arith.index_cast %2 : i32 to index
    %c0_0 = arith.constant 0 : index
    %4 = vector.load %arg2[%c0, %3, %c0_0] : memref<1x608x384xbf16, #tpu.memory_space<vmem>>, vector<1x192x384xbf16>
    %5 = vector.shape_cast %4 : vector<1x192x384xbf16> to vector<192x384xbf16>
    %c0_1 = arith.constant 0 : index
    %c0_2 = arith.constant 0 : index
    %c0_3 = arith.constant 0 : index
    %6 = vector.load %arg3[%c0_1, %c0_2, %c0_3] : memref<3x384x128xbf16, #tpu.memory_space<vmem>>, vector<1x384x128xbf16>
    %7 = vector.shape_cast %6 : vector<1x384x128xbf16> to vector<384x128xbf16>
    %cst = arith.constant dense<0.000000e+00> : vector<192x128xf32>
    %8 = tpu.matmul %5, %7, %cst {dimension_numbers = #tpu.dot_dimension_numbers<[1], [0], [0], [1], [0, 0, 1, 1], [], []>} : vector<192x384xbf16>, vector<384x128xbf16>, vector<192x128xf32> -> vector<192x128xf32>
    %c16_i32 = arith.constant 16 : i32
    %9 = arith.addi %0, %c16_i32 : i32
    %10 = tpu.assume_multiple %9, 8 : i32
    %c0_4 = arith.constant 0 : index
    %11 = arith.index_cast %10 : i32 to index
    %c0_5 = arith.constant 0 : index
    %12 = vector.load %arg2[%c0_4, %11, %c0_5] : memref<1x608x384xbf16, #tpu.memory_space<vmem>>, vector<1x192x384xbf16>
    %13 = vector.shape_cast %12 : vector<1x192x384xbf16> to vector<192x384xbf16>
    %c1 = arith.constant 1 : index
    %c0_6 = arith.constant 0 : index
    %c0_7 = arith.constant 0 : index
    %14 = vector.load %arg3[%c1, %c0_6, %c0_7] : memref<3x384x128xbf16, #tpu.memory_space<vmem>>, vector<1x384x128xbf16>
    %15 = vector.shape_cast %14 : vector<1x384x128xbf16> to vector<384x128xbf16>
    %cst_8 = arith.constant dense<0.000000e+00> : vector<192x128xf32>
    %16 = tpu.matmul %13, %15, %cst_8 {dimension_numbers = #tpu.dot_dimension_numbers<[1], [0], [0], [1], [0, 0, 1, 1], [], []>} : vector<192x384xbf16>, vector<384x128xbf16>, vector<192x128xf32> -> vector<192x128xf32>
    %17 = arith.addf %8, %16 : vector<192x128xf32>
    %c32_i32 = arith.constant 32 : i32
    %18 = arith.addi %0, %c32_i32 : i32
    %19 = tpu.assume_multiple %18, 8 : i32
    %c0_9 = arith.constant 0 : index
    %20 = arith.index_cast %19 : i32 to index
    %c0_10 = arith.constant 0 : index
    %21 = vector.load %arg2[%c0_9, %20, %c0_10] : memref<1x608x384xbf16, #tpu.memory_space<vmem>>, vector<1x192x384xbf16>
    %22 = vector.shape_cast %21 : vector<1x192x384xbf16> to vector<192x384xbf16>
    %c2 = arith.constant 2 : index
    %c0_11 = arith.constant 0 : index
    %c0_12 = arith.constant 0 : index
    %23 = vector.load %arg3[%c2, %c0_11, %c0_12] : memref<3x384x128xbf16, #tpu.memory_space<vmem>>, vector<1x384x128xbf16>
    %24 = vector.shape_cast %23 : vector<1x384x128xbf16> to vector<384x128xbf16>
    %cst_13 = arith.constant dense<0.000000e+00> : vector<192x128xf32>
    %25 = tpu.matmul %22, %24, %cst_13 {dimension_numbers = #tpu.dot_dimension_numbers<[1], [0], [0], [1], [0, 0, 1, 1], [], []>} : vector<192x384xbf16>, vector<384x128xbf16>, vector<192x128xf32> -> vector<192x128xf32>
    %26 = arith.addf %17, %25 : vector<192x128xf32>
    %c0_14 = arith.constant 0 : index
    %c0_15 = arith.constant 0 : index
    %27 = vector.load %arg4[%c0_14, %c0_15] : memref<1x128xf32, #tpu.memory_space<vmem>>, vector<1x128xf32>
    %28 = vector.broadcast %27 : vector<1x128xf32> to vector<192x128xf32>
    %29 = arith.addf %26, %28 : vector<192x128xf32>
    %cst_16 = arith.constant 0.000000e+00 : f32
    %30 = vector.broadcast %cst_16 : f32 to vector<192x128xf32>
    %31 = arith.cmpf oge, %29, %30 : vector<192x128xf32>
    %cst_17 = arith.constant 2.000000e-01 : f32
    %32 = vector.broadcast %cst_17 : f32 to vector<192x128xf32>
    %33 = arith.mulf %32, %29 : vector<192x128xf32>
    %34 = arith.select %31, %29, %33 : vector<192x128xi1>, vector<192x128xf32>
    %cst_18 = arith.constant 1.41421354 : f32
    %35 = vector.broadcast %cst_18 : f32 to vector<192x128xf32>
    %36 = arith.mulf %34, %35 : vector<192x128xf32>
    %37 = arith.truncf %36 : vector<192x128xf32> to vector<192x128xbf16>
    %c0_19 = arith.constant 0 : index
    %c0_20 = arith.constant 0 : index
    %38 = vector.load %arg5[%c0_19, %c0_20] : memref<192x128xbf16, #tpu.memory_space<vmem>>, vector<192x128xbf16>
    tpu.vector_store %arg5[%c0_19, %c0_20], %37 {strides = array<i32>} : memref<192x128xbf16, #tpu.memory_space<vmem>>, vector<192x128xbf16>,
    return
  }
  func.func @transform_0(%arg0: i32, %arg1: i32) -> (i32, i32, i32) {
    %c0_i32 = arith.constant 0 : i32
    %c0_i32_0 = arith.constant 0 : i32
    %c0_i32_1 = arith.constant 0 : i32
    %c0_i32_2 = arith.constant 0 : i32
    return %c0_i32, %c0_i32_0, %c0_i32_1 : i32, i32, i32
  }
  func.func @transform_1(%arg0: i32, %arg1: i32) -> (i32, i32, i32) {
    %c0_i32 = arith.constant 0 : i32
    %c0_i32_0 = arith.constant 0 : i32
    %c0_i32_1 = arith.constant 0 : i32
    return %c0_i32, %c0_i32_0, %arg1 : i32, i32, i32
  }
  func.func @transform_2(%arg0: i32, %arg1: i32) -> (i32, i32) {
    %c0_i32 = arith.constant 0 : i32
    %c0_i32_0 = arith.constant 0 : i32
    return %c0_i32, %arg1 : i32, i32
  }
  func.func @transform_3(%arg0: i32, %arg1: i32) -> (i32, i32) {
    %c0_i32 = arith.constant 0 : i32
    return %arg0, %arg1 : i32, i32
  }
}

module attributes {stable_mosaic.version = 11 : i64} {
  func.func @_conv_taps_kernel(%arg0: i32, %arg1: i32, %arg2: memref<2x152x384xbf16, #tpu.memory_space<vmem>>, %arg3: memref<3x384x256xbf16, #tpu.memory_space<vmem>>, %arg4: memref<1x256xf32, #tpu.memory_space<vmem>>, %arg5: memref<48x256xf32, #tpu.memory_space<vmem>>) attributes {dimension_semantics = [#tpu.dimension_semantics<parallel>, #tpu.dimension_semantics<parallel>], iteration_bounds = array<i64: 3, 1>, scalar_prefetch = 0 : i64, scratch_operands = 0 : i64, tpu.core_type = #tpu.core_type<tc>, window_params = [{pipeline_mode = #tpu.pipeline_mode<synchronous>, transform_indices = @transform_0, window_bounds = array<i64: 2, 152, 384>}, {transform_indices = @transform_1, window_bounds = array<i64: 3, 384, 256>}, {transform_indices = @transform_2, window_bounds = array<i64: 1, 256>}, {transform_indices = @transform_3, window_bounds = array<i64: 48, 256>}]} {
    %c48_i32 = arith.constant 48 : i32
    %0 = arith.muli %arg0, %c48_i32 : i32
    %c0_i32 = arith.constant 0 : i32
    %1 = arith.addi %0, %c0_i32 : i32
    %2 = tpu.assume_multiple %1, 8 : i32
    %c0 = arith.constant 0 : index
    %3 = arith.index_cast %2 : i32 to index
    %c0_0 = arith.constant 0 : index
    %4 = vector.load %arg2[%c0, %3, %c0_0] : memref<2x152x384xbf16, #tpu.memory_space<vmem>>, vector<1x48x384xbf16>
    %5 = vector.shape_cast %4 : vector<1x48x384xbf16> to vector<48x384xbf16>
    %c0_1 = arith.constant 0 : index
    %c0_2 = arith.constant 0 : index
    %c0_3 = arith.constant 0 : index
    %6 = vector.load %arg3[%c0_1, %c0_2, %c0_3] : memref<3x384x256xbf16, #tpu.memory_space<vmem>>, vector<1x384x256xbf16>
    %7 = vector.shape_cast %6 : vector<1x384x256xbf16> to vector<384x256xbf16>
    %cst = arith.constant dense<0.000000e+00> : vector<48x256xf32>
    %8 = tpu.matmul %5, %7, %cst {dimension_numbers = #tpu.dot_dimension_numbers<[1], [0], [0], [1], [0, 0, 1, 1], [], []>} : vector<48x384xbf16>, vector<384x256xbf16>, vector<48x256xf32> -> vector<48x256xf32>
    %c0_i32_4 = arith.constant 0 : i32
    %9 = arith.addi %0, %c0_i32_4 : i32
    %10 = tpu.assume_multiple %9, 8 : i32
    %c1 = arith.constant 1 : index
    %11 = arith.index_cast %10 : i32 to index
    %c0_5 = arith.constant 0 : index
    %12 = vector.load %arg2[%c1, %11, %c0_5] : memref<2x152x384xbf16, #tpu.memory_space<vmem>>, vector<1x48x384xbf16>
    %13 = vector.shape_cast %12 : vector<1x48x384xbf16> to vector<48x384xbf16>
    %c1_6 = arith.constant 1 : index
    %c0_7 = arith.constant 0 : index
    %c0_8 = arith.constant 0 : index
    %14 = vector.load %arg3[%c1_6, %c0_7, %c0_8] : memref<3x384x256xbf16, #tpu.memory_space<vmem>>, vector<1x384x256xbf16>
    %15 = vector.shape_cast %14 : vector<1x384x256xbf16> to vector<384x256xbf16>
    %cst_9 = arith.constant dense<0.000000e+00> : vector<48x256xf32>
    %16 = tpu.matmul %13, %15, %cst_9 {dimension_numbers = #tpu.dot_dimension_numbers<[1], [0], [0], [1], [0, 0, 1, 1], [], []>} : vector<48x384xbf16>, vector<384x256xbf16>, vector<48x256xf32> -> vector<48x256xf32>
    %17 = arith.addf %8, %16 : vector<48x256xf32>
    %c8_i32 = arith.constant 8 : i32
    %18 = arith.addi %0, %c8_i32 : i32
    %19 = tpu.assume_multiple %18, 8 : i32
    %c0_10 = arith.constant 0 : index
    %20 = arith.index_cast %19 : i32 to index
    %c0_11 = arith.constant 0 : index
    %21 = vector.load %arg2[%c0_10, %20, %c0_11] : memref<2x152x384xbf16, #tpu.memory_space<vmem>>, vector<1x48x384xbf16>
    %22 = vector.shape_cast %21 : vector<1x48x384xbf16> to vector<48x384xbf16>
    %c2 = arith.constant 2 : index
    %c0_12 = arith.constant 0 : index
    %c0_13 = arith.constant 0 : index
    %23 = vector.load %arg3[%c2, %c0_12, %c0_13] : memref<3x384x256xbf16, #tpu.memory_space<vmem>>, vector<1x384x256xbf16>
    %24 = vector.shape_cast %23 : vector<1x384x256xbf16> to vector<384x256xbf16>
    %cst_14 = arith.constant dense<0.000000e+00> : vector<48x256xf32>
    %25 = tpu.matmul %22, %24, %cst_14 {dimension_numbers = #tpu.dot_dimension_numbers<[1], [0], [0], [1], [0, 0, 1, 1], [], []>} : vector<48x384xbf16>, vector<384x256xbf16>, vector<48x256xf32> -> vector<48x256xf32>
    %26 = arith.addf %17, %25 : vector<48x256xf32>
    %c0_15 = arith.constant 0 : index
    %c0_16 = arith.constant 0 : index
    %27 = vector.load %arg4[%c0_15, %c0_16] : memref<1x256xf32, #tpu.memory_space<vmem>>, vector<1x256xf32>
    %28 = vector.broadcast %27 : vector<1x256xf32> to vector<48x256xf32>
    %29 = arith.addf %26, %28 : vector<48x256xf32>
    %cst_17 = arith.constant 0.000000e+00 : f32
    %30 = vector.broadcast %cst_17 : f32 to vector<48x256xf32>
    %31 = arith.cmpf oge, %29, %30 : vector<48x256xf32>
    %cst_18 = arith.constant 2.000000e-01 : f32
    %32 = vector.broadcast %cst_18 : f32 to vector<48x256xf32>
    %33 = arith.mulf %32, %29 : vector<48x256xf32>
    %34 = arith.select %31, %29, %33 : vector<48x256xi1>, vector<48x256xf32>
    %cst_19 = arith.constant 1.41421354 : f32
    %35 = vector.broadcast %cst_19 : f32 to vector<48x256xf32>
    %36 = arith.mulf %34, %35 : vector<48x256xf32>
    %c0_20 = arith.constant 0 : index
    %c0_21 = arith.constant 0 : index
    %37 = vector.load %arg5[%c0_20, %c0_21] : memref<48x256xf32, #tpu.memory_space<vmem>>, vector<48x256xf32>
    tpu.vector_store %arg5[%c0_20, %c0_21], %36 {strides = array<i32>} : memref<48x256xf32, #tpu.memory_space<vmem>>, vector<48x256xf32>,
    return
  }
  func.func @transform_0(%arg0: i32, %arg1: i32) -> (i32, i32, i32) {
    %c0_i32 = arith.constant 0 : i32
    %c0_i32_0 = arith.constant 0 : i32
    %c0_i32_1 = arith.constant 0 : i32
    %c0_i32_2 = arith.constant 0 : i32
    return %c0_i32, %c0_i32_0, %c0_i32_1 : i32, i32, i32
  }
  func.func @transform_1(%arg0: i32, %arg1: i32) -> (i32, i32, i32) {
    %c0_i32 = arith.constant 0 : i32
    %c0_i32_0 = arith.constant 0 : i32
    %c0_i32_1 = arith.constant 0 : i32
    return %c0_i32, %c0_i32_0, %arg1 : i32, i32, i32
  }
  func.func @transform_2(%arg0: i32, %arg1: i32) -> (i32, i32) {
    %c0_i32 = arith.constant 0 : i32
    %c0_i32_0 = arith.constant 0 : i32
    return %c0_i32, %arg1 : i32, i32
  }
  func.func @transform_3(%arg0: i32, %arg1: i32) -> (i32, i32) {
    %c0_i32 = arith.constant 0 : i32
    return %arg0, %arg1 : i32, i32
  }
}

</mosaic_0001>

<llo_original>
// kernel: conv_block_forward.2
$region0: #{conv_block_forward.2}
  #allocation0 [shape = 'u32[]', space=smem, size = 0x4, offset = 0x4, fixed_abs, tag = 'smem constant byte address 0x4 - core index']
  #allocation1 [shape = 'u32[144,128]{1,0:T(1,128)}', space=vmem, size = 0x12000, scoped, tag = 'internal scratch']
  %s0 = inlined_call_operand.vmem [shape: bf16[1,608,384], index: 0, kind: input, shape index: {}]
  %s1 = inlined_call_operand.vmem [shape: bf16[3,384,128], index: 1, kind: input, shape index: {}]
  %s2 = inlined_call_operand.vmem [shape: f32[1,128], index: 2, kind: input, shape index: {}]
  %s3 = inlined_call_operand.vmem [shape: bf16[576,128], index: 3, kind: output, shape index: {}]
  %s4 = sld [smem:[#allocation0]]
  $region45: #{conv_block_forward.2} parent=0
    _
  %s6 = ssub.s32 1, %s4
  %s7 = scalar_select 0, %s6, %s4
  loop: start=0, step=1, limit=5
  $region2: #{conv_block_forward.2} parent=0 // loop_pre_header
    _
  $region3: #{conv_block_forward.2} parent=0 // loop_header
    %s9 = sphi 0, %s13
    %p10 = scmp.ge.s32.totalorder %s9, 5
    %s16 = sphi 0, %s28
    %s17 = sphi 0, %s24
    %s18 = sphi 0, %s16
    %s19 = sphi 0, %s17
    %s20 = sphi 0, %s18
    %s21 = sphi 0, %s19
    %s29 = sphi 0, %s29
    %s31 = sphi 0, %s29
    %s32 = sphi 0, %s31
    %s46 = sphi 0, %s32
    %s52 = sphi 0, %s54
    %s55 = sphi 0, %s52
    %s56 = sphi 0, %s55
    %s72 = sphi 0, %s56
    %s78 = sphi 0, %s80
    %s81 = sphi 0, %s78
    %s82 = sphi 0, %s81
    %s98 = sphi 0, %s82
    %s106 = sphi 0, %s108
    %s109 = sphi 0, %s106
    %s110 = sphi 0, %s109
    %s126 = sphi 0, %s110
  $region4: #{conv_block_forward.2} parent=0 // loop_header_branch
    %12 = sbr.rel (%p10) target = $region8
  $region5: #{conv_block_forward.2} parent=0 // loop_body
    %s14 = ssub.s32 %s9, 1
    %s15 = ssub.s32 %s9, 2
    %s22 = sadd.s32 1, %s17
    %p23 = scmp.ge.s32.totalorder %s22, 1
    %s24 = scalar_select %p23, 0, %s22
    %s25 = sadd.s32 1, %s16
    %s26 = scalar_select %p23, %s25, %s16
    %p27 = scmp.ge.s32.totalorder %s26, 3
    %s28 = scalar_select %p27, 0, %s26
    %s30 = sadd.s32 %s29, 1
    %p33 = scmp.eq.s32.totalorder %s9, 2
    %p34 = scmp.ne.s32.totalorder %s29, %s31
    %p35 = scmp.eq.s32.totalorder %s9, 0
    %p36 = por %p34, %p35
    %p37 = scmp.ne.s32.totalorder %s29, %s31
    %p38 = scmp.eq.s32.totalorder %s14, 2
    %p39 = por %p37, %p38
    %p40 = scmp.ne.s32.totalorder %s31, %s32
    %p41 = scmp.eq.s32.totalorder %s14, 0
    %p42 = por %p40, %p41
    %p43 = scmp.ne.s32.totalorder %s31, %s32
    %p44 = scmp.eq.s32.totalorder %s15, 2
    %p45 = por %p43, %p44
    %p47 = scmp.ne.s32.totalorder %s32, %s46
    %p48 = scmp.eq.s32.totalorder %s15, 0
    %p49 = por %p47, %p48
    %s50 = ssub.s32 %s17, %s24
    %p51 = scmp.eq.s32.totalorder %s50, 0
    %s53 = sadd.s32 %s52, 1
    %s54 = scalar_select %p51, %s52, %s53
    %p57 = pneg %p51
    %p58 = scmp.eq.s32.totalorder %s9, 2
    %p59 = por %p57, %p58
    %p60 = scmp.ne.s32.totalorder %s52, %s55
    %p61 = scmp.eq.s32.totalorder %s9, 0
    %p62 = por %p60, %p61
    %p63 = scmp.ne.s32.totalorder %s52, %s55
    %p64 = scmp.eq.s32.totalorder %s14, 2
    %p65 = por %p63, %p64
    %p66 = scmp.ne.s32.totalorder %s55, %s56
    %p67 = scmp.eq.s32.totalorder %s14, 0
    %p68 = por %p66, %p67
    %p69 = scmp.ne.s32.totalorder %s55, %s56
    %p70 = scmp.eq.s32.totalorder %s15, 2
    %p71 = por %p69, %p70
    %p73 = scmp.ne.s32.totalorder %s56, %s72
    %p74 = scmp.eq.s32.totalorder %s15, 0
    %p75 = por %p73, %p74
    %s76 = ssub.s32 %s17, %s24
    %p77 = scmp.eq.s32.totalorder %s76, 0
    %s79 = sadd.s32 %s78, 1
    %s80 = scalar_select %p77, %s78, %s79
    %p83 = pneg %p77
    %p84 = scmp.eq.s32.totalorder %s9, 2
    %p85 = por %p83, %p84
    %p86 = scmp.ne.s32.totalorder %s78, %s81
    %p87 = scmp.eq.s32.totalorder %s9, 0
    %p88 = por %p86, %p87
    %p89 = scmp.ne.s32.totalorder %s78, %s81
    %p90 = scmp.eq.s32.totalorder %s14, 2
    %p91 = por %p89, %p90
    %p92 = scmp.ne.s32.totalorder %s81, %s82
    %p93 = scmp.eq.s32.totalorder %s14, 0
    %p94 = por %p92, %p93
    %p95 = scmp.ne.s32.totalorder %s81, %s82
    %p96 = scmp.eq.s32.totalorder %s15, 2
    %p97 = por %p95, %p96
    %p99 = scmp.ne.s32.totalorder %s82, %s98
    %p100 = scmp.eq.s32.totalorder %s15, 0
    %p101 = por %p99, %p100
    %s102 = ssub.s32 %s16, %s28
    %s103 = ssub.s32 %s17, %s24
    %s104 = sor.u32 %s102, %s103
    %p105 = scmp.eq.s32.totalorder %s104, 0
    %s107 = sadd.s32 %s106, 1
    %s108 = scalar_select %p105, %s106, %s107
    %p111 = pneg %p105
    %p112 = scmp.eq.s32.totalorder %s9, 2
    %p113 = por %p111, %p112
    %p114 = scmp.ne.s32.totalorder %s106, %s109
    %p115 = scmp.eq.s32.totalorder %s9, 0
    %p116 = por %p114, %p115
    %p117 = scmp.ne.s32.totalorder %s106, %s109
    %p118 = scmp.eq.s32.totalorder %s14, 2
    %p119 = por %p117, %p118
    %p120 = scmp.ne.s32.totalorder %s109, %s110
    %p121 = scmp.eq.s32.totalorder %s14, 0
    %p122 = por %p120, %p121
    %p123 = scmp.ne.s32.totalorder %s109, %s110
    %p124 = scmp.eq.s32.totalorder %s15, 2
    %p125 = por %p123, %p124
    %p127 = scmp.ne.s32.totalorder %s110, %s126
    %p128 = scmp.eq.s32.totalorder %s15, 0
    %p129 = por %p127, %p128
    %p130 = scmp.le.s32.totalorder 1, %s9
    %p131 = scmp.lt.s32.totalorder %s9, 4
    %p132 = pnand %p130, %p131
    %p133 = pneg %p132
    // Predicated region
    $region9: #{conv_block_forward.2} parent=5 // pred_check
      _
    $region10: #{conv_block_forward.2} parent=5 // pred_check_branch
      %135 = sbr.rel (%p132) target = $region12
    $region11: #{conv_block_forward.2} parent=5 // pred_region
      %s136 = ssub.s32 %s9, 1
      // Predicated region
      $region13: #{conv_block_forward.2} parent=11 // pred_check
        %p137 = pneg %p42
      $region14: #{conv_block_forward.2} parent=11 // pred_check_branch
        %139 = sbr.rel (%p137) target = $region16
      $region15: #{conv_block_forward.2} parent=11 // pred_region
        _
      $region16: #{conv_block_forward.2} parent=11 // pred_fallthru
        _
      // Predicated region
      $region17: #{conv_block_forward.2} parent=11 // pred_check
        %p140 = pneg %p68
      $region18: #{conv_block_forward.2} parent=11 // pred_check_branch
        %142 = sbr.rel (%p140) target = $region20
      $region19: #{conv_block_forward.2} parent=11 // pred_region
        %p143 = scmp.lt.s32.totalorder %s19, 0
        %s144 = scalar_select %p143, %s19, 0
        %s145 = smul.addr %s144, 4
        %s146 = scalar_lea.vmem %s1, %s145
      $region20: #{conv_block_forward.2} parent=11 // pred_fallthru
        _
      // Predicated region
      $region21: #{conv_block_forward.2} parent=11 // pred_check
        %p147 = pneg %p94
      $region22: #{conv_block_forward.2} parent=11 // pred_check_branch
        %149 = sbr.rel (%p147) target = $region24
      $region23: #{conv_block_forward.2} parent=11 // pred_region
        %p150 = scmp.lt.s32.totalorder %s19, 0
        %s151 = scalar_select %p150, %s19, 0
        %s152 = scalar_lea.vmem %s2, %s151
      $region24: #{conv_block_forward.2} parent=11 // pred_fallthru
        _
    $region12: #{conv_block_forward.2} parent=5 // pred_fallthru
      _
    %p153 = scmp.lt.s32.totalorder %s9, 3
    // Predicated region
    $region25: #{conv_block_forward.2} parent=5 // pred_check
      %p154 = pneg %p153
    $region26: #{conv_block_forward.2} parent=5 // pred_check_branch
      %156 = sbr.rel (%p154) target = $region28
    $region27: #{conv_block_forward.2} parent=5 // pred_region
      _
    $region28: #{conv_block_forward.2} parent=5 // pred_fallthru
      _
    %p157 = scmp.le.s32.totalorder 1, %s9
    %p158 = scmp.lt.s32.totalorder %s9, 4
    %p159 = pnand %p157, %p158
    %p160 = pneg %p159
    // Predicated region
    $region29: #{conv_block_forward.2} parent=5 // pred_check
      _
    $region30: #{conv_block_forward.2} parent=5 // pred_check_branch
      %162 = sbr.rel (%p159) target = $region32
    $region31: #{conv_block_forward.2} parent=5 // pred_region
      %s163 = ssub.s32 %s9, 1
      %p164 = pneg %p42
      %p165 = pneg %p39
      %p166 = scmp.lt.s32.totalorder %s19, 0
      %s167 = scalar_select %p166, %s19, 0
      %s168 = smul.addr %s167, 4
      %s169 = scalar_lea.vmem %s1, %s168
      %p170 = pneg %p68
      %p171 = pneg %p65
      %p172 = scmp.lt.s32.totalorder %s19, 0
      %s173 = scalar_select %p172, %s19, 0
      %s174 = scalar_lea.vmem %s2, %s173
      %p175 = pneg %p94
      %p176 = pneg %p91
      %p177 = pneg %p122
      %p178 = pneg %p119
      %s179 = smul.u32 24, %s18
      %p180 = scmp.lt.s32.totalorder %s179, 71
      %s181 = scalar_select %p180, %s179, 71
      %p182 = scmp.lt.s32.totalorder %s19, 0
      %s183 = scalar_select %p182, %s19, 0
      %s184 = sadd.s32 %s183, %s181
      %s185 = smul.addr %s184, 4
      %s186 = scalar_lea.vmem %s3, %s185
      %p187 = scmp.lt.s32.totalorder %s19, 0
      %s188 = scalar_select %p187, %s19, 0
      %s189 = smul.addr %s188, 4
      %s190 = scalar_lea.vmem %s1, %s189
      %p191 = scmp.lt.s32.totalorder %s19, 0
      %s192 = scalar_select %p191, %s19, 0
      %s193 = scalar_lea.vmem %s2, %s192
      %s194 = smul.u32 24, %s18
      %p195 = scmp.lt.s32.totalorder %s194, 71
      %s196 = scalar_select %p195, %s194, 71
      %p197 = scmp.lt.s32.totalorder %s19, 0
      %s198 = scalar_select %p197, %s19, 0
      %s199 = sadd.s32 %s198, %s196
      %s200 = smul.addr %s199, 4
      %s201 = scalar_lea.vmem %s3, %s200
      %s202 = smul.u32 24, %s18
      %s204 = smul.u32 %s18, 192
      %s205 = sshra.s32 %s204, 3
      %s206 = sand.u32 %s204, 7
      %s207 = smul.u32 %s205, 3
      %s208 = smul.addr %s207, 4
      %s209 = scalar_lea.vmem %s0, %s208
      %v210 = vld [vmem:[%s209] sm:$0xff]
      %v211 = vld [vmem:[%s209 + $0x8] sm:$0xf]
      %v212 = vld [vmem:[%s209 + $0xc] sm:$0xff]
      %v213 = vld [vmem:[%s209 + $0x14] sm:$0xf]
      %v214 = vld [vmem:[%s209 + $0x18] sm:$0xff]
      %v215 = vld [vmem:[%s209 + $0x20] sm:$0xf]
      %v216 = vld [vmem:[%s209 + $0x24] sm:$0xff]
      %v217 = vld [vmem:[%s209 + $0x2c] sm:$0xf]
      %v218 = vld [vmem:[%s209 + $0x30] sm:$0xff]
      %v219 = vld [vmem:[%s209 + $0x38] sm:$0xf]
      %v220 = vld [vmem:[%s209 + $0x3c] sm:$0xff]
      %v221 = vld [vmem:[%s209 + $0x44] sm:$0xf]
      %v222 = vld [vmem:[%s209 + $0x48] sm:$0xff]
      %v223 = vld [vmem:[%s209 + $0x50] sm:$0xf]
      %v224 = vld [vmem:[%s209 + $0x54] sm:$0xff]
      %v225 = vld [vmem:[%s209 + $0x5c] sm:$0xf]
      %v226 = vld [vmem:[%s209 + $0x60] sm:$0xff]
      %v227 = vld [vmem:[%s209 + $0x68] sm:$0xf]
      %v228 = vld [vmem:[%s209 + $0x6c] sm:$0xff]
      %v229 = vld [vmem:[%s209 + $0x74] sm:$0xf]
      %v230 = vld [vmem:[%s209 + $0x78] sm:$0xff]
      %v231 = vld [vmem:[%s209 + $0x80] sm:$0xf]
      %v232 = vld [vmem:[%s209 + $0x84] sm:$0xff]
      %v233 = vld [vmem:[%s209 + $0x8c] sm:$0xf]
      %v234 = vld [vmem:[%s209 + $0x90] sm:$0xff]
      %v235 = vld [vmem:[%s209 + $0x98] sm:$0xf]
      %v236 = vld [vmem:[%s209 + $0x9c] sm:$0xff]
      %v237 = vld [vmem:[%s209 + $0xa4] sm:$0xf]
      %v238 = vld [vmem:[%s209 + $0xa8] sm:$0xff]
      %v239 = vld [vmem:[%s209 + $0xb0] sm:$0xf]
      %v240 = vld [vmem:[%s209 + $0xb4] sm:$0xff]
      %v241 = vld [vmem:[%s209 + $0xbc] sm:$0xf]
      %v242 = vld [vmem:[%s209 + $0xc0] sm:$0xff]
      %v243 = vld [vmem:[%s209 + $0xc8] sm:$0xf]
      %v244 = vld [vmem:[%s209 + $0xcc] sm:$0xff]
      %v245 = vld [vmem:[%s209 + $0xd4] sm:$0xf]
      %v246 = vld [vmem:[%s209 + $0xd8] sm:$0xff]
      %v247 = vld [vmem:[%s209 + $0xe0] sm:$0xf]
      %v248 = vld [vmem:[%s209 + $0xe4] sm:$0xff]
      %v249 = vld [vmem:[%s209 + $0xec] sm:$0xf]
      %v250 = vld [vmem:[%s209 + $0xf0] sm:$0xff]
      %v251 = vld [vmem:[%s209 + $0xf8] sm:$0xf]
      %v252 = vld [vmem:[%s209 + $0xfc] sm:$0xff]
      %v253 = vld [vmem:[%s209 + $0x104] sm:$0xf]
      %v254 = vld [vmem:[%s209 + $0x108] sm:$0xff]
      %v255 = vld [vmem:[%s209 + $0x110] sm:$0xf]
      %v256 = vld [vmem:[%s209 + $0x114] sm:$0xff]
      %v257 = vld [vmem:[%s209 + $0x11c] sm:$0xf]
      %v258 = vld [vmem:[%s190] sm:$0xf]
      %v259 = vld [vmem:[%s190 + $0x4] sm:$0xf]
      %v260 = vld [vmem:[%s190 + $0x8] sm:$0xf]
      %v261 = vld [vmem:[%s190 + $0xc] sm:$0xf]
      %v262 = vld [vmem:[%s190 + $0x10] sm:$0xf]
      %v263 = vld [vmem:[%s190 + $0x14] sm:$0xf]
      %v264 = vld [vmem:[%s190 + $0x18] sm:$0xf]
      %v265 = vld [vmem:[%s190 + $0x1c] sm:$0xf]
      %v266 = vld [vmem:[%s190 + $0x20] sm:$0xf]
      %v267 = vld [vmem:[%s190 + $0x24] sm:$0xf]
      %v268 = vld [vmem:[%s190 + $0x28] sm:$0xf]
      %v269 = vld [vmem:[%s190 + $0x2c] sm:$0xf]
      %v270 = vld [vmem:[%s190 + $0x30] sm:$0xf]
      %v271 = vld [vmem:[%s190 + $0x34] sm:$0xf]
      %v272 = vld [vmem:[%s190 + $0x38] sm:$0xf]
      %v273 = vld [vmem:[%s190 + $0x3c] sm:$0xf]
      %v274 = vld [vmem:[%s190 + $0x40] sm:$0xf]
      %v275 = vld [vmem:[%s190 + $0x44] sm:$0xf]
      %v276 = vld [vmem:[%s190 + $0x48] sm:$0xf]
      %v277 = vld [vmem:[%s190 + $0x4c] sm:$0xf]
      %v278 = vld [vmem:[%s190 + $0x50] sm:$0xf]
      %v279 = vld [vmem:[%s190 + $0x54] sm:$0xf]
      %v280 = vld [vmem:[%s190 + $0x58] sm:$0xf]
      %v281 = vld [vmem:[%s190 + $0x5c] sm:$0xf]
      %v282 = vld [vmem:[%s190 + $0x60] sm:$0xf]
      %v283 = vld [vmem:[%s190 + $0x64] sm:$0xf]
      %v284 = vld [vmem:[%s190 + $0x68] sm:$0xf]
      %v285 = vld [vmem:[%s190 + $0x6c] sm:$0xf]
      %v286 = vld [vmem:[%s190 + $0x70] sm:$0xf]
      %v287 = vld [vmem:[%s190 + $0x74] sm:$0xf]
      %v288 = vld [vmem:[%s190 + $0x78] sm:$0xf]
      %v289 = vld [vmem:[%s190 + $0x7c] sm:$0xf]
      %v290 = vld [vmem:[%s190 + $0x80] sm:$0xf]
      %v291 = vld [vmem:[%s190 + $0x84] sm:$0xf]
      %v292 = vld [vmem:[%s190 + $0x88] sm:$0xf]
      %v293 = vld [vmem:[%s190 + $0x8c] sm:$0xf]
      %v294 = vld [vmem:[%s190 + $0x90] sm:$0xf]
      %v295 = vld [vmem:[%s190 + $0x94] sm:$0xf]
      %v296 = vld [vmem:[%s190 + $0x98] sm:$0xf]
      %v297 = vld [vmem:[%s190 + $0x9c] sm:$0xf]
      %v298 = vld [vmem:[%s190 + $0xa0] sm:$0xf]
      %v299 = vld [vmem:[%s190 + $0xa4] sm:$0xf]
      %v300 = vld [vmem:[%s190 + $0xa8] sm:$0xf]
      %v301 = vld [vmem:[%s190 + $0xac] sm:$0xf]
      %v302 = vld [vmem:[%s190 + $0xb0] sm:$0xf]
      %v303 = vld [vmem:[%s190 + $0xb4] sm:$0xf]
      %v304 = vld [vmem:[%s190 + $0xb8] sm:$0xf]
      %v305 = vld [vmem:[%s190 + $0xbc] sm:$0xf]
      %s306 = sadd.s32 %s204, 16
      %s307 = sshra.s32 %s306, 3
      %s308 = sand.u32 %s306, 7
      %s309 = smul.u32 %s307, 3
      %s310 = smul.addr %s309, 4
      %s311 = scalar_lea.vmem %s0, %s310
      %v312 = vld [vmem:[%s311] sm:$0xff]
      %v313 = vld [vmem:[%s311 + $0x8] sm:$0xf]
      %v314 = vld [vmem:[%s311 + $0xc] sm:$0xff]
      %v315 = vld [vmem:[%s311 + $0x14] sm:$0xf]
      %v316 = vld [vmem:[%s311 + $0x18] sm:$0xff]
      %v317 = vld [vmem:[%s311 + $0x20] sm:$0xf]
      %v318 = vld [vmem:[%s311 + $0x24] sm:$0xff]
      %v319 = vld [vmem:[%s311 + $0x2c] sm:$0xf]
      %v320 = vld [vmem:[%s311 + $0x30] sm:$0xff]
      %v321 = vld [vmem:[%s311 + $0x38] sm:$0xf]
      %v322 = vld [vmem:[%s311 + $0x3c] sm:$0xff]
      %v323 = vld [vmem:[%s311 + $0x44] sm:$0xf]
      %v324 = vld [vmem:[%s311 + $0x48] sm:$0xff]
      %v325 = vld [vmem:[%s311 + $0x50] sm:$0xf]
      %v326 = vld [vmem:[%s311 + $0x54] sm:$0xff]
      %v327 = vld [vmem:[%s311 + $0x5c] sm:$0xf]
      %v328 = vld [vmem:[%s311 + $0x60] sm:$0xff]
      %v329 = vld [vmem:[%s311 + $0x68] sm:$0xf]
      %v330 = vld [vmem:[%s311 + $0x6c] sm:$0xff]
      %v331 = vld [vmem:[%s311 + $0x74] sm:$0xf]
      %v332 = vld [vmem:[%s311 + $0x78] sm:$0xff]
      %v333 = vld [vmem:[%s311 + $0x80] sm:$0xf]
      %v334 = vld [vmem:[%s311 + $0x84] sm:$0xff]
      %v335 = vld [vmem:[%s311 + $0x8c] sm:$0xf]
      %v336 = vld [vmem:[%s311 + $0x90] sm:$0xff]
      %v337 = vld [vmem:[%s311 + $0x98] sm:$0xf]
      %v338 = vld [vmem:[%s311 + $0x9c] sm:$0xff]
      %v339 = vld [vmem:[%s311 + $0xa4] sm:$0xf]
      %v340 = vld [vmem:[%s311 + $0xa8] sm:$0xff]
      %v341 = vld [vmem:[%s311 + $0xb0] sm:$0xf]
      %v342 = vld [vmem:[%s311 + $0xb4] sm:$0xff]
      %v343 = vld [vmem:[%s311 + $0xbc] sm:$0xf]
      %v344 = vld [vmem:[%s311 + $0xc0] sm:$0xff]
      %v345 = vld [vmem:[%s311 + $0xc8] sm:$0xf]
      %v346 = vld [vmem:[%s311 + $0xcc] sm:$0xff]
      %v347 = vld [vmem:[%s311 + $0xd4] sm:$0xf]
      %v348 = vld [vmem:[%s311 + $0xd8] sm:$0xff]
      %v349 = vld [vmem:[%s311 + $0xe0] sm:$0xf]
      %v350 = vld [vmem:[%s311 + $0xe4] sm:$0xff]
      %v351 = vld [vmem:[%s311 + $0xec] sm:$0xf]
      %v352 = vld [vmem:[%s311 + $0xf0] sm:$0xff]
      %v353 = vld [vmem:[%s311 + $0xf8] sm:$0xf]
      %v354 = vld [vmem:[%s311 + $0xfc] sm:$0xff]
      %v355 = vld [vmem:[%s311 + $0x104] sm:$0xf]
      %v356 = vld [vmem:[%s311 + $0x108] sm:$0xff]
      %v357 = vld [vmem:[%s311 + $0x110] sm:$0xf]
      %v358 = vld [vmem:[%s311 + $0x114] sm:$0xff]
      %v359 = vld [vmem:[%s311 + $0x11c] sm:$0xf]
      %s360 = scalar_lea.vmem %s190, 192
      %v361 = vld [vmem:[%s360] sm:$0xf]
      %v362 = vld [vmem:[%s360 + $0x4] sm:$0xf]
      %v363 = vld [vmem:[%s360 + $0x8] sm:$0xf]
      %v364 = vld [vmem:[%s360 + $0xc] sm:$0xf]
      %v365 = vld [vmem:[%s360 + $0x10] sm:$0xf]
      %v366 = vld [vmem:[%s360 + $0x14] sm:$0xf]
      %v367 = vld [vmem:[%s360 + $0x18] sm:$0xf]
      %v368 = vld [vmem:[%s360 + $0x1c] sm:$0xf]
      %v369 = vld [vmem:[%s360 + $0x20] sm:$0xf]
      %v370 = vld [vmem:[%s360 + $0x24] sm:$0xf]
      %v371 = vld [vmem:[%s360 + $0x28] sm:$0xf]
      %v372 = vld [vmem:[%s360 + $0x2c] sm:$0xf]
      %v373 = vld [vmem:[%s360 + $0x30] sm:$0xf]
      %v374 = vld [vmem:[%s360 + $0x34] sm:$0xf]
      %v375 = vld [vmem:[%s360 + $0x38] sm:$0xf]
      %v376 = vld [vmem:[%s360 + $0x3c] sm:$0xf]
      %v377 = vld [vmem:[%s360 + $0x40] sm:$0xf]
      %v378 = vld [vmem:[%s360 + $0x44] sm:$0xf]
      %v379 = vld [vmem:[%s360 + $0x48] sm:$0xf]
      %v380 = vld [vmem:[%s360 + $0x4c] sm:$0xf]
      %v381 = vld [vmem:[%s360 + $0x50] sm:$0xf]
      %v382 = vld [vmem:[%s360 + $0x54] sm:$0xf]
      %v383 = vld [vmem:[%s360 + $0x58] sm:$0xf]
      %v384 = vld [vmem:[%s360 + $0x5c] sm:$0xf]
      %v385 = vld [vmem:[%s360 + $0x60] sm:$0xf]
      %v386 = vld [vmem:[%s360 + $0x64] sm:$0xf]
      %v387 = vld [vmem:[%s360 + $0x68] sm:$0xf]
      %v388 = vld [vmem:[%s360 + $0x6c] sm:$0xf]
      %v389 = vld [vmem:[%s360 + $0x70] sm:$0xf]
      %v390 = vld [vmem:[%s360 + $0x74] sm:$0xf]
      %v391 = vld [vmem:[%s360 + $0x78] sm:$0xf]
      %v392 = vld [vmem:[%s360 + $0x7c] sm:$0xf]
      %v393 = vld [vmem:[%s360 + $0x80] sm:$0xf]
      %v394 = vld [vmem:[%s360 + $0x84] sm:$0xf]
      %v395 = vld [vmem:[%s360 + $0x88] sm:$0xf]
      %v396 = vld [vmem:[%s360 + $0x8c] sm:$0xf]
      %v397 = vld [vmem:[%s360 + $0x90] sm:$0xf]
      %v398 = vld [vmem:[%s360 + $0x94] sm:$0xf]
      %v399 = vld [vmem:[%s360 + $0x98] sm:$0xf]
      %v400 = vld [vmem:[%s360 + $0x9c] sm:$0xf]
      %v401 = vld [vmem:[%s360 + $0xa0] sm:$0xf]
      %v402 = vld [vmem:[%s360 + $0xa4] sm:$0xf]
      %v403 = vld [vmem:[%s360 + $0xa8] sm:$0xf]
      %v404 = vld [vmem:[%s360 + $0xac] sm:$0xf]
      %v405 = vld [vmem:[%s360 + $0xb0] sm:$0xf]
      %v406 = vld [vmem:[%s360 + $0xb4] sm:$0xf]
      %v407 = vld [vmem:[%s360 + $0xb8] sm:$0xf]
      %v408 = vld [vmem:[%s360 + $0xbc] sm:$0xf]
      %v457 = vunpack.c.l.b16 %v312
      %v458 = vunpack.c.h.b16 %v312
      %v459 = vunpack.c.l.b16 %v313
      %v460 = vunpack.c.l.b16 %v314
      %v461 = vunpack.c.h.b16 %v314
      %v462 = vunpack.c.l.b16 %v315
      %v463 = vunpack.c.l.b16 %v316
      %v464 = vunpack.c.h.b16 %v316
      %v465 = vunpack.c.l.b16 %v317
      %v466 = vunpack.c.l.b16 %v318
      %v467 = vunpack.c.h.b16 %v318
      %v468 = vunpack.c.l.b16 %v319
      %v469 = vunpack.c.l.b16 %v320
      %v470 = vunpack.c.h.b16 %v320
      %v471 = vunpack.c.l.b16 %v321
      %v472 = vunpack.c.l.b16 %v322
      %v473 = vunpack.c.h.b16 %v322
      %v474 = vunpack.c.l.b16 %v323
      %v475 = vunpack.c.l.b16 %v324
      %v476 = vunpack.c.h.b16 %v324
      %v477 = vunpack.c.l.b16 %v325
      %v478 = vunpack.c.l.b16 %v326
      %v479 = vunpack.c.h.b16 %v326
      %v480 = vunpack.c.l.b16 %v327
      %v481 = vunpack.c.l.b16 %v328
      %v482 = vunpack.c.h.b16 %v328
      %v483 = vunpack.c.l.b16 %v329
      %v484 = vunpack.c.l.b16 %v330
      %v485 = vunpack.c.h.b16 %v330
      %v486 = vunpack.c.l.b16 %v331
      %v487 = vunpack.c.l.b16 %v332
      %v488 = vunpack.c.h.b16 %v332
      %v489 = vunpack.c.l.b16 %v333
      %v490 = vunpack.c.l.b16 %v334
      %v491 = vunpack.c.h.b16 %v334
      %v492 = vunpack.c.l.b16 %v335
      %v493 = vunpack.c.l.b16 %v336
      %v494 = vunpack.c.h.b16 %v336
      %v495 = vunpack.c.l.b16 %v337
      %v496 = vunpack.c.l.b16 %v338
      %v497 = vunpack.c.h.b16 %v338
      %v498 = vunpack.c.l.b16 %v339
      %v499 = vunpack.c.l.b16 %v340
      %v500 = vunpack.c.h.b16 %v340
      %v501 = vunpack.c.l.b16 %v341
      %v502 = vunpack.c.l.b16 %v342
      %v503 = vunpack.c.h.b16 %v342
      %v504 = vunpack.c.l.b16 %v343
      %v505 = vunpack.c.l.b16 %v344
      %v506 = vunpack.c.h.b16 %v344
      %v507 = vunpack.c.l.b16 %v345
      %v508 = vunpack.c.l.b16 %v346
      %v509 = vunpack.c.h.b16 %v346
      %v510 = vunpack.c.l.b16 %v347
      %v511 = vunpack.c.l.b16 %v348
      %v512 = vunpack.c.h.b16 %v348
      %v513 = vunpack.c.l.b16 %v349
      %v514 = vunpack.c.l.b16 %v350
      %v515 = vunpack.c.h.b16 %v350
      %v516 = vunpack.c.l.b16 %v351
      %v517 = vunpack.c.l.b16 %v352
      %v518 = vunpack.c.h.b16 %v352
      %v519 = vunpack.c.l.b16 %v353
      %v520 = vunpack.c.l.b16 %v354
      %v521 = vunpack.c.h.b16 %v354
      %v522 = vunpack.c.l.b16 %v355
      %v523 = vunpack.c.l.b16 %v356
      %v524 = vunpack.c.h.b16 %v356
      %v525 = vunpack.c.l.b16 %v357
      %v526 = vunpack.c.l.b16 %v358
      %v527 = vunpack.c.h.b16 %v358
      %v528 = vunpack.c.l.b16 %v359
      %v529 = vpack.c.b16 %v460, %v457
      %v530 = vpack.c.b16 %v461, %v458
      %v531 = vpack.c.b16 %v462, %v459
      %v532 = vpack.c.b16 %v466, %v463
      %v533 = vpack.c.b16 %v467, %v464
      %v534 = vpack.c.b16 %v468, %v465
      %v535 = vpack.c.b16 %v472, %v469
      %v536 = vpack.c.b16 %v473, %v470
      %v537 = vpack.c.b16 %v474, %v471
      %v538 = vpack.c.b16 %v478, %v475
      %v539 = vpack.c.b16 %v479, %v476
      %v540 = vpack.c.b16 %v480, %v477
      %v541 = vpack.c.b16 %v484, %v481
      %v542 = vpack.c.b16 %v485, %v482
      %v543 = vpack.c.b16 %v486, %v483
      %v544 = vpack.c.b16 %v490, %v487
      %v545 = vpack.c.b16 %v491, %v488
      %v546 = vpack.c.b16 %v492, %v489
      %v547 = vpack.c.b16 %v496, %v493
      %v548 = vpack.c.b16 %v497, %v494
      %v549 = vpack.c.b16 %v498, %v495
      %v550 = vpack.c.b16 %v502, %v499
      %v551 = vpack.c.b16 %v503, %v500
      %v552 = vpack.c.b16 %v504, %v501
      %v553 = vpack.c.b16 %v508, %v505
      %v554 = vpack.c.b16 %v509, %v506
      %v555 = vpack.c.b16 %v510, %v507
      %v556 = vpack.c.b16 %v514, %v511
      %v557 = vpack.c.b16 %v515, %v512
      %v558 = vpack.c.b16 %v516, %v513
      %v559 = vpack.c.b16 %v520, %v517
      %v560 = vpack.c.b16 %v521, %v518
      %v561 = vpack.c.b16 %v522, %v519
      %v562 = vpack.c.b16 %v526, %v523
      %v563 = vpack.c.b16 %v527, %v524
      %v564 = vpack.c.b16 %v528, %v525
      %v649 = vunpack.c.l.b16 %v361
      %v650 = vunpack.c.l.b16 %v362
      %v651 = vunpack.c.l.b16 %v363
      %v652 = vunpack.c.l.b16 %v364
      %v653 = vunpack.c.l.b16 %v365
      %v654 = vunpack.c.l.b16 %v366
      %v655 = vunpack.c.l.b16 %v367
      %v656 = vunpack.c.l.b16 %v368
      %v657 = vunpack.c.l.b16 %v369
      %v658 = vunpack.c.l.b16 %v370
      %v659 = vunpack.c.l.b16 %v371
      %v660 = vunpack.c.l.b16 %v372
      %v661 = vunpack.c.l.b16 %v373
      %v662 = vunpack.c.l.b16 %v374
      %v663 = vunpack.c.l.b16 %v375
      %v664 = vunpack.c.l.b16 %v376
      %v665 = vunpack.c.l.b16 %v377
      %v666 = vunpack.c.l.b16 %v378
      %v667 = vunpack.c.l.b16 %v379
      %v668 = vunpack.c.l.b16 %v380
      %v669 = vunpack.c.l.b16 %v381
      %v670 = vunpack.c.l.b16 %v382
      %v671 = vunpack.c.l.b16 %v383
      %v672 = vunpack.c.l.b16 %v384
      %v673 = vunpack.c.l.b16 %v385
      %v674 = vunpack.c.l.b16 %v386
      %v675 = vunpack.c.l.b16 %v387
      %v676 = vunpack.c.l.b16 %v388
      %v677 = vunpack.c.l.b16 %v389
      %v678 = vunpack.c.l.b16 %v390
      %v679 = vunpack.c.l.b16 %v391
      %v680 = vunpack.c.l.b16 %v392
      %v681 = vunpack.c.l.b16 %v393
      %v682 = vunpack.c.l.b16 %v394
      %v683 = vunpack.c.l.b16 %v395
      %v684 = vunpack.c.l.b16 %v396
      %v685 = vunpack.c.l.b16 %v397
      %v686 = vunpack.c.l.b16 %v398
      %v687 = vunpack.c.l.b16 %v399
      %v688 = vunpack.c.l.b16 %v400
      %v689 = vunpack.c.l.b16 %v401
      %v690 = vunpack.c.l.b16 %v402
      %v691 = vunpack.c.l.b16 %v403
      %v692 = vunpack.c.l.b16 %v404
      %v693 = vunpack.c.l.b16 %v405
      %v694 = vunpack.c.l.b16 %v406
      %v695 = vunpack.c.l.b16 %v407
      %v696 = vunpack.c.l.b16 %v408
      %v697 = vpack.c.b16 %v650, %v649
      %v698 = vpack.c.b16 %v652, %v651
      %v699 = vpack.c.b16 %v654, %v653
      %v700 = vpack.c.b16 %v656, %v655
      %v701 = vpack.c.b16 %v658, %v657
      %v702 = vpack.c.b16 %v660, %v659
      %v703 = vpack.c.b16 %v662, %v661
      %v704 = vpack.c.b16 %v664, %v663
      %v705 = vpack.c.b16 %v666, %v665
      %v706 = vpack.c.b16 %v668, %v667
      %v707 = vpack.c.b16 %v670, %v669
      %v708 = vpack.c.b16 %v672, %v671
      %v709 = vpack.c.b16 %v674, %v673
      %v710 = vpack.c.b16 %v676, %v675
      %v711 = vpack.c.b16 %v678, %v677
      %v712 = vpack.c.b16 %v680, %v679
      %v713 = vpack.c.b16 %v682, %v681
      %v714 = vpack.c.b16 %v684, %v683
      %v715 = vpack.c.b16 %v686, %v685
      %v716 = vpack.c.b16 %v688, %v687
      %v717 = vpack.c.b16 %v690, %v689
      %v718 = vpack.c.b16 %v692, %v691
      %v719 = vpack.c.b16 %v694, %v693
      %v720 = vpack.c.b16 %v696, %v695
      %745 = vmatprep.subr.bf16.mxu0 0
      %746 = vmatpush1.bf16.msra.mxu0 %v697
      %747 = vmatprep.subr.bf16.mxu0 0
      %748 = vmatpush1.bf16.msra.mxu0 %v698
      %749 = vmatprep.subr.bf16.mxu0 0
      %750 = vmatpush1.bf16.msra.mxu0 %v699
      %751 = vmatprep.subr.bf16.mxu0 0
      %752 = vmatpush1.bf16.msra.mxu0 %v700
      %753 = vmatprep.subr.bf16.mxu0 0
      %754 = vmatpush1.bf16.msra.mxu0 %v701
      %755 = vmatprep.subr.bf16.mxu0 0
      %756 = vmatpush1.bf16.msra.mxu0 %v702
      %757 = vmatprep.subr.bf16.mxu0 0
      %758 = vmatpush1.bf16.msra.mxu0 %v703
      %759 = vmatprep.subr.bf16.mxu0 0
      %760 = vmatpush1.bf16.msra.mxu0 %v704
      %761 = vmatprep.subr.bf16.mxu0 0
      %762 = vmatpush1.bf16.msra.mxu0 %v705
      %763 = vmatprep.subr.bf16.mxu0 0
      %764 = vmatpush1.bf16.msra.mxu0 %v706
      %765 = vmatprep.subr.bf16.mxu0 0
      %766 = vmatpush1.bf16.msra.mxu0 %v707
      %767 = vmatprep.subr.bf16.mxu0 0
      %768 = vmatpush1.bf16.msra.mxu0 %v708
      %769 = vmatprep.subr.bf16.mxu0 0
      %770 = vmatpush1.bf16.msra.mxu0 %v709
      %771 = vmatprep.subr.bf16.mxu0 0
      %772 = vmatpush1.bf16.msra.mxu0 %v710
      %773 = vmatprep.subr.bf16.mxu0 0
      %774 = vmatpush1.bf16.msra.mxu0 %v711
      %775 = vmatprep.subr.bf16.mxu0 0
      %776 = vmatpush1.bf16.msra.mxu0 %v712
      %777 = vmatprep.mubr.bf16.mxu0 %v530
      %778 = vmatmul.mubr.bf16.gmra.mrb[0].mxu0 %v529
      %v779 = vpop.f32.mrb[0].mxu0
      %v780 = vadd.f32 0.0, %v779
      %v781 = vpop.f32.mrb[0].mxu0
      %v782 = vpop.f32.mrb[0].mxu0
      %v783 = vadd.f32 0.0, %v782
      %v784 = vpop.f32.mrb[0].mxu0
      %785 = vmatprep.mubr.bf16.mxu0 %v533
      %786 = vmatmul.mubr.bf16.gmra.mrb[0].mxu0 %v532
      %v787 = vpop.f32.mrb[0].mxu0
      %v788 = vadd.f32 0.0, %v787
      %v789 = vpop.f32.mrb[0].mxu0
      %v790 = vpop.f32.mrb[0].mxu0
      %v791 = vadd.f32 0.0, %v790
      %v792 = vpop.f32.mrb[0].mxu0
      %793 = vmatprep.mubr.bf16.mxu0 %v536
      %794 = vmatmul.mubr.bf16.gmra.mrb[0].mxu0 %v535
      %v795 = vpop.f32.mrb[0].mxu0
      %v796 = vadd.f32 0.0, %v795
      %v797 = vpop.f32.mrb[0].mxu0
      %v798 = vpop.f32.mrb[0].mxu0
      %v799 = vadd.f32 0.0, %v798
      %v800 = vpop.f32.mrb[0].mxu0
      %801 = vmatprep.mubr.bf16.mxu0 %v539
      %802 = vmatmul.mubr.bf16.gmra.mrb[0].mxu0 %v538
      %v803 = vpop.f32.mrb[0].mxu0
      %v804 = vadd.f32 0.0, %v803
      %v805 = vpop.f32.mrb[0].mxu0
      %v806 = vpop.f32.mrb[0].mxu0
      %v807 = vadd.f32 0.0, %v806
      %v808 = vpop.f32.mrb[0].mxu0
      %809 = vmatprep.mubr.bf16.mxu0 %v542
      %810 = vmatmul.mubr.bf16.gmra.mrb[0].mxu0 %v541
      %v811 = vpop.f32.mrb[0].mxu0
      %v812 = vadd.f32 0.0, %v811
      %v813 = vpop.f32.mrb[0].mxu0
      %v814 = vpop.f32.mrb[0].mxu0
      %v815 = vadd.f32 0.0, %v814
      %v816 = vpop.f32.mrb[0].mxu0
      %817 = vmatprep.mubr.bf16.mxu0 %v545
      %818 = vmatmul.mubr.bf16.gmra.mrb[0].mxu0 %v544
      %v819 = vpop.f32.mrb[0].mxu0
      %v820 = vadd.f32 0.0, %v819
      %v821 = vpop.f32.mrb[0].mxu0
      %v822 = vpop.f32.mrb[0].mxu0
      %v823 = vadd.f32 0.0, %v822
      %v824 = vpop.f32.mrb[0].mxu0
      %825 = vmatprep.mubr.bf16.mxu0 %v548
      %826 = vmatmul.mubr.bf16.gmra.mrb[0].mxu0 %v547
      %v827 = vpop.f32.mrb[0].mxu0
      %v828 = vadd.f32 0.0, %v827
      %v829 = vpop.f32.mrb[0].mxu0
      %v830 = vpop.f32.mrb[0].mxu0
      %v831 = vadd.f32 0.0, %v830
      %v832 = vpop.f32.mrb[0].mxu0
      %833 = vmatprep.mubr.bf16.mxu0 %v551
      %834 = vmatmul.mubr.bf16.gmra.mrb[0].mxu0 %v550
      %v835 = vpop.f32.mrb[0].mxu0
      %v836 = vadd.f32 0.0, %v835
      %v837 = vpop.f32.mrb[0].mxu0
      %v838 = vpop.f32.mrb[0].mxu0
      %v839 = vadd.f32 0.0, %v838
      %v840 = vpop.f32.mrb[0].mxu0
      %841 = vmatprep.mubr.bf16.mxu0 %v554
      %842 = vmatmul.mubr.bf16.gmra.mrb[0].mxu0 %v553
      %v843 = vpop.f32.mrb[0].mxu0
      %v844 = vadd.f32 0.0, %v843
      %v845 = vpop.f32.mrb[0].mxu0
      %v846 = vpop.f32.mrb[0].mxu0
      %v847 = vadd.f32 0.0, %v846
      %v848 = vpop.f32.mrb[0].mxu0
      %849 = vmatprep.mubr.bf16.mxu0 %v557
      %850 = vmatmul.mubr.bf16.gmra.mrb[0].mxu0 %v556
      %v851 = vpop.f32.mrb[0].mxu0
      %v852 = vadd.f32 0.0, %v851
      %v853 = vpop.f32.mrb[0].mxu0
      %v854 = vpop.f32.mrb[0].mxu0
      %v855 = vadd.f32 0.0, %v854
      %v856 = vpop.f32.mrb[0].mxu0
      %857 = vmatprep.mubr.bf16.mxu0 %v560
      %858 = vmatmul.mubr.bf16.gmra.mrb[0].mxu0 %v559
      %v859 = vpop.f32.mrb[0].mxu0
      %v860 = vadd.f32 0.0, %v859
      %v861 = vpop.f32.mrb[0].mxu0
      %v862 = vpop.f32.mrb[0].mxu0
      %v863 = vadd.f32 0.0, %v862
      %v864 = vpop.f32.mrb[0].mxu0
      %865 = vmatprep.mubr.bf16.mxu0 %v563
      %866 = vmatmul.mubr.bf16.gmra.mrb[0].mxu0 %v562
      %v867 = vpop.f32.mrb[0].mxu0
      %v868 = vadd.f32 0.0, %v867
      %v869 = vpop.f32.mrb[0].mxu0
      %v870 = vpop.f32.mrb[0].mxu0
      %v871 = vadd.f32 0.0, %v870
      %v872 = vpop.f32.mrb[0].mxu0
      %873 = vdwg.mxu0
      %874 = vmatprep.subr.bf16.mxu0 0
      %875 = vmatpush1.bf16.msra.mxu0 %v713
      %876 = vmatprep.subr.bf16.mxu0 0
      %877 = vmatpush1.bf16.msra.mxu0 %v714
      %878 = vmatprep.subr.bf16.mxu0 0
      %879 = vmatpush1.bf16.msra.mxu0 %v715
      %880 = vmatprep.subr.bf16.mxu0 0
      %881 = vmatpush1.bf16.msra.mxu0 %v716
      %882 = vmatprep.subr.bf16.mxu0 0
      %883 = vmatpush1.bf16.msra.mxu0 %v717
      %884 = vmatprep.subr.bf16.mxu0 0
      %885 = vmatpush1.bf16.msra.mxu0 %v718
      %886 = vmatprep.subr.bf16.mxu0 0
      %887 = vmatpush1.bf16.msra.mxu0 %v719
      %888 = vmatprep.subr.bf16.mxu0 0
      %889 = vmatpush1.bf16.msra.mxu0 %v720
      %890 = vmatprep.subr.bf16.mxu0 0
      %891 = vmatpush1.bf16.msra.mxu0 0
      %892 = vmatprep.subr.bf16.mxu0 0
      %893 = vmatpush1.bf16.msra.mxu0 0
      %894 = vmatprep.subr.bf16.mxu0 0
      %895 = vmatpush1.bf16.msra.mxu0 0
      %896 = vmatprep.subr.bf16.mxu0 0
      %897 = vmatpush1.bf16.msra.mxu0 0
      %898 = vmatprep.subr.bf16.mxu0 0
      %899 = vmatpush1.bf16.msra.mxu0 0
      %900 = vmatprep.subr.bf16.mxu0 0
      %901 = vmatpush1.bf16.msra.mxu0 0
      %902 = vmatprep.subr.bf16.mxu0 0
      %903 = vmatpush1.bf16.msra.mxu0 0
      %904 = vmatprep.subr.bf16.mxu0 0
      %905 = vmatpush1.bf16.msra.mxu0 0
      %906 = vmatprep.mubr.bf16.mxu0 0
      %907 = vmatmul.mubr.bf16.gmra.mrb[0].mxu0 %v531
      %v908 = vpop.f32.mrb[0].mxu0
      %v909 = vadd.f32 %v780, %v908
      %v910 = vpop.f32.mrb[0].mxu0
      %v911 = vpop.f32.mrb[0].mxu0
      %v912 = vadd.f32 %v783, %v911
      %v913 = vpop.f32.mrb[0].mxu0
      %914 = vmatprep.mubr.bf16.mxu0 0
      %915 = vmatmul.mubr.bf16.gmra.mrb[0].mxu0 %v534
      %v916 = vpop.f32.mrb[0].mxu0
      %v917 = vadd.f32 %v788, %v916
      %v918 = vpop.f32.mrb[0].mxu0
      %v919 = vpop.f32.mrb[0].mxu0
      %v920 = vadd.f32 %v791, %v919
      %v921 = vpop.f32.mrb[0].mxu0
      %922 = vmatprep.mubr.bf16.mxu0 0
      %923 = vmatmul.mubr.bf16.gmra.mrb[0].mxu0 %v537
      %v924 = vpop.f32.mrb[0].mxu0
      %v925 = vadd.f32 %v796, %v924
      %v926 = vpop.f32.mrb[0].mxu0
      %v927 = vpop.f32.mrb[0].mxu0
      %v928 = vadd.f32 %v799, %v927
      %v929 = vpop.f32.mrb[0].mxu0
      %930 = vmatprep.mubr.bf16.mxu0 0
      %931 = vmatmul.mubr.bf16.gmra.mrb[0].mxu0 %v540
      %v932 = vpop.f32.mrb[0].mxu0
      %v933 = vadd.f32 %v804, %v932
      %v934 = vpop.f32.mrb[0].mxu0
      %v935 = vpop.f32.mrb[0].mxu0
      %v936 = vadd.f32 %v807, %v935
      %v937 = vpop.f32.mrb[0].mxu0
      %938 = vmatprep.mubr.bf16.mxu0 0
      %939 = vmatmul.mubr.bf16.gmra.mrb[0].mxu0 %v543
      %v940 = vpop.f32.mrb[0].mxu0
      %v941 = vadd.f32 %v812, %v940
      %v942 = vpop.f32.mrb[0].mxu0
      %v943 = vpop.f32.mrb[0].mxu0
      %v944 = vadd.f32 %v815, %v943
      %v945 = vpop.f32.mrb[0].mxu0
      %946 = vmatprep.mubr.bf16.mxu0 0
      %947 = vmatmul.mubr.bf16.gmra.mrb[0].mxu0 %v546
      %v948 = vpop.f32.mrb[0].mxu0
      %v949 = vadd.f32 %v820, %v948
      %v950 = vpop.f32.mrb[0].mxu0
      %v951 = vpop.f32.mrb[0].mxu0
      %v952 = vadd.f32 %v823, %v951
      %v953 = vpop.f32.mrb[0].mxu0
      %954 = vmatprep.mubr.bf16.mxu0 0
      %955 = vmatmul.mubr.bf16.gmra.mrb[0].mxu0 %v549
      %v956 = vpop.f32.mrb[0].mxu0
      %v957 = vadd.f32 %v828, %v956
      %v958 = vpop.f32.mrb[0].mxu0
      %v959 = vpop.f32.mrb[0].mxu0
      %v960 = vadd.f32 %v831, %v959
      %v961 = vpop.f32.mrb[0].mxu0
      %962 = vmatprep.mubr.bf16.mxu0 0
      %963 = vmatmul.mubr.bf16.gmra.mrb[0].mxu0 %v552
      %v964 = vpop.f32.mrb[0].mxu0
      %v965 = vadd.f32 %v836, %v964
      %v966 = vpop.f32.mrb[0].mxu0
      %v967 = vpop.f32.mrb[0].mxu0
      %v968 = vadd.f32 %v839, %v967
      %v969 = vpop.f32.mrb[0].mxu0
      %970 = vmatprep.mubr.bf16.mxu0 0
      %971 = vmatmul.mubr.bf16.gmra.mrb[0].mxu0 %v555
      %v972 = vpop.f32.mrb[0].mxu0
      %v973 = vadd.f32 %v844, %v972
      %v974 = vpop.f32.mrb[0].mxu0
      %v975 = vpop.f32.mrb[0].mxu0
      %v976 = vadd.f32 %v847, %v975
      %v977 = vpop.f32.mrb[0].mxu0
      %978 = vmatprep.mubr.bf16.mxu0 0
      %979 = vmatmul.mubr.bf16.gmra.mrb[0].mxu0 %v558
      %v980 = vpop.f32.mrb[0].mxu0
      %v981 = vadd.f32 %v852, %v980
      %v982 = vpop.f32.mrb[0].mxu0
      %v983 = vpop.f32.mrb[0].mxu0
      %v984 = vadd.f32 %v855, %v983
      %v985 = vpop.f32.mrb[0].mxu0
      %986 = vmatprep.mubr.bf16.mxu0 0
      %987 = vmatmul.mubr.bf16.gmra.mrb[0].mxu0 %v561
      %v988 = vpop.f32.mrb[0].mxu0
      %v989 = vadd.f32 %v860, %v988
      %v990 = vpop.f32.mrb[0].mxu0
      %v991 = vpop.f32.mrb[0].mxu0
      %v992 = vadd.f32 %v863, %v991
      %v993 = vpop.f32.mrb[0].mxu0
      %994 = vmatprep.mubr.bf16.mxu0 0
      %995 = vmatmul.mubr.bf16.gmra.mrb[0].mxu0 %v564
      %v996 = vpop.f32.mrb[0].mxu0
      %v997 = vadd.f32 %v868, %v996
      %v998 = vpop.f32.mrb[0].mxu0
      %v999 = vpop.f32.mrb[0].mxu0
      %v1000 = vadd.f32 %v871, %v999
      %v1001 = vpop.f32.mrb[0].mxu0
      %1002 = vdwg.mxu0
      %v1051 = vunpack.c.l.b16 %v210
      %v1052 = vunpack.c.h.b16 %v210
      %v1053 = vunpack.c.l.b16 %v211
      %v1054 = vunpack.c.l.b16 %v212
      %v1055 = vunpack.c.h.b16 %v212
      %v1056 = vunpack.c.l.b16 %v213
      %v1057 = vunpack.c.l.b16 %v214
      %v1058 = vunpack.c.h.b16 %v214
      %v1059 = vunpack.c.l.b16 %v215
      %v1060 = vunpack.c.l.b16 %v216
      %v1061 = vunpack.c.h.b16 %v216
      %v1062 = vunpack.c.l.b16 %v217
      %v1063 = vunpack.c.l.b16 %v218
      %v1064 = vunpack.c.h.b16 %v218
      %v1065 = vunpack.c.l.b16 %v219
      %v1066 = vunpack.c.l.b16 %v220
      %v1067 = vunpack.c.h.b16 %v220
      %v1068 = vunpack.c.l.b16 %v221
      %v1069 = vunpack.c.l.b16 %v222
      %v1070 = vunpack.c.h.b16 %v222
      %v1071 = vunpack.c.l.b16 %v223
      %v1072 = vunpack.c.l.b16 %v224
      %v1073 = vunpack.c.h.b16 %v224
      %v1074 = vunpack.c.l.b16 %v225
      %v1075 = vunpack.c.l.b16 %v226
      %v1076 = vunpack.c.h.b16 %v226
      %v1077 = vunpack.c.l.b16 %v227
      %v1078 = vunpack.c.l.b16 %v228
      %v1079 = vunpack.c.h.b16 %v228
      %v1080 = vunpack.c.l.b16 %v229
      %v1081 = vunpack.c.l.b16 %v230
      %v1082 = vunpack.c.h.b16 %v230
      %v1083 = vunpack.c.l.b16 %v231
      %v1084 = vunpack.c.l.b16 %v232
      %v1085 = vunpack.c.h.b16 %v232
      %v1086 = vunpack.c.l.b16 %v233
      %v1087 = vunpack.c.l.b16 %v234
      %v1088 = vunpack.c.h.b16 %v234
      %v1089 = vunpack.c.l.b16 %v235
      %v1090 = vunpack.c.l.b16 %v236
      %v1091 = vunpack.c.h.b16 %v236
      %v1092 = vunpack.c.l.b16 %v237
      %v1093 = vunpack.c.l.b16 %v238
      %v1094 = vunpack.c.h.b16 %v238
      %v1095 = vunpack.c.l.b16 %v239
      %v1096 = vunpack.c.l.b16 %v240
      %v1097 = vunpack.c.h.b16 %v240
      %v1098 = vunpack.c.l.b16 %v241
      %v1099 = vunpack.c.l.b16 %v242
      %v1100 = vunpack.c.h.b16 %v242
      %v1101 = vunpack.c.l.b16 %v243
      %v1102 = vunpack.c.l.b16 %v244
      %v1103 = vunpack.c.h.b16 %v244
      %v1104 = vunpack.c.l.b16 %v245
      %v1105 = vunpack.c.l.b16 %v246
      %v1106 = vunpack.c.h.b16 %v246
      %v1107 = vunpack.c.l.b16 %v247
      %v1108 = vunpack.c.l.b16 %v248
      %v1109 = vunpack.c.h.b16 %v248
      %v1110 = vunpack.c.l.b16 %v249
      %v1111 = vunpack.c.l.b16 %v250
      %v1112 = vunpack.c.h.b16 %v250
      %v1113 = vunpack.c.l.b16 %v251
      %v1114 = vunpack.c.l.b16 %v252
      %v1115 = vunpack.c.h.b16 %v252
      %v1116 = vunpack.c.l.b16 %v253
      %v1117 = vunpack.c.l.b16 %v254
      %v1118 = vunpack.c.h.b16 %v254
      %v1119 = vunpack.c.l.b16 %v255
      %v1120 = vunpack.c.l.b16 %v256
      %v1121 = vunpack.c.h.b16 %v256
      %v1122 = vunpack.c.l.b16 %v257
      %v1123 = vpack.c.b16 %v1054, %v1051
      %v1124 = vpack.c.b16 %v1055, %v1052
      %v1125 = vpack.c.b16 %v1056, %v1053
      %v1126 = vpack.c.b16 %v1060, %v1057
      %v1127 = vpack.c.b16 %v1061, %v1058
      %v1128 = vpack.c.b16 %v1062, %v1059
      %v1129 = vpack.c.b16 %v1066, %v1063
      %v1130 = vpack.c.b16 %v1067, %v1064
      %v1131 = vpack.c.b16 %v1068, %v1065
      %v1132 = vpack.c.b16 %v1072, %v1069
      %v1133 = vpack.c.b16 %v1073, %v1070
      %v1134 = vpack.c.b16 %v1074, %v1071
      %v1135 = vpack.c.b16 %v1078, %v1075
      %v1136 = vpack.c.b16 %v1079, %v1076
      %v1137 = vpack.c.b16 %v1080, %v1077
      %v1138 = vpack.c.b16 %v1084, %v1081
      %v1139 = vpack.c.b16 %v1085, %v1082
      %v1140 = vpack.c.b16 %v1086, %v1083
      %v1141 = vpack.c.b16 %v1090, %v1087
      %v1142 = vpack.c.b16 %v1091, %v1088
      %v1143 = vpack.c.b16 %v1092, %v1089
      %v1144 = vpack.c.b16 %v1096, %v1093
      %v1145 = vpack.c.b16 %v1097, %v1094
      %v1146 = vpack.c.b16 %v1098, %v1095
      %v1147 = vpack.c.b16 %v1102, %v1099
      %v1148 = vpack.c.b16 %v1103, %v1100
      %v1149 = vpack.c.b16 %v1104, %v1101
      %v1150 = vpack.c.b16 %v1108, %v1105
      %v1151 = vpack.c.b16 %v1109, %v1106
      %v1152 = vpack.c.b16 %v1110, %v1107
      %v1153 = vpack.c.b16 %v1114, %v1111
      %v1154 = vpack.c.b16 %v1115, %v1112
      %v1155 = vpack.c.b16 %v1116, %v1113
      %v1156 = vpack.c.b16 %v1120, %v1117
      %v1157 = vpack.c.b16 %v1121, %v1118
      %v1158 = vpack.c.b16 %v1122, %v1119
      %v1243 = vunpack.c.l.b16 %v258
      %v1244 = vunpack.c.l.b16 %v259
      %v1245 = vunpack.c.l.b16 %v260
      %v1246 = vunpack.c.l.b16 %v261
      %v1247 = vunpack.c.l.b16 %v262
      %v1248 = vunpack.c.l.b16 %v263
      %v1249 = vunpack.c.l.b16 %v264
      %v1250 = vunpack.c.l.b16 %v265
      %v1251 = vunpack.c.l.b16 %v266
      %v1252 = vunpack.c.l.b16 %v267
      %v1253 = vunpack.c.l.b16 %v268
      %v1254 = vunpack.c.l.b16 %v269
      %v1255 = vunpack.c.l.b16 %v270
      %v1256 = vunpack.c.l.b16 %v271
      %v1257 = vunpack.c.l.b16 %v272
      %v1258 = vunpack.c.l.b16 %v273
      %v1259 = vunpack.c.l.b16 %v274
      %v1260 = vunpack.c.l.b16 %v275
      %v1261 = vunpack.c.l.b16 %v276
      %v1262 = vunpack.c.l.b16 %v277
      %v1263 = vunpack.c.l.b16 %v278
      %v1264 = vunpack.c.l.b16 %v279
      %v1265 = vunpack.c.l.b16 %v280
      %v1266 = vunpack.c.l.b16 %v281
      %v1267 = vunpack.c.l.b16 %v282
      %v1268 = vunpack.c.l.b16 %v283
      %v1269 = vunpack.c.l.b16 %v284
      %v1270 = vunpack.c.l.b16 %v285
      %v1271 = vunpack.c.l.b16 %v286
      %v1272 = vunpack.c.l.b16 %v287
      %v1273 = vunpack.c.l.b16 %v288
      %v1274 = vunpack.c.l.b16 %v289
      %v1275 = vunpack.c.l.b16 %v290
      %v1276 = vunpack.c.l.b16 %v291
      %v1277 = vunpack.c.l.b16 %v292
      %v1278 = vunpack.c.l.b16 %v293
      %v1279 = vunpack.c.l.b16 %v294
      %v1280 = vunpack.c.l.b16 %v295
      %v1281 = vunpack.c.l.b16 %v296
      %v1282 = vunpack.c.l.b16 %v297
      %v1283 = vunpack.c.l.b16 %v298
      %v1284 = vunpack.c.l.b16 %v299
      %v1285 = vunpack.c.l.b16 %v300
      %v1286 = vunpack.c.l.b16 %v301
      %v1287 = vunpack.c.l.b16 %v302
      %v1288 = vunpack.c.l.b16 %v303
      %v1289 = vunpack.c.l.b16 %v304
      %v1290 = vunpack.c.l.b16 %v305
      %v1291 = vpack.c.b16 %v1244, %v1243
      %v1292 = vpack.c.b16 %v1246, %v1245
      %v1293 = vpack.c.b16 %v1248, %v1247
      %v1294 = vpack.c.b16 %v1250, %v1249
      %v1295 = vpack.c.b16 %v1252, %v1251
      %v1296 = vpack.c.b16 %v1254, %v1253
      %v1297 = vpack.c.b16 %v1256, %v1255
      %v1298 = vpack.c.b16 %v1258, %v1257
      %v1299 = vpack.c.b16 %v1260, %v1259
      %v1300 = vpack.c.b16 %v1262, %v1261
      %v1301 = vpack.c.b16 %v1264, %v1263
      %v1302 = vpack.c.b16 %v1266, %v1265
      %v1303 = vpack.c.b16 %v1268, %v1267
      %v1304 = vpack.c.b16 %v1270, %v1269
      %v1305 = vpack.c.b16 %v1272, %v1271
      %v1306 = vpack.c.b16 %v1274, %v1273
      %v1307 = vpack.c.b16 %v1276, %v1275
      %v1308 = vpack.c.b16 %v1278, %v1277
      %v1309 = vpack.c.b16 %v1280, %v1279
      %v1310 = vpack.c.b16 %v1282, %v1281
      %v1311 = vpack.c.b16 %v1284, %v1283
      %v1312 = vpack.c.b16 %v1286, %v1285
      %v1313 = vpack.c.b16 %v1288, %v1287
      %v1314 = vpack.c.b16 %v1290, %v1289
      %1339 = vmatprep.subr.bf16.mxu0 0
      %1340 = vmatpush1.bf16.msra.mxu0 %v1291
      %1341 = vmatprep.subr.bf16.mxu0 0
      %1342 = vmatpush1.bf16.msra.mxu0 %v1292
      %1343 = vmatprep.subr.bf16.mxu0 0
      %1344 = vmatpush1.bf16.msra.mxu0 %v1293
      %1345 = vmatprep.subr.bf16.mxu0 0
      %1346 = vmatpush1.bf16.msra.mxu0 %v1294
      %1347 = vmatprep.subr.bf16.mxu0 0
      %1348 = vmatpush1.bf16.msra.mxu0 %v1295
      %1349 = vmatprep.subr.bf16.mxu0 0
      %1350 = vmatpush1.bf16.msra.mxu0 %v1296
      %1351 = vmatprep.subr.bf16.mxu0 0
      %1352 = vmatpush1.bf16.msra.mxu0 %v1297
      %1353 = vmatprep.subr.bf16.mxu0 0
      %1354 = vmatpush1.bf16.msra.mxu0 %v1298
      %1355 = vmatprep.subr.bf16.mxu0 0
      %1356 = vmatpush1.bf16.msra.mxu0 %v1299
      %1357 = vmatprep.subr.bf16.mxu0 0
      %1358 = vmatpush1.bf16.msra.mxu0 %v1300
      %1359 = vmatprep.subr.bf16.mxu0 0
      %1360 = vmatpush1.bf16.msra.mxu0 %v1301
      %1361 = vmatprep.subr.bf16.mxu0 0
      %1362 = vmatpush1.bf16.msra.mxu0 %v1302
      %1363 = vmatprep.subr.bf16.mxu0 0
      %1364 = vmatpush1.bf16.msra.mxu0 %v1303
      %1365 = vmatprep.subr.bf16.mxu0 0
      %1366 = vmatpush1.bf16.msra.mxu0 %v1304
      %1367 = vmatprep.subr.bf16.mxu0 0
      %1368 = vmatpush1.bf16.msra.mxu0 %v1305
      %1369 = vmatprep.subr.bf16.mxu0 0
      %1370 = vmatpush1.bf16.msra.mxu0 %v1306
      %1371 = vmatprep.mubr.bf16.mxu0 %v1124
      %1372 = vmatmul.mubr.bf16.gmra.mrb[0].mxu0 %v1123
      %v1373 = vpop.f32.mrb[0].mxu0
      %v1374 = vadd.f32 %v909, %v1373
      %v1375 = vpop.f32.mrb[0].mxu0
      %v1376 = vpop.f32.mrb[0].mxu0
      %v1377 = vadd.f32 %v912, %v1376
      %v1378 = vpop.f32.mrb[0].mxu0
      %1379 = vmatprep.mubr.bf16.mxu0 %v1127
      %1380 = vmatmul.mubr.bf16.gmra.mrb[0].mxu0 %v1126
      %v1381 = vpop.f32.mrb[0].mxu0
      %v1382 = vadd.f32 %v917, %v1381
      %v1383 = vpop.f32.mrb[0].mxu0
      %v1384 = vpop.f32.mrb[0].mxu0
      %v1385 = vadd.f32 %v920, %v1384
      %v1386 = vpop.f32.mrb[0].mxu0
      %1387 = vmatprep.mubr.bf16.mxu0 %v1130
      %1388 = vmatmul.mubr.bf16.gmra.mrb[0].mxu0 %v1129
      %v1389 = vpop.f32.mrb[0].mxu0
      %v1390 = vadd.f32 %v925, %v1389
      %v1391 = vpop.f32.mrb[0].mxu0
      %v1392 = vpop.f32.mrb[0].mxu0
      %v1393 = vadd.f32 %v928, %v1392
      %v1394 = vpop.f32.mrb[0].mxu0
      %1395 = vmatprep.mubr.bf16.mxu0 %v1133
      %1396 = vmatmul.mubr.bf16.gmra.mrb[0].mxu0 %v1132
      %v1397 = vpop.f32.mrb[0].mxu0
      %v1398 = vadd.f32 %v933, %v1397
      %v1399 = vpop.f32.mrb[0].mxu0
      %v1400 = vpop.f32.mrb[0].mxu0
      %v1401 = vadd.f32 %v936, %v1400
      %v1402 = vpop.f32.mrb[0].mxu0
      %1403 = vmatprep.mubr.bf16.mxu0 %v1136
      %1404 = vmatmul.mubr.bf16.gmra.mrb[0].mxu0 %v1135
      %v1405 = vpop.f32.mrb[0].mxu0
      %v1406 = vadd.f32 %v941, %v1405
      %v1407 = vpop.f32.mrb[0].mxu0
      %v1408 = vpop.f32.mrb[0].mxu0
      %v1409 = vadd.f32 %v944, %v1408
      %v1410 = vpop.f32.mrb[0].mxu0
      %1411 = vmatprep.mubr.bf16.mxu0 %v1139
      %1412 = vmatmul.mubr.bf16.gmra.mrb[0].mxu0 %v1138
      %v1413 = vpop.f32.mrb[0].mxu0
      %v1414 = vadd.f32 %v949, %v1413
      %v1415 = vpop.f32.mrb[0].mxu0
      %v1416 = vpop.f32.mrb[0].mxu0
      %v1417 = vadd.f32 %v952, %v1416
      %v1418 = vpop.f32.mrb[0].mxu0
      %1419 = vmatprep.mubr.bf16.mxu0 %v1142
      %1420 = vmatmul.mubr.bf16.gmra.mrb[0].mxu0 %v1141
      %v1421 = vpop.f32.mrb[0].mxu0
      %v1422 = vadd.f32 %v957, %v1421
      %v1423 = vpop.f32.mrb[0].mxu0
      %v1424 = vpop.f32.mrb[0].mxu0
      %v1425 = vadd.f32 %v960, %v1424
      %v1426 = vpop.f32.mrb[0].mxu0
      %1427 = vmatprep.mubr.bf16.mxu0 %v1145
      %1428 = vmatmul.mubr.bf16.gmra.mrb[0].mxu0 %v1144
      %v1429 = vpop.f32.mrb[0].mxu0
      %v1430 = vadd.f32 %v965, %v1429
      %v1431 = vpop.f32.mrb[0].mxu0
      %v1432 = vpop.f32.mrb[0].mxu0
      %v1433 = vadd.f32 %v968, %v1432
      %v1434 = vpop.f32.mrb[0].mxu0
      %1435 = vmatprep.mubr.bf16.mxu0 %v1148
      %1436 = vmatmul.mubr.bf16.gmra.mrb[0].mxu0 %v1147
      %v1437 = vpop.f32.mrb[0].mxu0
      %v1438 = vadd.f32 %v973, %v1437
      %v1439 = vpop.f32.mrb[0].mxu0
      %v1440 = vpop.f32.mrb[0].mxu0
      %v1441 = vadd.f32 %v976, %v1440
      %v1442 = vpop.f32.mrb[0].mxu0
      %1443 = vmatprep.mubr.bf16.mxu0 %v1151
      %1444 = vmatmul.mubr.bf16.gmra.mrb[0].mxu0 %v1150
      %v1445 = vpop.f32.mrb[0].mxu0
      %v1446 = vadd.f32 %v981, %v1445
      %v1447 = vpop.f32.mrb[0].mxu0
      %v1448 = vpop.f32.mrb[0].mxu0
      %v1449 = vadd.f32 %v984, %v1448
      %v1450 = vpop.f32.mrb[0].mxu0
      %1451 = vmatprep.mubr.bf16.mxu0 %v1154
      %1452 = vmatmul.mubr.bf16.gmra.mrb[0].mxu0 %v1153
      %v1453 = vpop.f32.mrb[0].mxu0
      %v1454 = vadd.f32 %v989, %v1453
      %v1455 = vpop.f32.mrb[0].mxu0
      %v1456 = vpop.f32.mrb[0].mxu0
      %v1457 = vadd.f32 %v992, %v1456
      %v1458 = vpop.f32.mrb[0].mxu0
      %1459 = vmatprep.mubr.bf16.mxu0 %v1157
      %1460 = vmatmul.mubr.bf16.gmra.mrb[0].mxu0 %v1156
      %v1461 = vpop.f32.mrb[0].mxu0
      %v1462 = vadd.f32 %v997, %v1461
      %v1463 = vpop.f32.mrb[0].mxu0
      %v1464 = vpop.f32.mrb[0].mxu0
      %v1465 = vadd.f32 %v1000, %v1464
      %v1466 = vpop.f32.mrb[0].mxu0
      %1467 = vdwg.mxu0
      %1468 = vmatprep.subr.bf16.mxu0 0
      %1469 = vmatpush1.bf16.msra.mxu0 %v1307
      %1470 = vmatprep.subr.bf16.mxu0 0
      %1471 = vmatpush1.bf16.msra.mxu0 %v1308
      %1472 = vmatprep.subr.bf16.mxu0 0
      %1473 = vmatpush1.bf16.msra.mxu0 %v1309
      %1474 = vmatprep.subr.bf16.mxu0 0
      %1475 = vmatpush1.bf16.msra.mxu0 %v1310
      %1476 = vmatprep.subr.bf16.mxu0 0
      %1477 = vmatpush1.bf16.msra.mxu0 %v1311
      %1478 = vmatprep.subr.bf16.mxu0 0
      %1479 = vmatpush1.bf16.msra.mxu0 %v1312
      %1480 = vmatprep.subr.bf16.mxu0 0
      %1481 = vmatpush1.bf16.msra.mxu0 %v1313
      %1482 = vmatprep.subr.bf16.mxu0 0
      %1483 = vmatpush1.bf16.msra.mxu0 %v1314
      %1484 = vmatprep.subr.bf16.mxu0 0
      %1485 = vmatpush1.bf16.msra.mxu0 0
      %1486 = vmatprep.subr.bf16.mxu0 0
      %1487 = vmatpush1.bf16.msra.mxu0 0
      %1488 = vmatprep.subr.bf16.mxu0 0
      %1489 = vmatpush1.bf16.msra.mxu0 0
      %1490 = vmatprep.subr.bf16.mxu0 0
      %1491 = vmatpush1.bf16.msra.mxu0 0
      %1492 = vmatprep.subr.bf16.mxu0 0
      %1493 = vmatpush1.bf16.msra.mxu0 0
      %1494 = vmatprep.subr.bf16.mxu0 0
      %1495 = vmatpush1.bf16.msra.mxu0 0
      %1496 = vmatprep.subr.bf16.mxu0 0
      %1497 = vmatpush1.bf16.msra.mxu0 0
      %1498 = vmatprep.subr.bf16.mxu0 0
      %1499 = vmatpush1.bf16.msra.mxu0 0
      %1500 = vmatprep.mubr.bf16.mxu0 0
      %1501 = vmatmul.mubr.bf16.gmra.mrb[0].mxu0 %v1125
      %v1502 = vpop.f32.mrb[0].mxu0
      %v1503 = vadd.f32 %v1374, %v1502
      %v1504 = vpop.f32.mrb[0].mxu0
      %v1505 = vpop.f32.mrb[0].mxu0
      %v1506 = vadd.f32 %v1377, %v1505
      %v1507 = vpop.f32.mrb[0].mxu0
      %1508 = vmatprep.mubr.bf16.mxu0 0
      %1509 = vmatmul.mubr.bf16.gmra.mrb[0].mxu0 %v1128
      %v1510 = vpop.f32.mrb[0].mxu0
      %v1511 = vadd.f32 %v1382, %v1510
      %v1512 = vpop.f32.mrb[0].mxu0
      %v1513 = vpop.f32.mrb[0].mxu0
      %v1514 = vadd.f32 %v1385, %v1513
      %v1515 = vpop.f32.mrb[0].mxu0
      %1516 = vmatprep.mubr.bf16.mxu0 0
      %1517 = vmatmul.mubr.bf16.gmra.mrb[0].mxu0 %v1131
      %v1518 = vpop.f32.mrb[0].mxu0
      %v1519 = vadd.f32 %v1390, %v1518
      %v1520 = vpop.f32.mrb[0].mxu0
      %v1521 = vpop.f32.mrb[0].mxu0
      %v1522 = vadd.f32 %v1393, %v1521
      %v1523 = vpop.f32.mrb[0].mxu0
      %1524 = vmatprep.mubr.bf16.mxu0 0
      %1525 = vmatmul.mubr.bf16.gmra.mrb[0].mxu0 %v1134
      %v1526 = vpop.f32.mrb[0].mxu0
      %v1527 = vadd.f32 %v1398, %v1526
      %v1528 = vpop.f32.mrb[0].mxu0
      %v1529 = vpop.f32.mrb[0].mxu0
      %v1530 = vadd.f32 %v1401, %v1529
      %v1531 = vpop.f32.mrb[0].mxu0
      %1532 = vmatprep.mubr.bf16.mxu0 0
      %1533 = vmatmul.mubr.bf16.gmra.mrb[0].mxu0 %v1137
      %v1534 = vpop.f32.mrb[0].mxu0
      %v1535 = vadd.f32 %v1406, %v1534
      %v1536 = vpop.f32.mrb[0].mxu0
      %v1537 = vpop.f32.mrb[0].mxu0
      %v1538 = vadd.f32 %v1409, %v1537
      %v1539 = vpop.f32.mrb[0].mxu0
      %1540 = vmatprep.mubr.bf16.mxu0 0
      %1541 = vmatmul.mubr.bf16.gmra.mrb[0].mxu0 %v1140
      %v1542 = vpop.f32.mrb[0].mxu0
      %v1543 = vadd.f32 %v1414, %v1542
      %v1544 = vpop.f32.mrb[0].mxu0
      %v1545 = vpop.f32.mrb[0].mxu0
      %v1546 = vadd.f32 %v1417, %v1545
      %v1547 = vpop.f32.mrb[0].mxu0
      %1548 = vmatprep.mubr.bf16.mxu0 0
      %1549 = vmatmul.mubr.bf16.gmra.mrb[0].mxu0 %v1143
      %v1550 = vpop.f32.mrb[0].mxu0
      %v1551 = vadd.f32 %v1422, %v1550
      %v1552 = vpop.f32.mrb[0].mxu0
      %v1553 = vpop.f32.mrb[0].mxu0
      %v1554 = vadd.f32 %v1425, %v1553
      %v1555 = vpop.f32.mrb[0].mxu0
      %1556 = vmatprep.mubr.bf16.mxu0 0
      %1557 = vmatmul.mubr.bf16.gmra.mrb[0].mxu0 %v1146
      %v1558 = vpop.f32.mrb[0].mxu0
      %v1559 = vadd.f32 %v1430, %v1558
      %v1560 = vpop.f32.mrb[0].mxu0
      %v1561 = vpop.f32.mrb[0].mxu0
      %v1562 = vadd.f32 %v1433, %v1561
      %v1563 = vpop.f32.mrb[0].mxu0
      %1564 = vmatprep.mubr.bf16.mxu0 0
      %1565 = vmatmul.mubr.bf16.gmra.mrb[0].mxu0 %v1149
      %v1566 = vpop.f32.mrb[0].mxu0
      %v1567 = vadd.f32 %v1438, %v1566
      %v1568 = vpop.f32.mrb[0].mxu0
      %v1569 = vpop.f32.mrb[0].mxu0
      %v1570 = vadd.f32 %v1441, %v1569
      %v1571 = vpop.f32.mrb[0].mxu0
      %1572 = vmatprep.mubr.bf16.mxu0 0
      %1573 = vmatmul.mubr.bf16.gmra.mrb[0].mxu0 %v1152
      %v1574 = vpop.f32.mrb[0].mxu0
      %v1575 = vadd.f32 %v1446, %v1574
      %v1576 = vpop.f32.mrb[0].mxu0
      %v1577 = vpop.f32.mrb[0].mxu0
      %v1578 = vadd.f32 %v1449, %v1577
      %v1579 = vpop.f32.mrb[0].mxu0
      %1580 = vmatprep.mubr.bf16.mxu0 0
      %1581 = vmatmul.mubr.bf16.gmra.mrb[0].mxu0 %v1155
      %v1582 = vpop.f32.mrb[0].mxu0
      %v1583 = vadd.f32 %v1454, %v1582
      %v1584 = vpop.f32.mrb[0].mxu0
      %v1585 = vpop.f32.mrb[0].mxu0
      %v1586 = vadd.f32 %v1457, %v1585
      %v1587 = vpop.f32.mrb[0].mxu0
      %1588 = vmatprep.mubr.bf16.mxu0 0
      %1589 = vmatmul.mubr.bf16.gmra.mrb[0].mxu0 %v1158
      %v1590 = vpop.f32.mrb[0].mxu0
      %v1591 = vadd.f32 %v1462, %v1590
      %v1592 = vpop.f32.mrb[0].mxu0
      %v1593 = vpop.f32.mrb[0].mxu0
      %v1594 = vadd.f32 %v1465, %v1593
      %v1595 = vpop.f32.mrb[0].mxu0
      %1596 = vdwg.mxu0
      %s1597 = sadd.s32 %s204, 32
      %s1598 = sshra.s32 %s1597, 3
      %s1599 = sand.u32 %s1597, 7
      %s1600 = smul.u32 %s1598, 3
      %s1601 = smul.addr %s1600, 4
      %s1602 = scalar_lea.vmem %s0, %s1601
      %v1603 = vld [vmem:[%s1602] sm:$0xff]
      %v1604 = vld [vmem:[%s1602 + $0x8] sm:$0xf]
      %v1605 = vld [vmem:[%s1602 + $0xc] sm:$0xff]
      %v1606 = vld [vmem:[%s1602 + $0x14] sm:$0xf]
      %v1607 = vld [vmem:[%s1602 + $0x18] sm:$0xff]
      %v1608 = vld [vmem:[%s1602 + $0x20] sm:$0xf]
      %v1609 = vld [vmem:[%s1602 + $0x24] sm:$0xff]
      %v1610 = vld [vmem:[%s1602 + $0x2c] sm:$0xf]
      %v1611 = vld [vmem:[%s1602 + $0x30] sm:$0xff]
      %v1612 = vld [vmem:[%s1602 + $0x38] sm:$0xf]
      %v1613 = vld [vmem:[%s1602 + $0x3c] sm:$0xff]
      %v1614 = vld [vmem:[%s1602 + $0x44] sm:$0xf]
      %v1615 = vld [vmem:[%s1602 + $0x48] sm:$0xff]
      %v1616 = vld [vmem:[%s1602 + $0x50] sm:$0xf]
      %v1617 = vld [vmem:[%s1602 + $0x54] sm:$0xff]
      %v1618 = vld [vmem:[%s1602 + $0x5c] sm:$0xf]
      %v1619 = vld [vmem:[%s1602 + $0x60] sm:$0xff]
      %v1620 = vld [vmem:[%s1602 + $0x68] sm:$0xf]
      %v1621 = vld [vmem:[%s1602 + $0x6c] sm:$0xff]
      %v1622 = vld [vmem:[%s1602 + $0x74] sm:$0xf]
      %v1623 = vld [vmem:[%s1602 + $0x78] sm:$0xff]
      %v1624 = vld [vmem:[%s1602 + $0x80] sm:$0xf]
      %v1625 = vld [vmem:[%s1602 + $0x84] sm:$0xff]
      %v1626 = vld [vmem:[%s1602 + $0x8c] sm:$0xf]
      %v1627 = vld [vmem:[%s1602 + $0x90] sm:$0xff]
      %v1628 = vld [vmem:[%s1602 + $0x98] sm:$0xf]
      %v1629 = vld [vmem:[%s1602 + $0x9c] sm:$0xff]
      %v1630 = vld [vmem:[%s1602 + $0xa4] sm:$0xf]
      %v1631 = vld [vmem:[%s1602 + $0xa8] sm:$0xff]
      %v1632 = vld [vmem:[%s1602 + $0xb0] sm:$0xf]
      %v1633 = vld [vmem:[%s1602 + $0xb4] sm:$0xff]
      %v1634 = vld [vmem:[%s1602 + $0xbc] sm:$0xf]
      %v1635 = vld [vmem:[%s1602 + $0xc0] sm:$0xff]
      %v1636 = vld [vmem:[%s1602 + $0xc8] sm:$0xf]
      %v1637 = vld [vmem:[%s1602 + $0xcc] sm:$0xff]
      %v1638 = vld [vmem:[%s1602 + $0xd4] sm:$0xf]
      %v1639 = vld [vmem:[%s1602 + $0xd8] sm:$0xff]
      %v1640 = vld [vmem:[%s1602 + $0xe0] sm:$0xf]
      %v1641 = vld [vmem:[%s1602 + $0xe4] sm:$0xff]
      %v1642 = vld [vmem:[%s1602 + $0xec] sm:$0xf]
      %v1643 = vld [vmem:[%s1602 + $0xf0] sm:$0xff]
      %v1644 = vld [vmem:[%s1602 + $0xf8] sm:$0xf]
      %v1645 = vld [vmem:[%s1602 + $0xfc] sm:$0xff]
      %v1646 = vld [vmem:[%s1602 + $0x104] sm:$0xf]
      %v1647 = vld [vmem:[%s1602 + $0x108] sm:$0xff]
      %v1648 = vld [vmem:[%s1602 + $0x110] sm:$0xf]
      %v1649 = vld [vmem:[%s1602 + $0x114] sm:$0xff]
      %v1650 = vld [vmem:[%s1602 + $0x11c] sm:$0xf]
      %s1651 = scalar_lea.vmem %s190, 384
      %v1652 = vld [vmem:[%s1651] sm:$0xf]
      %v1653 = vld [vmem:[%s1651 + $0x4] sm:$0xf]
      %v1654 = vld [vmem:[%s1651 + $0x8] sm:$0xf]
      %v1655 = vld [vmem:[%s1651 + $0xc] sm:$0xf]
      %v1656 = vld [vmem:[%s1651 + $0x10] sm:$0xf]
      %v1657 = vld [vmem:[%s1651 + $0x14] sm:$0xf]
      %v1658 = vld [vmem:[%s1651 + $0x18] sm:$0xf]
      %v1659 = vld [vmem:[%s1651 + $0x1c] sm:$0xf]
      %v1660 = vld [vmem:[%s1651 + $0x20] sm:$0xf]
      %v1661 = vld [vmem:[%s1651 + $0x24] sm:$0xf]
      %v1662 = vld [vmem:[%s1651 + $0x28] sm:$0xf]
      %v1663 = vld [vmem:[%s1651 + $0x2c] sm:$0xf]
      %v1664 = vld [vmem:[%s1651 + $0x30] sm:$0xf]
      %v1665 = vld [vmem:[%s1651 + $0x34] sm:$0xf]
      %v1666 = vld [vmem:[%s1651 + $0x38] sm:$0xf]
      %v1667 = vld [vmem:[%s1651 + $0x3c] sm:$0xf]
      %v1668 = vld [vmem:[%s1651 + $0x40] sm:$0xf]
      %v1669 = vld [vmem:[%s1651 + $0x44] sm:$0xf]
      %v1670 = vld [vmem:[%s1651 + $0x48] sm:$0xf]
      %v1671 = vld [vmem:[%s1651 + $0x4c] sm:$0xf]
      %v1672 = vld [vmem:[%s1651 + $0x50] sm:$0xf]
      %v1673 = vld [vmem:[%s1651 + $0x54] sm:$0xf]
      %v1674 = vld [vmem:[%s1651 + $0x58] sm:$0xf]
      %v1675 = vld [vmem:[%s1651 + $0x5c] sm:$0xf]
      %v1676 = vld [vmem:[%s1651 + $0x60] sm:$0xf]
      %v1677 = vld [vmem:[%s1651 + $0x64] sm:$0xf]
      %v1678 = vld [vmem:[%s1651 + $0x68] sm:$0xf]
      %v1679 = vld [vmem:[%s1651 + $0x6c] sm:$0xf]
      %v1680 = vld [vmem:[%s1651 + $0x70] sm:$0xf]
      %v1681 = vld [vmem:[%s1651 + $0x74] sm:$0xf]
      %v1682 = vld [vmem:[%s1651 + $0x78] sm:$0xf]
      %v1683 = vld [vmem:[%s1651 + $0x7c] sm:$0xf]
      %v1684 = vld [vmem:[%s1651 + $0x80] sm:$0xf]
      %v1685 = vld [vmem:[%s1651 + $0x84] sm:$0xf]
      %v1686 = vld [vmem:[%s1651 + $0x88] sm:$0xf]
      %v1687 = vld [vmem:[%s1651 + $0x8c] sm:$0xf]
      %v1688 = vld [vmem:[%s1651 + $0x90] sm:$0xf]
      %v1689 = vld [vmem:[%s1651 + $0x94] sm:$0xf]
      %v1690 = vld [vmem:[%s1651 + $0x98] sm:$0xf]
      %v1691 = vld [vmem:[%s1651 + $0x9c] sm:$0xf]
      %v1692 = vld [vmem:[%s1651 + $0xa0] sm:$0xf]
      %v1693 = vld [vmem:[%s1651 + $0xa4] sm:$0xf]
      %v1694 = vld [vmem:[%s1651 + $0xa8] sm:$0xf]
      %v1695 = vld [vmem:[%s1651 + $0xac] sm:$0xf]
      %v1696 = vld [vmem:[%s1651 + $0xb0] sm:$0xf]
      %v1697 = vld [vmem:[%s1651 + $0xb4] sm:$0xf]
      %v1698 = vld [vmem:[%s1651 + $0xb8] sm:$0xf]
      %v1699 = vld [vmem:[%s1651 + $0xbc] sm:$0xf]
      %v1748 = vunpack.c.l.b16 %v1603
      %v1749 = vunpack.c.h.b16 %v1603
      %v1750 = vunpack.c.l.b16 %v1604
      %v1751 = vunpack.c.l.b16 %v1605
      %v1752 = vunpack.c.h.b16 %v1605
      %v1753 = vunpack.c.l.b16 %v1606
      %v1754 = vunpack.c.l.b16 %v1607
      %v1755 = vunpack.c.h.b16 %v1607
      %v1756 = vunpack.c.l.b16 %v1608
      %v1757 = vunpack.c.l.b16 %v1609
      %v1758 = vunpack.c.h.b16 %v1609
      %v1759 = vunpack.c.l.b16 %v1610
      %v1760 = vunpack.c.l.b16 %v1611
      %v1761 = vunpack.c.h.b16 %v1611
      %v1762 = vunpack.c.l.b16 %v1612
      %v1763 = vunpack.c.l.b16 %v1613
      %v1764 = vunpack.c.h.b16 %v1613
      %v1765 = vunpack.c.l.b16 %v1614
      %v1766 = vunpack.c.l.b16 %v1615
      %v1767 = vunpack.c.h.b16 %v1615
      %v1768 = vunpack.c.l.b16 %v1616
      %v1769 = vunpack.c.l.b16 %v1617
      %v1770 = vunpack.c.h.b16 %v1617
      %v1771 = vunpack.c.l.b16 %v1618
      %v1772 = vunpack.c.l.b16 %v1619
      %v1773 = vunpack.c.h.b16 %v1619
      %v1774 = vunpack.c.l.b16 %v1620
      %v1775 = vunpack.c.l.b16 %v1621
      %v1776 = vunpack.c.h.b16 %v1621
      %v1777 = vunpack.c.l.b16 %v1622
      %v1778 = vunpack.c.l.b16 %v1623
      %v1779 = vunpack.c.h.b16 %v1623
      %v1780 = vunpack.c.l.b16 %v1624
      %v1781 = vunpack.c.l.b16 %v1625
      %v1782 = vunpack.c.h.b16 %v1625
      %v1783 = vunpack.c.l.b16 %v1626
      %v1784 = vunpack.c.l.b16 %v1627
      %v1785 = vunpack.c.h.b16 %v1627
      %v1786 = vunpack.c.l.b16 %v1628
      %v1787 = vunpack.c.l.b16 %v1629
      %v1788 = vunpack.c.h.b16 %v1629
      %v1789 = vunpack.c.l.b16 %v1630
      %v1790 = vunpack.c.l.b16 %v1631
      %v1791 = vunpack.c.h.b16 %v1631
      %v1792 = vunpack.c.l.b16 %v1632
      %v1793 = vunpack.c.l.b16 %v1633
      %v1794 = vunpack.c.h.b16 %v1633
      %v1795 = vunpack.c.l.b16 %v1634
      %v1796 = vunpack.c.l.b16 %v1635
      %v1797 = vunpack.c.h.b16 %v1635
      %v1798 = vunpack.c.l.b16 %v1636
      %v1799 = vunpack.c.l.b16 %v1637
      %v1800 = vunpack.c.h.b16 %v1637
      %v1801 = vunpack.c.l.b16 %v1638
      %v1802 = vunpack.c.l.b16 %v1639
      %v1803 = vunpack.c.h.b16 %v1639
      %v1804 = vunpack.c.l.b16 %v1640
      %v1805 = vunpack.c.l.b16 %v1641
      %v1806 = vunpack.c.h.b16 %v1641
      %v1807 = vunpack.c.l.b16 %v1642
      %v1808 = vunpack.c.l.b16 %v1643
      %v1809 = vunpack.c.h.b16 %v1643
      %v1810 = vunpack.c.l.b16 %v1644
      %v1811 = vunpack.c.l.b16 %v1645
      %v1812 = vunpack.c.h.b16 %v1645
      %v1813 = vunpack.c.l.b16 %v1646
      %v1814 = vunpack.c.l.b16 %v1647
      %v1815 = vunpack.c.h.b16 %v1647
      %v1816 = vunpack.c.l.b16 %v1648
      %v1817 = vunpack.c.l.b16 %v1649
      %v1818 = vunpack.c.h.b16 %v1649
      %v1819 = vunpack.c.l.b16 %v1650
      %v1820 = vpack.c.b16 %v1751, %v1748
      %v1821 = vpack.c.b16 %v1752, %v1749
      %v1822 = vpack.c.b16 %v1753, %v1750
      %v1823 = vpack.c.b16 %v1757, %v1754
      %v1824 = vpack.c.b16 %v1758, %v1755
      %v1825 = vpack.c.b16 %v1759, %v1756
      %v1826 = vpack.c.b16 %v1763, %v1760
      %v1827 = vpack.c.b16 %v1764, %v1761
      %v1828 = vpack.c.b16 %v1765, %v1762
      %v1829 = vpack.c.b16 %v1769, %v1766
      %v1830 = vpack.c.b16 %v1770, %v1767
      %v1831 = vpack.c.b16 %v1771, %v1768
      %v1832 = vpack.c.b16 %v1775, %v1772
      %v1833 = vpack.c.b16 %v1776, %v1773
      %v1834 = vpack.c.b16 %v1777, %v1774
      %v1835 = vpack.c.b16 %v1781, %v1778
      %v1836 = vpack.c.b16 %v1782, %v1779
      %v1837 = vpack.c.b16 %v1783, %v1780
      %v1838 = vpack.c.b16 %v1787, %v1784
      %v1839 = vpack.c.b16 %v1788, %v1785
      %v1840 = vpack.c.b16 %v1789, %v1786
      %v1841 = vpack.c.b16 %v1793, %v1790
      %v1842 = vpack.c.b16 %v1794, %v1791
      %v1843 = vpack.c.b16 %v1795, %v1792
      %v1844 = vpack.c.b16 %v1799, %v1796
      %v1845 = vpack.c.b16 %v1800, %v1797
      %v1846 = vpack.c.b16 %v1801, %v1798
      %v1847 = vpack.c.b16 %v1805, %v1802
      %v1848 = vpack.c.b16 %v1806, %v1803
      %v1849 = vpack.c.b16 %v1807, %v1804
      %v1850 = vpack.c.b16 %v1811, %v1808
      %v1851 = vpack.c.b16 %v1812, %v1809
      %v1852 = vpack.c.b16 %v1813, %v1810
      %v1853 = vpack.c.b16 %v1817, %v1814
      %v1854 = vpack.c.b16 %v1818, %v1815
      %v1855 = vpack.c.b16 %v1819, %v1816
      %v1940 = vunpack.c.l.b16 %v1652
      %v1941 = vunpack.c.l.b16 %v1653
      %v1942 = vunpack.c.l.b16 %v1654
      %v1943 = vunpack.c.l.b16 %v1655
      %v1944 = vunpack.c.l.b16 %v1656
      %v1945 = vunpack.c.l.b16 %v1657
      %v1946 = vunpack.c.l.b16 %v1658
      %v1947 = vunpack.c.l.b16 %v1659
      %v1948 = vunpack.c.l.b16 %v1660
      %v1949 = vunpack.c.l.b16 %v1661
      %v1950 = vunpack.c.l.b16 %v1662
      %v1951 = vunpack.c.l.b16 %v1663
      %v1952 = vunpack.c.l.b16 %v1664
      %v1953 = vunpack.c.l.b16 %v1665
      %v1954 = vunpack.c.l.b16 %v1666
      %v1955 = vunpack.c.l.b16 %v1667
      %v1956 = vunpack.c.l.b16 %v1668
      %v1957 = vunpack.c.l.b16 %v1669
      %v1958 = vunpack.c.l.b16 %v1670
      %v1959 = vunpack.c.l.b16 %v1671
      %v1960 = vunpack.c.l.b16 %v1672
      %v1961 = vunpack.c.l.b16 %v1673
      %v1962 = vunpack.c.l.b16 %v1674
      %v1963 = vunpack.c.l.b16 %v1675
      %v1964 = vunpack.c.l.b16 %v1676
      %v1965 = vunpack.c.l.b16 %v1677
      %v1966 = vunpack.c.l.b16 %v1678
      %v1967 = vunpack.c.l.b16 %v1679
      %v1968 = vunpack.c.l.b16 %v1680
      %v1969 = vunpack.c.l.b16 %v1681
      %v1970 = vunpack.c.l.b16 %v1682
      %v1971 = vunpack.c.l.b16 %v1683
      %v1972 = vunpack.c.l.b16 %v1684
      %v1973 = vunpack.c.l.b16 %v1685
      %v1974 = vunpack.c.l.b16 %v1686
      %v1975 = vunpack.c.l.b16 %v1687
      %v1976 = vunpack.c.l.b16 %v1688
      %v1977 = vunpack.c.l.b16 %v1689
      %v1978 = vunpack.c.l.b16 %v1690
      %v1979 = vunpack.c.l.b16 %v1691
      %v1980 = vunpack.c.l.b16 %v1692
      %v1981 = vunpack.c.l.b16 %v1693
      %v1982 = vunpack.c.l.b16 %v1694
      %v1983 = vunpack.c.l.b16 %v1695
      %v1984 = vunpack.c.l.b16 %v1696
      %v1985 = vunpack.c.l.b16 %v1697
      %v1986 = vunpack.c.l.b16 %v1698
      %v1987 = vunpack.c.l.b16 %v1699
      %v1988 = vpack.c.b16 %v1941, %v1940
      %v1989 = vpack.c.b16 %v1943, %v1942
      %v1990 = vpack.c.b16 %v1945, %v1944
      %v1991 = vpack.c.b16 %v1947, %v1946
      %v1992 = vpack.c.b16 %v1949, %v1948
      %v1993 = vpack.c.b16 %v1951, %v1950
      %v1994 = vpack.c.b16 %v1953, %v1952
      %v1995 = vpack.c.b16 %v1955, %v1954
      %v1996 = vpack.c.b16 %v1957, %v1956
      %v1997 = vpack.c.b16 %v1959, %v1958
      %v1998 = vpack.c.b16 %v1961, %v1960
      %v1999 = vpack.c.b16 %v1963, %v1962
      %v2000 = vpack.c.b16 %v1965, %v1964
      %v2001 = vpack.c.b16 %v1967, %v1966
      %v2002 = vpack.c.b16 %v1969, %v1968
      %v2003 = vpack.c.b16 %v1971, %v1970
      %v2004 = vpack.c.b16 %v1973, %v1972
      %v2005 = vpack.c.b16 %v1975, %v1974
      %v2006 = vpack.c.b16 %v1977, %v1976
      %v2007 = vpack.c.b16 %v1979, %v1978
      %v2008 = vpack.c.b16 %v1981, %v1980
      %v2009 = vpack.c.b16 %v1983, %v1982
      %v2010 = vpack.c.b16 %v1985, %v1984
      %v2011 = vpack.c.b16 %v1987, %v1986
      %2036 = vmatprep.subr.bf16.mxu0 0
      %2037 = vmatpush1.bf16.msra.mxu0 %v1988
      %2038 = vmatprep.subr.bf16.mxu0 0
      %2039 = vmatpush1.bf16.msra.mxu0 %v1989
      %2040 = vmatprep.subr.bf16.mxu0 0
      %2041 = vmatpush1.bf16.msra.mxu0 %v1990
      %2042 = vmatprep.subr.bf16.mxu0 0
      %2043 = vmatpush1.bf16.msra.mxu0 %v1991
      %2044 = vmatprep.subr.bf16.mxu0 0
      %2045 = vmatpush1.bf16.msra.mxu0 %v1992
      %2046 = vmatprep.subr.bf16.mxu0 0
      %2047 = vmatpush1.bf16.msra.mxu0 %v1993
      %2048 = vmatprep.subr.bf16.mxu0 0
      %2049 = vmatpush1.bf16.msra.mxu0 %v1994
      %2050 = vmatprep.subr.bf16.mxu0 0
      %2051 = vmatpush1.bf16.msra.mxu0 %v1995
      %2052 = vmatprep.subr.bf16.mxu0 0
      %2053 = vmatpush1.bf16.msra.mxu0 %v1996
      %2054 = vmatprep.subr.bf16.mxu0 0
      %2055 = vmatpush1.bf16.msra.mxu0 %v1997
      %2056 = vmatprep.subr.bf16.mxu0 0
      %2057 = vmatpush1.bf16.msra.mxu0 %v1998
      %2058 = vmatprep.subr.bf16.mxu0 0
      %2059 = vmatpush1.bf16.msra.mxu0 %v1999
      %2060 = vmatprep.subr.bf16.mxu0 0
      %2061 = vmatpush1.bf16.msra.mxu0 %v2000
      %2062 = vmatprep.subr.bf16.mxu0 0
      %2063 = vmatpush1.bf16.msra.mxu0 %v2001
      %2064 = vmatprep.subr.bf16.mxu0 0
      %2065 = vmatpush1.bf16.msra.mxu0 %v2002
      %2066 = vmatprep.subr.bf16.mxu0 0
      %2067 = vmatpush1.bf16.msra.mxu0 %v2003
      %2068 = vmatprep.mubr.bf16.mxu0 %v1821
      %2069 = vmatmul.mubr.bf16.gmra.mrb[0].mxu0 %v1820
      %v2070 = vpop.f32.mrb[0].mxu0
      %v2071 = vadd.f32 0.0, %v2070
      %v2072 = vpop.f32.mrb[0].mxu0
      %v2073 = vpop.f32.mrb[0].mxu0
      %v2074 = vadd.f32 0.0, %v2073
      %v2075 = vpop.f32.mrb[0].mxu0
      %2076 = vmatprep.mubr.bf16.mxu0 %v1824
      %2077 = vmatmul.mubr.bf16.gmra.mrb[0].mxu0 %v1823
      %v2078 = vpop.f32.mrb[0].mxu0
      %v2079 = vadd.f32 0.0, %v2078
      %v2080 = vpop.f32.mrb[0].mxu0
      %v2081 = vpop.f32.mrb[0].mxu0
      %v2082 = vadd.f32 0.0, %v2081
      %v2083 = vpop.f32.mrb[0].mxu0
      %2084 = vmatprep.mubr.bf16.mxu0 %v1827
      %2085 = vmatmul.mubr.bf16.gmra.mrb[0].mxu0 %v1826
      %v2086 = vpop.f32.mrb[0].mxu0
      %v2087 = vadd.f32 0.0, %v2086
      %v2088 = vpop.f32.mrb[0].mxu0
      %v2089 = vpop.f32.mrb[0].mxu0
      %v2090 = vadd.f32 0.0, %v2089
      %v2091 = vpop.f32.mrb[0].mxu0
      %2092 = vmatprep.mubr.bf16.mxu0 %v1830
      %2093 = vmatmul.mubr.bf16.gmra.mrb[0].mxu0 %v1829
      %v2094 = vpop.f32.mrb[0].mxu0
      %v2095 = vadd.f32 0.0, %v2094
      %v2096 = vpop.f32.mrb[0].mxu0
      %v2097 = vpop.f32.mrb[0].mxu0
      %v2098 = vadd.f32 0.0, %v2097
      %v2099 = vpop.f32.mrb[0].mxu0
      %2100 = vmatprep.mubr.bf16.mxu0 %v1833
      %2101 = vmatmul.mubr.bf16.gmra.mrb[0].mxu0 %v1832
      %v2102 = vpop.f32.mrb[0].mxu0
      %v2103 = vadd.f32 0.0, %v2102
      %v2104 = vpop.f32.mrb[0].mxu0
      %v2105 = vpop.f32.mrb[0].mxu0
      %v2106 = vadd.f32 0.0, %v2105
      %v2107 = vpop.f32.mrb[0].mxu0
      %2108 = vmatprep.mubr.bf16.mxu0 %v1836
      %2109 = vmatmul.mubr.bf16.gmra.mrb[0].mxu0 %v1835
      %v2110 = vpop.f32.mrb[0].mxu0
      %v2111 = vadd.f32 0.0, %v2110
      %v2112 = vpop.f32.mrb[0].mxu0
      %v2113 = vpop.f32.mrb[0].mxu0
      %v2114 = vadd.f32 0.0, %v2113
      %v2115 = vpop.f32.mrb[0].mxu0
      %2116 = vmatprep.mubr.bf16.mxu0 %v1839
      %2117 = vmatmul.mubr.bf16.gmra.mrb[0].mxu0 %v1838
      %v2118 = vpop.f32.mrb[0].mxu0
      %v2119 = vadd.f32 0.0, %v2118
      %v2120 = vpop.f32.mrb[0].mxu0
      %v2121 = vpop.f32.mrb[0].mxu0
      %v2122 = vadd.f32 0.0, %v2121
      %v2123 = vpop.f32.mrb[0].mxu0
      %2124 = vmatprep.mubr.bf16.mxu0 %v1842
      %2125 = vmatmul.mubr.bf16.gmra.mrb[0].mxu0 %v1841
      %v2126 = vpop.f32.mrb[0].mxu0
      %v2127 = vadd.f32 0.0, %v2126
      %v2128 = vpop.f32.mrb[0].mxu0
      %v2129 = vpop.f32.mrb[0].mxu0
      %v2130 = vadd.f32 0.0, %v2129
      %v2131 = vpop.f32.mrb[0].mxu0
      %2132 = vmatprep.mubr.bf16.mxu0 %v1845
      %2133 = vmatmul.mubr.bf16.gmra.mrb[0].mxu0 %v1844
      %v2134 = vpop.f32.mrb[0].mxu0
      %v2135 = vadd.f32 0.0, %v2134
      %v2136 = vpop.f32.mrb[0].mxu0
      %v2137 = vpop.f32.mrb[0].mxu0
      %v2138 = vadd.f32 0.0, %v2137
      %v2139 = vpop.f32.mrb[0].mxu0
      %2140 = vmatprep.mubr.bf16.mxu0 %v1848
      %2141 = vmatmul.mubr.bf16.gmra.mrb[0].mxu0 %v1847
      %v2142 = vpop.f32.mrb[0].mxu0
      %v2143 = vadd.f32 0.0, %v2142
      %v2144 = vpop.f32.mrb[0].mxu0
      %v2145 = vpop.f32.mrb[0].mxu0
      %v2146 = vadd.f32 0.0, %v2145
      %v2147 = vpop.f32.mrb[0].mxu0
      %2148 = vmatprep.mubr.bf16.mxu0 %v1851
      %2149 = vmatmul.mubr.bf16.gmra.mrb[0].mxu0 %v1850
      %v2150 = vpop.f32.mrb[0].mxu0
      %v2151 = vadd.f32 0.0, %v2150
      %v2152 = vpop.f32.mrb[0].mxu0
      %v2153 = vpop.f32.mrb[0].mxu0
      %v2154 = vadd.f32 0.0, %v2153
      %v2155 = vpop.f32.mrb[0].mxu0
      %2156 = vmatprep.mubr.bf16.mxu0 %v1854
      %2157 = vmatmul.mubr.bf16.gmra.mrb[0].mxu0 %v1853
      %v2158 = vpop.f32.mrb[0].mxu0
      %v2159 = vadd.f32 0.0, %v2158
      %v2160 = vpop.f32.mrb[0].mxu0
      %v2161 = vpop.f32.mrb[0].mxu0
      %v2162 = vadd.f32 0.0, %v2161
      %v2163 = vpop.f32.mrb[0].mxu0
      %2164 = vdwg.mxu0
      %2165 = vmatprep.subr.bf16.mxu0 0
      %2166 = vmatpush1.bf16.msra.mxu0 %v2004
      %2167 = vmatprep.subr.bf16.mxu0 0
      %2168 = vmatpush1.bf16.msra.mxu0 %v2005
      %2169 = vmatprep.subr.bf16.mxu0 0
      %2170 = vmatpush1.bf16.msra.mxu0 %v2006
      %2171 = vmatprep.subr.bf16.mxu0 0
      %2172 = vmatpush1.bf16.msra.mxu0 %v2007
      %2173 = vmatprep.subr.bf16.mxu0 0
      %2174 = vmatpush1.bf16.msra.mxu0 %v2008
      %2175 = vmatprep.subr.bf16.mxu0 0
      %2176 = vmatpush1.bf16.msra.mxu0 %v2009
      %2177 = vmatprep.subr.bf16.mxu0 0
      %2178 = vmatpush1.bf16.msra.mxu0 %v2010
      %2179 = vmatprep.subr.bf16.mxu0 0
      %2180 = vmatpush1.bf16.msra.mxu0 %v2011
      %2181 = vmatprep.subr.bf16.mxu0 0
      %2182 = vmatpush1.bf16.msra.mxu0 0
      %2183 = vmatprep.subr.bf16.mxu0 0
      %2184 = vmatpush1.bf16.msra.mxu0 0
      %2185 = vmatprep.subr.bf16.mxu0 0
      %2186 = vmatpush1.bf16.msra.mxu0 0
      %2187 = vmatprep.subr.bf16.mxu0 0
      %2188 = vmatpush1.bf16.msra.mxu0 0
      %2189 = vmatprep.subr.bf16.mxu0 0
      %2190 = vmatpush1.bf16.msra.mxu0 0
      %2191 = vmatprep.subr.bf16.mxu0 0
      %2192 = vmatpush1.bf16.msra.mxu0 0
      %2193 = vmatprep.subr.bf16.mxu0 0
      %2194 = vmatpush1.bf16.msra.mxu0 0
      %2195 = vmatprep.subr.bf16.mxu0 0
      %2196 = vmatpush1.bf16.msra.mxu0 0
      %2197 = vmatprep.mubr.bf16.mxu0 0
      %2198 = vmatmul.mubr.bf16.gmra.mrb[0].mxu0 %v1822
      %v2199 = vpop.f32.mrb[0].mxu0
      %v2200 = vadd.f32 %v2071, %v2199
      %v2201 = vpop.f32.mrb[0].mxu0
      %v2202 = vpop.f32.mrb[0].mxu0
      %v2203 = vadd.f32 %v2074, %v2202
      %v2204 = vpop.f32.mrb[0].mxu0
      %2205 = vmatprep.mubr.bf16.mxu0 0
      %2206 = vmatmul.mubr.bf16.gmra.mrb[0].mxu0 %v1825
      %v2207 = vpop.f32.mrb[0].mxu0
      %v2208 = vadd.f32 %v2079, %v2207
      %v2209 = vpop.f32.mrb[0].mxu0
      %v2210 = vpop.f32.mrb[0].mxu0
      %v2211 = vadd.f32 %v2082, %v2210
      %v2212 = vpop.f32.mrb[0].mxu0
      %2213 = vmatprep.mubr.bf16.mxu0 0
      %2214 = vmatmul.mubr.bf16.gmra.mrb[0].mxu0 %v1828
      %v2215 = vpop.f32.mrb[0].mxu0
      %v2216 = vadd.f32 %v2087, %v2215
      %v2217 = vpop.f32.mrb[0].mxu0
      %v2218 = vpop.f32.mrb[0].mxu0
      %v2219 = vadd.f32 %v2090, %v2218
      %v2220 = vpop.f32.mrb[0].mxu0
      %2221 = vmatprep.mubr.bf16.mxu0 0
      %2222 = vmatmul.mubr.bf16.gmra.mrb[0].mxu0 %v1831
      %v2223 = vpop.f32.mrb[0].mxu0
      %v2224 = vadd.f32 %v2095, %v2223
      %v2225 = vpop.f32.mrb[0].mxu0
      %v2226 = vpop.f32.mrb[0].mxu0
      %v2227 = vadd.f32 %v2098, %v2226
      %v2228 = vpop.f32.mrb[0].mxu0
      %2229 = vmatprep.mubr.bf16.mxu0 0
      %2230 = vmatmul.mubr.bf16.gmra.mrb[0].mxu0 %v1834
      %v2231 = vpop.f32.mrb[0].mxu0
      %v2232 = vadd.f32 %v2103, %v2231
      %v2233 = vpop.f32.mrb[0].mxu0
      %v2234 = vpop.f32.mrb[0].mxu0
      %v2235 = vadd.f32 %v2106, %v2234
      %v2236 = vpop.f32.mrb[0].mxu0
      %2237 = vmatprep.mubr.bf16.mxu0 0
      %2238 = vmatmul.mubr.bf16.gmra.mrb[0].mxu0 %v1837
      %v2239 = vpop.f32.mrb[0].mxu0
      %v2240 = vadd.f32 %v2111, %v2239
      %v2241 = vpop.f32.mrb[0].mxu0
      %v2242 = vpop.f32.mrb[0].mxu0
      %v2243 = vadd.f32 %v2114, %v2242
      %v2244 = vpop.f32.mrb[0].mxu0
      %2245 = vmatprep.mubr.bf16.mxu0 0
      %2246 = vmatmul.mubr.bf16.gmra.mrb[0].mxu0 %v1840
      %v2247 = vpop.f32.mrb[0].mxu0
      %v2248 = vadd.f32 %v2119, %v2247
      %v2249 = vpop.f32.mrb[0].mxu0
      %v2250 = vpop.f32.mrb[0].mxu0
      %v2251 = vadd.f32 %v2122, %v2250
      %v2252 = vpop.f32.mrb[0].mxu0
      %2253 = vmatprep.mubr.bf16.mxu0 0
      %2254 = vmatmul.mubr.bf16.gmra.mrb[0].mxu0 %v1843
      %v2255 = vpop.f32.mrb[0].mxu0
      %v2256 = vadd.f32 %v2127, %v2255
      %v2257 = vpop.f32.mrb[0].mxu0
      %v2258 = vpop.f32.mrb[0].mxu0
      %v2259 = vadd.f32 %v2130, %v2258
      %v2260 = vpop.f32.mrb[0].mxu0
      %2261 = vmatprep.mubr.bf16.mxu0 0
      %2262 = vmatmul.mubr.bf16.gmra.mrb[0].mxu0 %v1846
      %v2263 = vpop.f32.mrb[0].mxu0
      %v2264 = vadd.f32 %v2135, %v2263
      %v2265 = vpop.f32.mrb[0].mxu0
      %v2266 = vpop.f32.mrb[0].mxu0
      %v2267 = vadd.f32 %v2138, %v2266
      %v2268 = vpop.f32.mrb[0].mxu0
      %2269 = vmatprep.mubr.bf16.mxu0 0
      %2270 = vmatmul.mubr.bf16.gmra.mrb[0].mxu0 %v1849
      %v2271 = vpop.f32.mrb[0].mxu0
      %v2272 = vadd.f32 %v2143, %v2271
      %v2273 = vpop.f32.mrb[0].mxu0
      %v2274 = vpop.f32.mrb[0].mxu0
      %v2275 = vadd.f32 %v2146, %v2274
      %v2276 = vpop.f32.mrb[0].mxu0
      %2277 = vmatprep.mubr.bf16.mxu0 0
      %2278 = vmatmul.mubr.bf16.gmra.mrb[0].mxu0 %v1852
      %v2279 = vpop.f32.mrb[0].mxu0
      %v2280 = vadd.f32 %v2151, %v2279
      %v2281 = vpop.f32.mrb[0].mxu0
      %v2282 = vpop.f32.mrb[0].mxu0
      %v2283 = vadd.f32 %v2154, %v2282
      %v2284 = vpop.f32.mrb[0].mxu0
      %2285 = vmatprep.mubr.bf16.mxu0 0
      %2286 = vmatmul.mubr.bf16.gmra.mrb[0].mxu0 %v1855
      %v2287 = vpop.f32.mrb[0].mxu0
      %v2288 = vadd.f32 %v2159, %v2287
      %v2289 = vpop.f32.mrb[0].mxu0
      %v2290 = vpop.f32.mrb[0].mxu0
      %v2291 = vadd.f32 %v2162, %v2290
      %v2292 = vpop.f32.mrb[0].mxu0
      %2293 = vdwg.mxu0
      %v2294 = vadd.f32 %v1503, %v2200
      %v2295 = vadd.f32 %v1506, %v2203
      %v2296 = vadd.f32 %v1511, %v2208
      %v2297 = vadd.f32 %v1514, %v2211
      %v2298 = vadd.f32 %v1519, %v2216
      %v2299 = vadd.f32 %v1522, %v2219
      %v2300 = vadd.f32 %v1527, %v2224
      %v2301 = vadd.f32 %v1530, %v2227
      %v2302 = vadd.f32 %v1535, %v2232
      %v2303 = vadd.f32 %v1538, %v2235
      %v2304 = vadd.f32 %v1543, %v2240
      %v2305 = vadd.f32 %v1546, %v2243
      %v2306 = vadd.f32 %v1551, %v2248
      %v2307 = vadd.f32 %v1554, %v2251
      %v2308 = vadd.f32 %v1559, %v2256
      %v2309 = vadd.f32 %v1562, %v2259
      %v2310 = vadd.f32 %v1567, %v2264
      %v2311 = vadd.f32 %v1570, %v2267
      %v2312 = vadd.f32 %v1575, %v2272
      %v2313 = vadd.f32 %v1578, %v2275
      %v2314 = vadd.f32 %v1583, %v2280
      %v2315 = vadd.f32 %v1586, %v2283
      %v2316 = vadd.f32 %v1591, %v2288
      %v2317 = vadd.f32 %v1594, %v2291
      %v2318 = vld [vmem:[%s193] sm:$0x1]
      %v2320 = vlaneseq
      %v2321 = vshrl.u32 %v2320, 7
      %v2322 = vsub.s32 0, %v2321
      %v2323 = vrot.slane %v2318, %v2322
      %v2325 = vadd.f32 %v2294, %v2323
      %v2326 = vadd.f32 %v2295, %v2323
      %v2327 = vadd.f32 %v2296, %v2323
      %v2328 = vadd.f32 %v2297, %v2323
      %v2329 = vadd.f32 %v2298, %v2323
      %v2330 = vadd.f32 %v2299, %v2323
      %v2331 = vadd.f32 %v2300, %v2323
      %v2332 = vadd.f32 %v2301, %v2323
      %v2333 = vadd.f32 %v2302, %v2323
      %v2334 = vadd.f32 %v2303, %v2323
      %v2335 = vadd.f32 %v2304, %v2323
      %v2336 = vadd.f32 %v2305, %v2323
      %v2337 = vadd.f32 %v2306, %v2323
      %v2338 = vadd.f32 %v2307, %v2323
      %v2339 = vadd.f32 %v2308, %v2323
      %v2340 = vadd.f32 %v2309, %v2323
      %v2341 = vadd.f32 %v2310, %v2323
      %v2342 = vadd.f32 %v2311, %v2323
      %v2343 = vadd.f32 %v2312, %v2323
      %v2344 = vadd.f32 %v2313, %v2323
      %v2345 = vadd.f32 %v2314, %v2323
      %v2346 = vadd.f32 %v2315, %v2323
      %v2347 = vadd.f32 %v2316, %v2323
      %v2348 = vadd.f32 %v2317, %v2323
      %vm2349 = vcmp.ge.f32.partialorder %v2325, 0.0
      %vm2350 = vcmp.ge.f32.partialorder %v2326, 0.0
      %vm2351 = vcmp.ge.f32.partialorder %v2327, 0.0
      %vm2352 = vcmp.ge.f32.partialorder %v2328, 0.0
      %vm2353 = vcmp.ge.f32.partialorder %v2329, 0.0
      %vm2354 = vcmp.ge.f32.partialorder %v2330, 0.0
      %vm2355 = vcmp.ge.f32.partialorder %v2331, 0.0
      %vm2356 = vcmp.ge.f32.partialorder %v2332, 0.0
      %vm2357 = vcmp.ge.f32.partialorder %v2333, 0.0
      %vm2358 = vcmp.ge.f32.partialorder %v2334, 0.0
      %vm2359 = vcmp.ge.f32.partialorder %v2335, 0.0
      %vm2360 = vcmp.ge.f32.partialorder %v2336, 0.0
      %vm2361 = vcmp.ge.f32.partialorder %v2337, 0.0
      %vm2362 = vcmp.ge.f32.partialorder %v2338, 0.0
      %vm2363 = vcmp.ge.f32.partialorder %v2339, 0.0
      %vm2364 = vcmp.ge.f32.partialorder %v2340, 0.0
      %vm2365 = vcmp.ge.f32.partialorder %v2341, 0.0
      %vm2366 = vcmp.ge.f32.partialorder %v2342, 0.0
      %vm2367 = vcmp.ge.f32.partialorder %v2343, 0.0
      %vm2368 = vcmp.ge.f32.partialorder %v2344, 0.0
      %vm2369 = vcmp.ge.f32.partialorder %v2345, 0.0
      %vm2370 = vcmp.ge.f32.partialorder %v2346, 0.0
      %vm2371 = vcmp.ge.f32.partialorder %v2347, 0.0
      %vm2372 = vcmp.ge.f32.partialorder %v2348, 0.0
      %v2373 = vmul.f32 %v2325, 0.2
      %v2374 = vmul.f32 %v2326, 0.2
      %v2375 = vmul.f32 %v2327, 0.2
      %v2376 = vmul.f32 %v2328, 0.2
      %v2377 = vmul.f32 %v2329, 0.2
      %v2378 = vmul.f32 %v2330, 0.2
      %v2379 = vmul.f32 %v2331, 0.2
      %v2380 = vmul.f32 %v2332, 0.2
      %v2381 = vmul.f32 %v2333, 0.2
      %v2382 = vmul.f32 %v2334, 0.2
      %v2383 = vmul.f32 %v2335, 0.2
      %v2384 = vmul.f32 %v2336, 0.2
      %v2385 = vmul.f32 %v2337, 0.2
      %v2386 = vmul.f32 %v2338, 0.2
      %v2387 = vmul.f32 %v2339, 0.2
      %v2388 = vmul.f32 %v2340, 0.2
      %v2389 = vmul.f32 %v2341, 0.2
      %v2390 = vmul.f32 %v2342, 0.2
      %v2391 = vmul.f32 %v2343, 0.2
      %v2392 = vmul.f32 %v2344, 0.2
      %v2393 = vmul.f32 %v2345, 0.2
      %v2394 = vmul.f32 %v2346, 0.2
      %v2395 = vmul.f32 %v2347, 0.2
      %v2396 = vmul.f32 %v2348, 0.2
      %v2397 = vsel %vm2349, %v2325, %v2373
      %v2398 = vsel %vm2350, %v2326, %v2374
      %v2399 = vsel %vm2351, %v2327, %v2375
      %v2400 = vsel %vm2352, %v2328, %v2376
      %v2401 = vsel %vm2353, %v2329, %v2377
      %v2402 = vsel %vm2354, %v2330, %v2378
      %v2403 = vsel %vm2355, %v2331, %v2379
      %v2404 = vsel %vm2356, %v2332, %v2380
      %v2405 = vsel %vm2357, %v2333, %v2381
      %v2406 = vsel %vm2358, %v2334, %v2382
      %v2407 = vsel %vm2359, %v2335, %v2383
      %v2408 = vsel %vm2360, %v2336, %v2384
      %v2409 = vsel %vm2361, %v2337, %v2385
      %v2410 = vsel %vm2362, %v2338, %v2386
      %v2411 = vsel %vm2363, %v2339, %v2387
      %v2412 = vsel %vm2364, %v2340, %v2388
      %v2413 = vsel %vm2365, %v2341, %v2389
      %v2414 = vsel %vm2366, %v2342, %v2390
      %v2415 = vsel %vm2367, %v2343, %v2391
      %v2416 = vsel %vm2368, %v2344, %v2392
      %v2417 = vsel %vm2369, %v2345, %v2393
      %v2418 = vsel %vm2370, %v2346, %v2394
      %v2419 = vsel %vm2371, %v2347, %v2395
      %v2420 = vsel %vm2372, %v2348, %v2396
      %v2421 = vmul.f32 %v2397, 1.4142135
      %v2422 = vmul.f32 %v2398, 1.4142135
      %v2423 = vmul.f32 %v2399, 1.4142135
      %v2424 = vmul.f32 %v2400, 1.4142135
      %v2425 = vmul.f32 %v2401, 1.4142135
      %v2426 = vmul.f32 %v2402, 1.4142135
      %v2427 = vmul.f32 %v2403, 1.4142135
      %v2428 = vmul.f32 %v2404, 1.4142135
      %v2429 = vmul.f32 %v2405, 1.4142135
      %v2430 = vmul.f32 %v2406, 1.4142135
      %v2431 = vmul.f32 %v2407, 1.4142135
      %v2432 = vmul.f32 %v2408, 1.4142135
      %v2433 = vmul.f32 %v2409, 1.4142135
      %v2434 = vmul.f32 %v2410, 1.4142135
      %v2435 = vmul.f32 %v2411, 1.4142135
      %v2436 = vmul.f32 %v2412, 1.4142135
      %v2437 = vmul.f32 %v2413, 1.4142135
      %v2438 = vmul.f32 %v2414, 1.4142135
      %v2439 = vmul.f32 %v2415, 1.4142135
      %v2440 = vmul.f32 %v2416, 1.4142135
      %v2441 = vmul.f32 %v2417, 1.4142135
      %v2442 = vmul.f32 %v2418, 1.4142135
      %v2443 = vmul.f32 %v2419, 1.4142135
      %v2444 = vmul.f32 %v2420, 1.4142135
      %v2445 = vpack.c.bf16 %v2422, %v2421
      %v2446 = vpack.c.bf16 %v2424, %v2423
      %v2447 = vpack.c.bf16 %v2426, %v2425
      %v2448 = vpack.c.bf16 %v2428, %v2427
      %v2449 = vpack.c.bf16 %v2430, %v2429
      %v2450 = vpack.c.bf16 %v2432, %v2431
      %v2451 = vpack.c.bf16 %v2434, %v2433
      %v2452 = vpack.c.bf16 %v2436, %v2435
      %v2453 = vpack.c.bf16 %v2438, %v2437
      %v2454 = vpack.c.bf16 %v2440, %v2439
      %v2455 = vpack.c.bf16 %v2442, %v2441
      %v2456 = vpack.c.bf16 %v2444, %v2443
      %v2469 = vunpack.c.l.b16 %v2445
      %v2470 = vunpack.c.h.b16 %v2445
      %v2471 = vunpack.c.l.b16 %v2446
      %v2472 = vunpack.c.h.b16 %v2446
      %v2473 = vunpack.c.l.b16 %v2447
      %v2474 = vunpack.c.h.b16 %v2447
      %v2475 = vunpack.c.l.b16 %v2448
      %v2476 = vunpack.c.h.b16 %v2448
      %v2477 = vunpack.c.l.b16 %v2449
      %v2478 = vunpack.c.h.b16 %v2449
      %v2479 = vunpack.c.l.b16 %v2450
      %v2480 = vunpack.c.h.b16 %v2450
      %v2481 = vunpack.c.l.b16 %v2451
      %v2482 = vunpack.c.h.b16 %v2451
      %v2483 = vunpack.c.l.b16 %v2452
      %v2484 = vunpack.c.h.b16 %v2452
      %v2485 = vunpack.c.l.b16 %v2453
      %v2486 = vunpack.c.h.b16 %v2453
      %v2487 = vunpack.c.l.b16 %v2454
      %v2488 = vunpack.c.h.b16 %v2454
      %v2489 = vunpack.c.l.b16 %v2455
      %v2490 = vunpack.c.h.b16 %v2455
      %v2491 = vunpack.c.l.b16 %v2456
      %v2492 = vunpack.c.h.b16 %v2456
      %v2493 = vpack.c.b16 %v2469, %v2469
      %v2494 = vpack.c.b16 %v2470, %v2470
      %v2495 = vpack.c.b16 %v2471, %v2471
      %v2496 = vpack.c.b16 %v2472, %v2472
      %v2497 = vpack.c.b16 %v2473, %v2473
      %v2498 = vpack.c.b16 %v2474, %v2474
      %v2499 = vpack.c.b16 %v2475, %v2475
      %v2500 = vpack.c.b16 %v2476, %v2476
      %v2501 = vpack.c.b16 %v2477, %v2477
      %v2502 = vpack.c.b16 %v2478, %v2478
      %v2503 = vpack.c.b16 %v2479, %v2479
      %v2504 = vpack.c.b16 %v2480, %v2480
      %v2505 = vpack.c.b16 %v2481, %v2481
      %v2506 = vpack.c.b16 %v2482, %v2482
      %v2507 = vpack.c.b16 %v2483, %v2483
      %v2508 = vpack.c.b16 %v2484, %v2484
      %v2509 = vpack.c.b16 %v2485, %v2485
      %v2510 = vpack.c.b16 %v2486, %v2486
      %v2511 = vpack.c.b16 %v2487, %v2487
      %v2512 = vpack.c.b16 %v2488, %v2488
      %v2513 = vpack.c.b16 %v2489, %v2489
      %v2514 = vpack.c.b16 %v2490, %v2490
      %v2515 = vpack.c.b16 %v2491, %v2491
      %v2516 = vpack.c.b16 %v2492, %v2492
      %2541 = vst [vmem:[%s201] sm:$0xf] %v2493
      %2542 = vst [vmem:[%s201 + $0x4] sm:$0xf] %v2494
      %2543 = vst [vmem:[%s201 + $0x8] sm:$0xf] %v2495
      %2544 = vst [vmem:[%s201 + $0xc] sm:$0xf] %v2496
      %2545 = vst [vmem:[%s201 + $0x10] sm:$0xf] %v2497
      %2546 = vst [vmem:[%s201 + $0x14] sm:$0xf] %v2498
      %2547 = vst [vmem:[%s201 + $0x18] sm:$0xf] %v2499
      %2548 = vst [vmem:[%s201 + $0x1c] sm:$0xf] %v2500
      %2549 = vst [vmem:[%s201 + $0x20] sm:$0xf] %v2501
      %2550 = vst [vmem:[%s201 + $0x24] sm:$0xf] %v2502
      %2551 = vst [vmem:[%s201 + $0x28] sm:$0xf] %v2503
      %2552 = vst [vmem:[%s201 + $0x2c] sm:$0xf] %v2504
      %2553 = vst [vmem:[%s201 + $0x30] sm:$0xf] %v2505
      %2554 = vst [vmem:[%s201 + $0x34] sm:$0xf] %v2506
      %2555 = vst [vmem:[%s201 + $0x38] sm:$0xf] %v2507
      %2556 = vst [vmem:[%s201 + $0x3c] sm:$0xf] %v2508
      %2557 = vst [vmem:[%s201 + $0x40] sm:$0xf] %v2509
      %2558 = vst [vmem:[%s201 + $0x44] sm:$0xf] %v2510
      %2559 = vst [vmem:[%s201 + $0x48] sm:$0xf] %v2511
      %2560 = vst [vmem:[%s201 + $0x4c] sm:$0xf] %v2512
      %2561 = vst [vmem:[%s201 + $0x50] sm:$0xf] %v2513
      %2562 = vst [vmem:[%s201 + $0x54] sm:$0xf] %v2514
      %2563 = vst [vmem:[%s201 + $0x58] sm:$0xf] %v2515
      %2564 = vst [vmem:[%s201 + $0x5c] sm:$0xf] %v2516
      %s2565 = smul.u32 24, %s18
      %p2566 = scmp.lt.s32.totalorder %s2565, 71
      %s2567 = scalar_select %p2566, %s2565, 71
      %p2568 = scmp.lt.s32.totalorder %s19, 0
      %s2569 = scalar_select %p2568, %s19, 0
      %s2570 = sadd.s32 %s2569, %s2567
      %s2571 = smul.addr %s2570, 4
      %s2572 = scalar_lea.vmem %s3, %s2571
      // Predicated region
      $region33: #{conv_block_forward.2} parent=31 // pred_check
        %p2573 = pneg %p119
      $region34: #{conv_block_forward.2} parent=31 // pred_check_branch
        %2575 = sbr.rel (%p2573) target = $region36
      $region35: #{conv_block_forward.2} parent=31 // pred_region
        %s2576 = smul.u32 24, %s18
      $region36: #{conv_block_forward.2} parent=31 // pred_fallthru
        _
    $region32: #{conv_block_forward.2} parent=5 // pred_fallthru
      _
    %p2577 = scmp.le.s32.totalorder 2, %s9
    // Predicated region
    $region37: #{conv_block_forward.2} parent=5 // pred_check
      %p2578 = pneg %p2577
    $region38: #{conv_block_forward.2} parent=5 // pred_check_branch
      %2580 = sbr.rel (%p2578) target = $region40
    $region39: #{conv_block_forward.2} parent=5 // pred_region
      %s2581 = ssub.s32 %s9, 2
      // Predicated region
      $region41: #{conv_block_forward.2} parent=39 // pred_check
        %p2582 = pneg %p125
      $region42: #{conv_block_forward.2} parent=39 // pred_check_branch
        %2584 = sbr.rel (%p2582) target = $region44
      $region43: #{conv_block_forward.2} parent=39 // pred_region
        %s2585 = smul.u32 24, %s20
        %p2586 = scmp.lt.s32.totalorder %s2585, 71
        %s2587 = scalar_select %p2586, %s2585, 71
        %p2588 = scmp.lt.s32.totalorder %s21, 0
        %s2589 = scalar_select %p2588, %s21, 0
        %s2590 = sadd.s32 %s2589, %s2587
        %s2591 = smul.addr %s2590, 4
        %s2592 = scalar_lea.vmem %s3, %s2591
      $region44: #{conv_block_forward.2} parent=39 // pred_fallthru
        _
    $region40: #{conv_block_forward.2} parent=5 // pred_fallthru
      _
  $region6: #{conv_block_forward.2} parent=0 // loop_footer
    %s13 = sadd.s32 1, %s9
  $region7: #{conv_block_forward.2} parent=0 // loop_footer_branch
    %8 = sbr.rel target = $region3
  $region8: #{conv_block_forward.2} parent=0 // loop_exit
    _

// kernel: conv_block_forward.3
$region0: #{conv_block_forward.3}
  #allocation0 [shape = 'u32[]', space=smem, size = 0x4, offset = 0x4, fixed_abs, tag = 'smem constant byte address 0x4 - core index']
  #allocation1 [shape = 'u32[144,128]{1,0:T(1,128)}', space=vmem, size = 0x12000, scoped, tag = 'internal scratch']
  %s0 = inlined_call_operand.vmem [shape: bf16[2,152,384], index: 0, kind: input, shape index: {}]
  %s1 = inlined_call_operand.vmem [shape: bf16[3,384,256], index: 1, kind: input, shape index: {}]
  %s2 = inlined_call_operand.vmem [shape: f32[1,256], index: 2, kind: input, shape index: {}]
  %s3 = inlined_call_operand.vmem [shape: f32[144,256], index: 3, kind: output, shape index: {}]
  %s4 = sld [smem:[#allocation0]]
  $region45: #{conv_block_forward.3} parent=0
    _
  %s6 = ssub.s32 1, %s4
  %s7 = scalar_select 0, %s6, %s4
  loop: start=0, step=1, limit=5
  $region2: #{conv_block_forward.3} parent=0 // loop_pre_header
    _
  $region3: #{conv_block_forward.3} parent=0 // loop_header
    %s9 = sphi 0, %s13
    %p10 = scmp.ge.s32.totalorder %s9, 5
    %s16 = sphi 0, %s28
    %s17 = sphi 0, %s24
    %s18 = sphi 0, %s16
    %s19 = sphi 0, %s17
    %s20 = sphi 0, %s18
    %s21 = sphi 0, %s19
    %s29 = sphi 0, %s29
    %s31 = sphi 0, %s29
    %s32 = sphi 0, %s31
    %s46 = sphi 0, %s32
    %s52 = sphi 0, %s54
    %s55 = sphi 0, %s52
    %s56 = sphi 0, %s55
    %s72 = sphi 0, %s56
    %s78 = sphi 0, %s80
    %s81 = sphi 0, %s78
    %s82 = sphi 0, %s81
    %s98 = sphi 0, %s82
    %s106 = sphi 0, %s108
    %s109 = sphi 0, %s106
    %s110 = sphi 0, %s109
    %s126 = sphi 0, %s110
  $region4: #{conv_block_forward.3} parent=0 // loop_header_branch
    %12 = sbr.rel (%p10) target = $region8
  $region5: #{conv_block_forward.3} parent=0 // loop_body
    %s14 = ssub.s32 %s9, 1
    %s15 = ssub.s32 %s9, 2
    %s22 = sadd.s32 1, %s17
    %p23 = scmp.ge.s32.totalorder %s22, 1
    %s24 = scalar_select %p23, 0, %s22
    %s25 = sadd.s32 1, %s16
    %s26 = scalar_select %p23, %s25, %s16
    %p27 = scmp.ge.s32.totalorder %s26, 3
    %s28 = scalar_select %p27, 0, %s26
    %s30 = sadd.s32 %s29, 1
    %p33 = scmp.eq.s32.totalorder %s9, 2
    %p34 = scmp.ne.s32.totalorder %s29, %s31
    %p35 = scmp.eq.s32.totalorder %s9, 0
    %p36 = por %p34, %p35
    %p37 = scmp.ne.s32.totalorder %s29, %s31
    %p38 = scmp.eq.s32.totalorder %s14, 2
    %p39 = por %p37, %p38
    %p40 = scmp.ne.s32.totalorder %s31, %s32
    %p41 = scmp.eq.s32.totalorder %s14, 0
    %p42 = por %p40, %p41
    %p43 = scmp.ne.s32.totalorder %s31, %s32
    %p44 = scmp.eq.s32.totalorder %s15, 2
    %p45 = por %p43, %p44
    %p47 = scmp.ne.s32.totalorder %s32, %s46
    %p48 = scmp.eq.s32.totalorder %s15, 0
    %p49 = por %p47, %p48
    %s50 = ssub.s32 %s17, %s24
    %p51 = scmp.eq.s32.totalorder %s50, 0
    %s53 = sadd.s32 %s52, 1
    %s54 = scalar_select %p51, %s52, %s53
    %p57 = pneg %p51
    %p58 = scmp.eq.s32.totalorder %s9, 2
    %p59 = por %p57, %p58
    %p60 = scmp.ne.s32.totalorder %s52, %s55
    %p61 = scmp.eq.s32.totalorder %s9, 0
    %p62 = por %p60, %p61
    %p63 = scmp.ne.s32.totalorder %s52, %s55
    %p64 = scmp.eq.s32.totalorder %s14, 2
    %p65 = por %p63, %p64
    %p66 = scmp.ne.s32.totalorder %s55, %s56
    %p67 = scmp.eq.s32.totalorder %s14, 0
    %p68 = por %p66, %p67
    %p69 = scmp.ne.s32.totalorder %s55, %s56
    %p70 = scmp.eq.s32.totalorder %s15, 2
    %p71 = por %p69, %p70
    %p73 = scmp.ne.s32.totalorder %s56, %s72
    %p74 = scmp.eq.s32.totalorder %s15, 0
    %p75 = por %p73, %p74
    %s76 = ssub.s32 %s17, %s24
    %p77 = scmp.eq.s32.totalorder %s76, 0
    %s79 = sadd.s32 %s78, 1
    %s80 = scalar_select %p77, %s78, %s79
    %p83 = pneg %p77
    %p84 = scmp.eq.s32.totalorder %s9, 2
    %p85 = por %p83, %p84
    %p86 = scmp.ne.s32.totalorder %s78, %s81
    %p87 = scmp.eq.s32.totalorder %s9, 0
    %p88 = por %p86, %p87
    %p89 = scmp.ne.s32.totalorder %s78, %s81
    %p90 = scmp.eq.s32.totalorder %s14, 2
    %p91 = por %p89, %p90
    %p92 = scmp.ne.s32.totalorder %s81, %s82
    %p93 = scmp.eq.s32.totalorder %s14, 0
    %p94 = por %p92, %p93
    %p95 = scmp.ne.s32.totalorder %s81, %s82
    %p96 = scmp.eq.s32.totalorder %s15, 2
    %p97 = por %p95, %p96
    %p99 = scmp.ne.s32.totalorder %s82, %s98
    %p100 = scmp.eq.s32.totalorder %s15, 0
    %p101 = por %p99, %p100
    %s102 = ssub.s32 %s16, %s28
    %s103 = ssub.s32 %s17, %s24
    %s104 = sor.u32 %s102, %s103
    %p105 = scmp.eq.s32.totalorder %s104, 0
    %s107 = sadd.s32 %s106, 1
    %s108 = scalar_select %p105, %s106, %s107
    %p111 = pneg %p105
    %p112 = scmp.eq.s32.totalorder %s9, 2
    %p113 = por %p111, %p112
    %p114 = scmp.ne.s32.totalorder %s106, %s109
    %p115 = scmp.eq.s32.totalorder %s9, 0
    %p116 = por %p114, %p115
    %p117 = scmp.ne.s32.totalorder %s106, %s109
    %p118 = scmp.eq.s32.totalorder %s14, 2
    %p119 = por %p117, %p118
    %p120 = scmp.ne.s32.totalorder %s109, %s110
    %p121 = scmp.eq.s32.totalorder %s14, 0
    %p122 = por %p120, %p121
    %p123 = scmp.ne.s32.totalorder %s109, %s110
    %p124 = scmp.eq.s32.totalorder %s15, 2
    %p125 = por %p123, %p124
    %p127 = scmp.ne.s32.totalorder %s110, %s126
    %p128 = scmp.eq.s32.totalorder %s15, 0
    %p129 = por %p127, %p128
    %p130 = scmp.le.s32.totalorder 1, %s9
    %p131 = scmp.lt.s32.totalorder %s9, 4
    %p132 = pnand %p130, %p131
    %p133 = pneg %p132
    // Predicated region
    $region9: #{conv_block_forward.3} parent=5 // pred_check
      _
    $region10: #{conv_block_forward.3} parent=5 // pred_check_branch
      %135 = sbr.rel (%p132) target = $region12
    $region11: #{conv_block_forward.3} parent=5 // pred_region
      %s136 = ssub.s32 %s9, 1
      // Predicated region
      $region13: #{conv_block_forward.3} parent=11 // pred_check
        %p137 = pneg %p42
      $region14: #{conv_block_forward.3} parent=11 // pred_check_branch
        %139 = sbr.rel (%p137) target = $region16
      $region15: #{conv_block_forward.3} parent=11 // pred_region
        _
      $region16: #{conv_block_forward.3} parent=11 // pred_fallthru
        _
      // Predicated region
      $region17: #{conv_block_forward.3} parent=11 // pred_check
        %p140 = pneg %p68
      $region18: #{conv_block_forward.3} parent=11 // pred_check_branch
        %142 = sbr.rel (%p140) target = $region20
      $region19: #{conv_block_forward.3} parent=11 // pred_region
        %s143 = smul.u32 2, %s19
        %p144 = scmp.lt.s32.totalorder %s143, 1
        %s145 = scalar_select %p144, %s143, 1
        %s146 = smul.addr %s145, 4
        %s147 = scalar_lea.vmem %s1, %s146
        %s148 = smul.u32 2, %s19
      $region20: #{conv_block_forward.3} parent=11 // pred_fallthru
        _
      // Predicated region
      $region21: #{conv_block_forward.3} parent=11 // pred_check
        %p149 = pneg %p94
      $region22: #{conv_block_forward.3} parent=11 // pred_check_branch
        %151 = sbr.rel (%p149) target = $region24
      $region23: #{conv_block_forward.3} parent=11 // pred_region
        %s152 = smul.u32 2, %s19
        %p153 = scmp.lt.s32.totalorder %s152, 1
        %s154 = scalar_select %p153, %s152, 1
        %s155 = scalar_lea.vmem %s2, %s154
        %s156 = smul.u32 2, %s19
      $region24: #{conv_block_forward.3} parent=11 // pred_fallthru
        _
    $region12: #{conv_block_forward.3} parent=5 // pred_fallthru
      _
    %p157 = scmp.lt.s32.totalorder %s9, 3
    // Predicated region
    $region25: #{conv_block_forward.3} parent=5 // pred_check
      %p158 = pneg %p157
    $region26: #{conv_block_forward.3} parent=5 // pred_check_branch
      %160 = sbr.rel (%p158) target = $region28
    $region27: #{conv_block_forward.3} parent=5 // pred_region
      _
    $region28: #{conv_block_forward.3} parent=5 // pred_fallthru
      _
    %p161 = scmp.le.s32.totalorder 1, %s9
    %p162 = scmp.lt.s32.totalorder %s9, 4
    %p163 = pnand %p161, %p162
    %p164 = pneg %p163
    // Predicated region
    $region29: #{conv_block_forward.3} parent=5 // pred_check
      _
    $region30: #{conv_block_forward.3} parent=5 // pred_check_branch
      %166 = sbr.rel (%p163) target = $region32
    $region31: #{conv_block_forward.3} parent=5 // pred_region
      %s167 = ssub.s32 %s9, 1
      %p168 = pneg %p42
      %p169 = pneg %p39
      %s170 = smul.u32 2, %s19
      %p171 = scmp.lt.s32.totalorder %s170, 1
      %s172 = scalar_select %p171, %s170, 1
      %s173 = smul.addr %s172, 4
      %s174 = scalar_lea.vmem %s1, %s173
      %p175 = pneg %p68
      %p176 = pneg %p65
      %s177 = smul.u32 2, %s19
      %p178 = scmp.lt.s32.totalorder %s177, 1
      %s179 = scalar_select %p178, %s177, 1
      %s180 = scalar_lea.vmem %s2, %s179
      %p181 = pneg %p94
      %p182 = pneg %p91
      %p183 = pneg %p122
      %p184 = pneg %p119
      %s185 = smul.u32 6, %s18
      %s186 = smul.u32 2, %s19
      %p187 = scmp.lt.s32.totalorder %s185, 17
      %s188 = scalar_select %p187, %s185, 17
      %p189 = scmp.lt.s32.totalorder %s186, 1
      %s190 = scalar_select %p189, %s186, 1
      %s191 = smul.addr %s188, 2
      %s192 = sadd.s32 %s190, %s191
      %s193 = smul.addr %s192, 8
      %s194 = scalar_lea.vmem %s3, %s193
      %s195 = smul.u32 2, %s19
      %p196 = scmp.lt.s32.totalorder %s195, 1
      %s197 = scalar_select %p196, %s195, 1
      %s198 = smul.addr %s197, 4
      %s199 = scalar_lea.vmem %s1, %s198
      %s200 = smul.u32 2, %s19
      %s201 = smul.u32 2, %s19
      %p202 = scmp.lt.s32.totalorder %s201, 1
      %s203 = scalar_select %p202, %s201, 1
      %s204 = scalar_lea.vmem %s2, %s203
      %s205 = smul.u32 2, %s19
      %s206 = smul.u32 6, %s18
      %s207 = smul.u32 2, %s19
      %p208 = scmp.lt.s32.totalorder %s206, 17
      %s209 = scalar_select %p208, %s206, 17
      %p210 = scmp.lt.s32.totalorder %s207, 1
      %s211 = scalar_select %p210, %s207, 1
      %s212 = smul.addr %s209, 2
      %s213 = sadd.s32 %s211, %s212
      %s214 = smul.addr %s213, 8
      %s215 = scalar_lea.vmem %s3, %s214
      %s216 = smul.u32 6, %s18
      %s217 = smul.u32 2, %s19
      %s219 = smul.u32 %s18, 48
      %s220 = sshra.s32 %s219, 3
      %s221 = sand.u32 %s219, 7
      %s222 = smul.u32 %s220, 3
      %s223 = smul.addr %s222, 4
      %s224 = scalar_lea.vmem %s0, %s223
      %v225 = vld [vmem:[%s224] sm:$0xff]
      %v226 = vld [vmem:[%s224 + $0x8] sm:$0xf]
      %v227 = vld [vmem:[%s224 + $0xc] sm:$0xff]
      %v228 = vld [vmem:[%s224 + $0x14] sm:$0xf]
      %v229 = vld [vmem:[%s224 + $0x18] sm:$0xff]
      %v230 = vld [vmem:[%s224 + $0x20] sm:$0xf]
      %v231 = vld [vmem:[%s224 + $0x24] sm:$0xff]
      %v232 = vld [vmem:[%s224 + $0x2c] sm:$0xf]
      %v233 = vld [vmem:[%s224 + $0x30] sm:$0xff]
      %v234 = vld [vmem:[%s224 + $0x38] sm:$0xf]
      %v235 = vld [vmem:[%s224 + $0x3c] sm:$0xff]
      %v236 = vld [vmem:[%s224 + $0x44] sm:$0xf]
      %v237 = vld [vmem:[%s199] sm:$0xff]
      %v238 = vld [vmem:[%s199 + $0x8] sm:$0xff]
      %v239 = vld [vmem:[%s199 + $0x10] sm:$0xff]
      %v240 = vld [vmem:[%s199 + $0x18] sm:$0xff]
      %v241 = vld [vmem:[%s199 + $0x20] sm:$0xff]
      %v242 = vld [vmem:[%s199 + $0x28] sm:$0xff]
      %v243 = vld [vmem:[%s199 + $0x30] sm:$0xff]
      %v244 = vld [vmem:[%s199 + $0x38] sm:$0xff]
      %v245 = vld [vmem:[%s199 + $0x40] sm:$0xff]
      %v246 = vld [vmem:[%s199 + $0x48] sm:$0xff]
      %v247 = vld [vmem:[%s199 + $0x50] sm:$0xff]
      %v248 = vld [vmem:[%s199 + $0x58] sm:$0xff]
      %v249 = vld [vmem:[%s199 + $0x60] sm:$0xff]
      %v250 = vld [vmem:[%s199 + $0x68] sm:$0xff]
      %v251 = vld [vmem:[%s199 + $0x70] sm:$0xff]
      %v252 = vld [vmem:[%s199 + $0x78] sm:$0xff]
      %v253 = vld [vmem:[%s199 + $0x80] sm:$0xff]
      %v254 = vld [vmem:[%s199 + $0x88] sm:$0xff]
      %v255 = vld [vmem:[%s199 + $0x90] sm:$0xff]
      %v256 = vld [vmem:[%s199 + $0x98] sm:$0xff]
      %v257 = vld [vmem:[%s199 + $0xa0] sm:$0xff]
      %v258 = vld [vmem:[%s199 + $0xa8] sm:$0xff]
      %v259 = vld [vmem:[%s199 + $0xb0] sm:$0xff]
      %v260 = vld [vmem:[%s199 + $0xb8] sm:$0xff]
      %v261 = vld [vmem:[%s199 + $0xc0] sm:$0xff]
      %v262 = vld [vmem:[%s199 + $0xc8] sm:$0xff]
      %v263 = vld [vmem:[%s199 + $0xd0] sm:$0xff]
      %v264 = vld [vmem:[%s199 + $0xd8] sm:$0xff]
      %v265 = vld [vmem:[%s199 + $0xe0] sm:$0xff]
      %v266 = vld [vmem:[%s199 + $0xe8] sm:$0xff]
      %v267 = vld [vmem:[%s199 + $0xf0] sm:$0xff]
      %v268 = vld [vmem:[%s199 + $0xf8] sm:$0xff]
      %v269 = vld [vmem:[%s199 + $0x100] sm:$0xff]
      %v270 = vld [vmem:[%s199 + $0x108] sm:$0xff]
      %v271 = vld [vmem:[%s199 + $0x110] sm:$0xff]
      %v272 = vld [vmem:[%s199 + $0x118] sm:$0xff]
      %v273 = vld [vmem:[%s199 + $0x120] sm:$0xff]
      %v274 = vld [vmem:[%s199 + $0x128] sm:$0xff]
      %v275 = vld [vmem:[%s199 + $0x130] sm:$0xff]
      %v276 = vld [vmem:[%s199 + $0x138] sm:$0xff]
      %v277 = vld [vmem:[%s199 + $0x140] sm:$0xff]
      %v278 = vld [vmem:[%s199 + $0x148] sm:$0xff]
      %v279 = vld [vmem:[%s199 + $0x150] sm:$0xff]
      %v280 = vld [vmem:[%s199 + $0x158] sm:$0xff]
      %v281 = vld [vmem:[%s199 + $0x160] sm:$0xff]
      %v282 = vld [vmem:[%s199 + $0x168] sm:$0xff]
      %v283 = vld [vmem:[%s199 + $0x170] sm:$0xff]
      %v284 = vld [vmem:[%s199 + $0x178] sm:$0xff]
      %s285 = sadd.s32 %s222, 57
      %s286 = smul.addr %s285, 4
      %s287 = scalar_lea.vmem %s0, %s286
      %v288 = vld [vmem:[%s287] sm:$0xff]
      %v289 = vld [vmem:[%s287 + $0x8] sm:$0xf]
      %v290 = vld [vmem:[%s287 + $0xc] sm:$0xff]
      %v291 = vld [vmem:[%s287 + $0x14] sm:$0xf]
      %v292 = vld [vmem:[%s287 + $0x18] sm:$0xff]
      %v293 = vld [vmem:[%s287 + $0x20] sm:$0xf]
      %v294 = vld [vmem:[%s287 + $0x24] sm:$0xff]
      %v295 = vld [vmem:[%s287 + $0x2c] sm:$0xf]
      %v296 = vld [vmem:[%s287 + $0x30] sm:$0xff]
      %v297 = vld [vmem:[%s287 + $0x38] sm:$0xf]
      %v298 = vld [vmem:[%s287 + $0x3c] sm:$0xff]
      %v299 = vld [vmem:[%s287 + $0x44] sm:$0xf]
      %s300 = scalar_lea.vmem %s199, 384
      %v301 = vld [vmem:[%s300] sm:$0xff]
      %v302 = vld [vmem:[%s300 + $0x8] sm:$0xff]
      %v303 = vld [vmem:[%s300 + $0x10] sm:$0xff]
      %v304 = vld [vmem:[%s300 + $0x18] sm:$0xff]
      %v305 = vld [vmem:[%s300 + $0x20] sm:$0xff]
      %v306 = vld [vmem:[%s300 + $0x28] sm:$0xff]
      %v307 = vld [vmem:[%s300 + $0x30] sm:$0xff]
      %v308 = vld [vmem:[%s300 + $0x38] sm:$0xff]
      %v309 = vld [vmem:[%s300 + $0x40] sm:$0xff]
      %v310 = vld [vmem:[%s300 + $0x48] sm:$0xff]
      %v311 = vld [vmem:[%s300 + $0x50] sm:$0xff]
      %v312 = vld [vmem:[%s300 + $0x58] sm:$0xff]
      %v313 = vld [vmem:[%s300 + $0x60] sm:$0xff]
      %v314 = vld [vmem:[%s300 + $0x68] sm:$0xff]
      %v315 = vld [vmem:[%s300 + $0x70] sm:$0xff]
      %v316 = vld [vmem:[%s300 + $0x78] sm:$0xff]
      %v317 = vld [vmem:[%s300 + $0x80] sm:$0xff]
      %v318 = vld [vmem:[%s300 + $0x88] sm:$0xff]
      %v319 = vld [vmem:[%s300 + $0x90] sm:$0xff]
      %v320 = vld [vmem:[%s300 + $0x98] sm:$0xff]
      %v321 = vld [vmem:[%s300 + $0xa0] sm:$0xff]
      %v322 = vld [vmem:[%s300 + $0xa8] sm:$0xff]
      %v323 = vld [vmem:[%s300 + $0xb0] sm:$0xff]
      %v324 = vld [vmem:[%s300 + $0xb8] sm:$0xff]
      %v325 = vld [vmem:[%s300 + $0xc0] sm:$0xff]
      %v326 = vld [vmem:[%s300 + $0xc8] sm:$0xff]
      %v327 = vld [vmem:[%s300 + $0xd0] sm:$0xff]
      %v328 = vld [vmem:[%s300 + $0xd8] sm:$0xff]
      %v329 = vld [vmem:[%s300 + $0xe0] sm:$0xff]
      %v330 = vld [vmem:[%s300 + $0xe8] sm:$0xff]
      %v331 = vld [vmem:[%s300 + $0xf0] sm:$0xff]
      %v332 = vld [vmem:[%s300 + $0xf8] sm:$0xff]
      %v333 = vld [vmem:[%s300 + $0x100] sm:$0xff]
      %v334 = vld [vmem:[%s300 + $0x108] sm:$0xff]
      %v335 = vld [vmem:[%s300 + $0x110] sm:$0xff]
      %v336 = vld [vmem:[%s300 + $0x118] sm:$0xff]
      %v337 = vld [vmem:[%s300 + $0x120] sm:$0xff]
      %v338 = vld [vmem:[%s300 + $0x128] sm:$0xff]
      %v339 = vld [vmem:[%s300 + $0x130] sm:$0xff]
      %v340 = vld [vmem:[%s300 + $0x138] sm:$0xff]
      %v341 = vld [vmem:[%s300 + $0x140] sm:$0xff]
      %v342 = vld [vmem:[%s300 + $0x148] sm:$0xff]
      %v343 = vld [vmem:[%s300 + $0x150] sm:$0xff]
      %v344 = vld [vmem:[%s300 + $0x158] sm:$0xff]
      %v345 = vld [vmem:[%s300 + $0x160] sm:$0xff]
      %v346 = vld [vmem:[%s300 + $0x168] sm:$0xff]
      %v347 = vld [vmem:[%s300 + $0x170] sm:$0xff]
      %v348 = vld [vmem:[%s300 + $0x178] sm:$0xff]
      %v361 = vunpack.c.l.b16 %v288
      %v362 = vunpack.c.h.b16 %v288
      %v363 = vunpack.c.l.b16 %v289
      %v364 = vunpack.c.l.b16 %v290
      %v365 = vunpack.c.h.b16 %v290
      %v366 = vunpack.c.l.b16 %v291
      %v367 = vunpack.c.l.b16 %v292
      %v368 = vunpack.c.h.b16 %v292
      %v369 = vunpack.c.l.b16 %v293
      %v370 = vunpack.c.l.b16 %v294
      %v371 = vunpack.c.h.b16 %v294
      %v372 = vunpack.c.l.b16 %v295
      %v373 = vunpack.c.l.b16 %v296
      %v374 = vunpack.c.h.b16 %v296
      %v375 = vunpack.c.l.b16 %v297
      %v376 = vunpack.c.l.b16 %v298
      %v377 = vunpack.c.h.b16 %v298
      %v378 = vunpack.c.l.b16 %v299
      %v379 = vpack.c.b16 %v364, %v361
      %v380 = vpack.c.b16 %v365, %v362
      %v381 = vpack.c.b16 %v366, %v363
      %v382 = vpack.c.b16 %v370, %v367
      %v383 = vpack.c.b16 %v371, %v368
      %v384 = vpack.c.b16 %v372, %v369
      %v385 = vpack.c.b16 %v376, %v373
      %v386 = vpack.c.b16 %v377, %v374
      %v387 = vpack.c.b16 %v378, %v375
      %v445 = vunpack.c.l.b16 %v301
      %v446 = vunpack.c.h.b16 %v301
      %v447 = vunpack.c.l.b16 %v302
      %v448 = vunpack.c.h.b16 %v302
      %v449 = vunpack.c.l.b16 %v303
      %v450 = vunpack.c.h.b16 %v303
      %v451 = vunpack.c.l.b16 %v304
      %v452 = vunpack.c.h.b16 %v304
      %v453 = vunpack.c.l.b16 %v305
      %v454 = vunpack.c.h.b16 %v305
      %v455 = vunpack.c.l.b16 %v306
      %v456 = vunpack.c.h.b16 %v306
      %v457 = vunpack.c.l.b16 %v307
      %v458 = vunpack.c.h.b16 %v307
      %v459 = vunpack.c.l.b16 %v308
      %v460 = vunpack.c.h.b16 %v308
      %v461 = vunpack.c.l.b16 %v309
      %v462 = vunpack.c.h.b16 %v309
      %v463 = vunpack.c.l.b16 %v310
      %v464 = vunpack.c.h.b16 %v310
      %v465 = vunpack.c.l.b16 %v311
      %v466 = vunpack.c.h.b16 %v311
      %v467 = vunpack.c.l.b16 %v312
      %v468 = vunpack.c.h.b16 %v312
      %v469 = vunpack.c.l.b16 %v313
      %v470 = vunpack.c.h.b16 %v313
      %v471 = vunpack.c.l.b16 %v314
      %v472 = vunpack.c.h.b16 %v314
      %v473 = vunpack.c.l.b16 %v315
      %v474 = vunpack.c.h.b16 %v315
      %v475 = vunpack.c.l.b16 %v316
      %v476 = vunpack.c.h.b16 %v316
      %v477 = vunpack.c.l.b16 %v317
      %v478 = vunpack.c.h.b16 %v317
      %v479 = vunpack.c.l.b16 %v318
      %v480 = vunpack.c.h.b16 %v318
      %v481 = vunpack.c.l.b16 %v319
      %v482 = vunpack.c.h.b16 %v319
      %v483 = vunpack.c.l.b16 %v320
      %v484 = vunpack.c.h.b16 %v320
      %v485 = vunpack.c.l.b16 %v321
      %v486 = vunpack.c.h.b16 %v321
      %v487 = vunpack.c.l.b16 %v322
      %v488 = vunpack.c.h.b16 %v322
      %v489 = vunpack.c.l.b16 %v323
      %v490 = vunpack.c.h.b16 %v323
      %v491 = vunpack.c.l.b16 %v324
      %v492 = vunpack.c.h.b16 %v324
      %v493 = vunpack.c.l.b16 %v325
      %v494 = vunpack.c.h.b16 %v325
      %v495 = vunpack.c.l.b16 %v326
      %v496 = vunpack.c.h.b16 %v326
      %v497 = vunpack.c.l.b16 %v327
      %v498 = vunpack.c.h.b16 %v327
      %v499 = vunpack.c.l.b16 %v328
      %v500 = vunpack.c.h.b16 %v328
      %v501 = vunpack.c.l.b16 %v329
      %v502 = vunpack.c.h.b16 %v329
      %v503 = vunpack.c.l.b16 %v330
      %v504 = vunpack.c.h.b16 %v330
      %v505 = vunpack.c.l.b16 %v331
      %v506 = vunpack.c.h.b16 %v331
      %v507 = vunpack.c.l.b16 %v332
      %v508 = vunpack.c.h.b16 %v332
      %v509 = vunpack.c.l.b16 %v333
      %v510 = vunpack.c.h.b16 %v333
      %v511 = vunpack.c.l.b16 %v334
      %v512 = vunpack.c.h.b16 %v334
      %v513 = vunpack.c.l.b16 %v335
      %v514 = vunpack.c.h.b16 %v335
      %v515 = vunpack.c.l.b16 %v336
      %v516 = vunpack.c.h.b16 %v336
      %v517 = vunpack.c.l.b16 %v337
      %v518 = vunpack.c.h.b16 %v337
      %v519 = vunpack.c.l.b16 %v338
      %v520 = vunpack.c.h.b16 %v338
      %v521 = vunpack.c.l.b16 %v339
      %v522 = vunpack.c.h.b16 %v339
      %v523 = vunpack.c.l.b16 %v340
      %v524 = vunpack.c.h.b16 %v340
      %v525 = vunpack.c.l.b16 %v341
      %v526 = vunpack.c.h.b16 %v341
      %v527 = vunpack.c.l.b16 %v342
      %v528 = vunpack.c.h.b16 %v342
      %v529 = vunpack.c.l.b16 %v343
      %v530 = vunpack.c.h.b16 %v343
      %v531 = vunpack.c.l.b16 %v344
      %v532 = vunpack.c.h.b16 %v344
      %v533 = vunpack.c.l.b16 %v345
      %v534 = vunpack.c.h.b16 %v345
      %v535 = vunpack.c.l.b16 %v346
      %v536 = vunpack.c.h.b16 %v346
      %v537 = vunpack.c.l.b16 %v347
      %v538 = vunpack.c.h.b16 %v347
      %v539 = vunpack.c.l.b16 %v348
      %v540 = vunpack.c.h.b16 %v348
      %v541 = vpack.c.b16 %v447, %v445
      %v542 = vpack.c.b16 %v448, %v446
      %v543 = vpack.c.b16 %v451, %v449
      %v544 = vpack.c.b16 %v452, %v450
      %v545 = vpack.c.b16 %v455, %v453
      %v546 = vpack.c.b16 %v456, %v454
      %v547 = vpack.c.b16 %v459, %v457
      %v548 = vpack.c.b16 %v460, %v458
      %v549 = vpack.c.b16 %v463, %v461
      %v550 = vpack.c.b16 %v464, %v462
      %v551 = vpack.c.b16 %v467, %v465
      %v552 = vpack.c.b16 %v468, %v466
      %v553 = vpack.c.b16 %v471, %v469
      %v554 = vpack.c.b16 %v472, %v470
      %v555 = vpack.c.b16 %v475, %v473
      %v556 = vpack.c.b16 %v476, %v474
      %v557 = vpack.c.b16 %v479, %v477
      %v558 = vpack.c.b16 %v480, %v478
      %v559 = vpack.c.b16 %v483, %v481
      %v560 = vpack.c.b16 %v484, %v482
      %v561 = vpack.c.b16 %v487, %v485
      %v562 = vpack.c.b16 %v488, %v486
      %v563 = vpack.c.b16 %v491, %v489
      %v564 = vpack.c.b16 %v492, %v490
      %v565 = vpack.c.b16 %v495, %v493
      %v566 = vpack.c.b16 %v496, %v494
      %v567 = vpack.c.b16 %v499, %v497
      %v568 = vpack.c.b16 %v500, %v498
      %v569 = vpack.c.b16 %v503, %v501
      %v570 = vpack.c.b16 %v504, %v502
      %v571 = vpack.c.b16 %v507, %v505
      %v572 = vpack.c.b16 %v508, %v506
      %v573 = vpack.c.b16 %v511, %v509
      %v574 = vpack.c.b16 %v512, %v510
      %v575 = vpack.c.b16 %v515, %v513
      %v576 = vpack.c.b16 %v516, %v514
      %v577 = vpack.c.b16 %v519, %v517
      %v578 = vpack.c.b16 %v520, %v518
      %v579 = vpack.c.b16 %v523, %v521
      %v580 = vpack.c.b16 %v524, %v522
      %v581 = vpack.c.b16 %v527, %v525
      %v582 = vpack.c.b16 %v528, %v526
      %v583 = vpack.c.b16 %v531, %v529
      %v584 = vpack.c.b16 %v532, %v530
      %v585 = vpack.c.b16 %v535, %v533
      %v586 = vpack.c.b16 %v536, %v534
      %v587 = vpack.c.b16 %v539, %v537
      %v588 = vpack.c.b16 %v540, %v538
      %637 = vmatprep.subr.bf16.mxu0 %v542
      %638 = vmatpush1.bf16.msra.mxu0 %v541
      %639 = vmatprep.subr.bf16.mxu0 %v544
      %640 = vmatpush1.bf16.msra.mxu0 %v543
      %641 = vmatprep.subr.bf16.mxu0 %v546
      %642 = vmatpush1.bf16.msra.mxu0 %v545
      %643 = vmatprep.subr.bf16.mxu0 %v548
      %644 = vmatpush1.bf16.msra.mxu0 %v547
      %645 = vmatprep.subr.bf16.mxu0 %v550
      %646 = vmatpush1.bf16.msra.mxu0 %v549
      %647 = vmatprep.subr.bf16.mxu0 %v552
      %648 = vmatpush1.bf16.msra.mxu0 %v551
      %649 = vmatprep.subr.bf16.mxu0 %v554
      %650 = vmatpush1.bf16.msra.mxu0 %v553
      %651 = vmatprep.subr.bf16.mxu0 %v556
      %652 = vmatpush1.bf16.msra.mxu0 %v555
      %653 = vmatprep.subr.bf16.mxu0 %v558
      %654 = vmatpush1.bf16.msra.mxu0 %v557
      %655 = vmatprep.subr.bf16.mxu0 %v560
      %656 = vmatpush1.bf16.msra.mxu0 %v559
      %657 = vmatprep.subr.bf16.mxu0 %v562
      %658 = vmatpush1.bf16.msra.mxu0 %v561
      %659 = vmatprep.subr.bf16.mxu0 %v564
      %660 = vmatpush1.bf16.msra.mxu0 %v563
      %661 = vmatprep.subr.bf16.mxu0 %v566
      %662 = vmatpush1.bf16.msra.mxu0 %v565
      %663 = vmatprep.subr.bf16.mxu0 %v568
      %664 = vmatpush1.bf16.msra.mxu0 %v567
      %665 = vmatprep.subr.bf16.mxu0 %v570
      %666 = vmatpush1.bf16.msra.mxu0 %v569
      %667 = vmatprep.subr.bf16.mxu0 %v572
      %668 = vmatpush1.bf16.msra.mxu0 %v571
      %669 = vmatprep.mubr.bf16.mxu0 %v380
      %670 = vmatmul.mubr.bf16.gmra.mrb[0].mxu0 %v379
      %v671 = vpop.f32.mrb[0].mxu0
      %v672 = vadd.f32 0.0, %v671
      %v673 = vpop.f32.mrb[0].mxu0
      %v674 = vadd.f32 0.0, %v673
      %v675 = vpop.f32.mrb[0].mxu0
      %v676 = vadd.f32 0.0, %v675
      %v677 = vpop.f32.mrb[0].mxu0
      %v678 = vadd.f32 0.0, %v677
      %679 = vmatprep.mubr.bf16.mxu0 %v383
      %680 = vmatmul.mubr.bf16.gmra.mrb[0].mxu0 %v382
      %v681 = vpop.f32.mrb[0].mxu0
      %v682 = vadd.f32 0.0, %v681
      %v683 = vpop.f32.mrb[0].mxu0
      %v684 = vadd.f32 0.0, %v683
      %v685 = vpop.f32.mrb[0].mxu0
      %v686 = vadd.f32 0.0, %v685
      %v687 = vpop.f32.mrb[0].mxu0
      %v688 = vadd.f32 0.0, %v687
      %689 = vmatprep.mubr.bf16.mxu0 %v386
      %690 = vmatmul.mubr.bf16.gmra.mrb[0].mxu0 %v385
      %v691 = vpop.f32.mrb[0].mxu0
      %v692 = vadd.f32 0.0, %v691
      %v693 = vpop.f32.mrb[0].mxu0
      %v694 = vadd.f32 0.0, %v693
      %v695 = vpop.f32.mrb[0].mxu0
      %v696 = vadd.f32 0.0, %v695
      %v697 = vpop.f32.mrb[0].mxu0
      %v698 = vadd.f32 0.0, %v697
      %699 = vdwg.mxu0
      %700 = vmatprep.subr.bf16.mxu0 %v574
      %701 = vmatpush1.bf16.msra.mxu0 %v573
      %702 = vmatprep.subr.bf16.mxu0 %v576
      %703 = vmatpush1.bf16.msra.mxu0 %v575
      %704 = vmatprep.subr.bf16.mxu0 %v578
      %705 = vmatpush1.bf16.msra.mxu0 %v577
      %706 = vmatprep.subr.bf16.mxu0 %v580
      %707 = vmatpush1.bf16.msra.mxu0 %v579
      %708 = vmatprep.subr.bf16.mxu0 %v582
      %709 = vmatpush1.bf16.msra.mxu0 %v581
      %710 = vmatprep.subr.bf16.mxu0 %v584
      %711 = vmatpush1.bf16.msra.mxu0 %v583
      %712 = vmatprep.subr.bf16.mxu0 %v586
      %713 = vmatpush1.bf16.msra.mxu0 %v585
      %714 = vmatprep.subr.bf16.mxu0 %v588
      %715 = vmatpush1.bf16.msra.mxu0 %v587
      %716 = vmatprep.subr.bf16.mxu0 0
      %717 = vmatpush1.bf16.msra.mxu0 0
      %718 = vmatprep.subr.bf16.mxu0 0
      %719 = vmatpush1.bf16.msra.mxu0 0
      %720 = vmatprep.subr.bf16.mxu0 0
      %721 = vmatpush1.bf16.msra.mxu0 0
      %722 = vmatprep.subr.bf16.mxu0 0
      %723 = vmatpush1.bf16.msra.mxu0 0
      %724 = vmatprep.subr.bf16.mxu0 0
      %725 = vmatpush1.bf16.msra.mxu0 0
      %726 = vmatprep.subr.bf16.mxu0 0
      %727 = vmatpush1.bf16.msra.mxu0 0
      %728 = vmatprep.subr.bf16.mxu0 0
      %729 = vmatpush1.bf16.msra.mxu0 0
      %730 = vmatprep.subr.bf16.mxu0 0
      %731 = vmatpush1.bf16.msra.mxu0 0
      %732 = vmatprep.mubr.bf16.mxu0 0
      %733 = vmatmul.mubr.bf16.gmra.mrb[0].mxu0 %v381
      %v734 = vpop.f32.mrb[0].mxu0
      %v735 = vadd.f32 %v672, %v734
      %v736 = vpop.f32.mrb[0].mxu0
      %v737 = vadd.f32 %v674, %v736
      %v738 = vpop.f32.mrb[0].mxu0
      %v739 = vadd.f32 %v676, %v738
      %v740 = vpop.f32.mrb[0].mxu0
      %v741 = vadd.f32 %v678, %v740
      %742 = vmatprep.mubr.bf16.mxu0 0
      %743 = vmatmul.mubr.bf16.gmra.mrb[0].mxu0 %v384
      %v744 = vpop.f32.mrb[0].mxu0
      %v745 = vadd.f32 %v682, %v744
      %v746 = vpop.f32.mrb[0].mxu0
      %v747 = vadd.f32 %v684, %v746
      %v748 = vpop.f32.mrb[0].mxu0
      %v749 = vadd.f32 %v686, %v748
      %v750 = vpop.f32.mrb[0].mxu0
      %v751 = vadd.f32 %v688, %v750
      %752 = vmatprep.mubr.bf16.mxu0 0
      %753 = vmatmul.mubr.bf16.gmra.mrb[0].mxu0 %v387
      %v754 = vpop.f32.mrb[0].mxu0
      %v755 = vadd.f32 %v692, %v754
      %v756 = vpop.f32.mrb[0].mxu0
      %v757 = vadd.f32 %v694, %v756
      %v758 = vpop.f32.mrb[0].mxu0
      %v759 = vadd.f32 %v696, %v758
      %v760 = vpop.f32.mrb[0].mxu0
      %v761 = vadd.f32 %v698, %v760
      %762 = vdwg.mxu0
      %v775 = vunpack.c.l.b16 %v225
      %v776 = vunpack.c.h.b16 %v225
      %v777 = vunpack.c.l.b16 %v226
      %v778 = vunpack.c.l.b16 %v227
      %v779 = vunpack.c.h.b16 %v227
      %v780 = vunpack.c.l.b16 %v228
      %v781 = vunpack.c.l.b16 %v229
      %v782 = vunpack.c.h.b16 %v229
      %v783 = vunpack.c.l.b16 %v230
      %v784 = vunpack.c.l.b16 %v231
      %v785 = vunpack.c.h.b16 %v231
      %v786 = vunpack.c.l.b16 %v232
      %v787 = vunpack.c.l.b16 %v233
      %v788 = vunpack.c.h.b16 %v233
      %v789 = vunpack.c.l.b16 %v234
      %v790 = vunpack.c.l.b16 %v235
      %v791 = vunpack.c.h.b16 %v235
      %v792 = vunpack.c.l.b16 %v236
      %v793 = vpack.c.b16 %v778, %v775
      %v794 = vpack.c.b16 %v779, %v776
      %v795 = vpack.c.b16 %v780, %v777
      %v796 = vpack.c.b16 %v784, %v781
      %v797 = vpack.c.b16 %v785, %v782
      %v798 = vpack.c.b16 %v786, %v783
      %v799 = vpack.c.b16 %v790, %v787
      %v800 = vpack.c.b16 %v791, %v788
      %v801 = vpack.c.b16 %v792, %v789
      %v859 = vunpack.c.l.b16 %v237
      %v860 = vunpack.c.h.b16 %v237
      %v861 = vunpack.c.l.b16 %v238
      %v862 = vunpack.c.h.b16 %v238
      %v863 = vunpack.c.l.b16 %v239
      %v864 = vunpack.c.h.b16 %v239
      %v865 = vunpack.c.l.b16 %v240
      %v866 = vunpack.c.h.b16 %v240
      %v867 = vunpack.c.l.b16 %v241
      %v868 = vunpack.c.h.b16 %v241
      %v869 = vunpack.c.l.b16 %v242
      %v870 = vunpack.c.h.b16 %v242
      %v871 = vunpack.c.l.b16 %v243
      %v872 = vunpack.c.h.b16 %v243
      %v873 = vunpack.c.l.b16 %v244
      %v874 = vunpack.c.h.b16 %v244
      %v875 = vunpack.c.l.b16 %v245
      %v876 = vunpack.c.h.b16 %v245
      %v877 = vunpack.c.l.b16 %v246
      %v878 = vunpack.c.h.b16 %v246
      %v879 = vunpack.c.l.b16 %v247
      %v880 = vunpack.c.h.b16 %v247
      %v881 = vunpack.c.l.b16 %v248
      %v882 = vunpack.c.h.b16 %v248
      %v883 = vunpack.c.l.b16 %v249
      %v884 = vunpack.c.h.b16 %v249
      %v885 = vunpack.c.l.b16 %v250
      %v886 = vunpack.c.h.b16 %v250
      %v887 = vunpack.c.l.b16 %v251
      %v888 = vunpack.c.h.b16 %v251
      %v889 = vunpack.c.l.b16 %v252
      %v890 = vunpack.c.h.b16 %v252
      %v891 = vunpack.c.l.b16 %v253
      %v892 = vunpack.c.h.b16 %v253
      %v893 = vunpack.c.l.b16 %v254
      %v894 = vunpack.c.h.b16 %v254
      %v895 = vunpack.c.l.b16 %v255
      %v896 = vunpack.c.h.b16 %v255
      %v897 = vunpack.c.l.b16 %v256
      %v898 = vunpack.c.h.b16 %v256
      %v899 = vunpack.c.l.b16 %v257
      %v900 = vunpack.c.h.b16 %v257
      %v901 = vunpack.c.l.b16 %v258
      %v902 = vunpack.c.h.b16 %v258
      %v903 = vunpack.c.l.b16 %v259
      %v904 = vunpack.c.h.b16 %v259
      %v905 = vunpack.c.l.b16 %v260
      %v906 = vunpack.c.h.b16 %v260
      %v907 = vunpack.c.l.b16 %v261
      %v908 = vunpack.c.h.b16 %v261
      %v909 = vunpack.c.l.b16 %v262
      %v910 = vunpack.c.h.b16 %v262
      %v911 = vunpack.c.l.b16 %v263
      %v912 = vunpack.c.h.b16 %v263
      %v913 = vunpack.c.l.b16 %v264
      %v914 = vunpack.c.h.b16 %v264
      %v915 = vunpack.c.l.b16 %v265
      %v916 = vunpack.c.h.b16 %v265
      %v917 = vunpack.c.l.b16 %v266
      %v918 = vunpack.c.h.b16 %v266
      %v919 = vunpack.c.l.b16 %v267
      %v920 = vunpack.c.h.b16 %v267
      %v921 = vunpack.c.l.b16 %v268
      %v922 = vunpack.c.h.b16 %v268
      %v923 = vunpack.c.l.b16 %v269
      %v924 = vunpack.c.h.b16 %v269
      %v925 = vunpack.c.l.b16 %v270
      %v926 = vunpack.c.h.b16 %v270
      %v927 = vunpack.c.l.b16 %v271
      %v928 = vunpack.c.h.b16 %v271
      %v929 = vunpack.c.l.b16 %v272
      %v930 = vunpack.c.h.b16 %v272
      %v931 = vunpack.c.l.b16 %v273
      %v932 = vunpack.c.h.b16 %v273
      %v933 = vunpack.c.l.b16 %v274
      %v934 = vunpack.c.h.b16 %v274
      %v935 = vunpack.c.l.b16 %v275
      %v936 = vunpack.c.h.b16 %v275
      %v937 = vunpack.c.l.b16 %v276
      %v938 = vunpack.c.h.b16 %v276
      %v939 = vunpack.c.l.b16 %v277
      %v940 = vunpack.c.h.b16 %v277
      %v941 = vunpack.c.l.b16 %v278
      %v942 = vunpack.c.h.b16 %v278
      %v943 = vunpack.c.l.b16 %v279
      %v944 = vunpack.c.h.b16 %v279
      %v945 = vunpack.c.l.b16 %v280
      %v946 = vunpack.c.h.b16 %v280
      %v947 = vunpack.c.l.b16 %v281
      %v948 = vunpack.c.h.b16 %v281
      %v949 = vunpack.c.l.b16 %v282
      %v950 = vunpack.c.h.b16 %v282
      %v951 = vunpack.c.l.b16 %v283
      %v952 = vunpack.c.h.b16 %v283
      %v953 = vunpack.c.l.b16 %v284
      %v954 = vunpack.c.h.b16 %v284
      %v955 = vpack.c.b16 %v861, %v859
      %v956 = vpack.c.b16 %v862, %v860
      %v957 = vpack.c.b16 %v865, %v863
      %v958 = vpack.c.b16 %v866, %v864
      %v959 = vpack.c.b16 %v869, %v867
      %v960 = vpack.c.b16 %v870, %v868
      %v961 = vpack.c.b16 %v873, %v871
      %v962 = vpack.c.b16 %v874, %v872
      %v963 = vpack.c.b16 %v877, %v875
      %v964 = vpack.c.b16 %v878, %v876
      %v965 = vpack.c.b16 %v881, %v879
      %v966 = vpack.c.b16 %v882, %v880
      %v967 = vpack.c.b16 %v885, %v883
      %v968 = vpack.c.b16 %v886, %v884
      %v969 = vpack.c.b16 %v889, %v887
      %v970 = vpack.c.b16 %v890, %v888
      %v971 = vpack.c.b16 %v893, %v891
      %v972 = vpack.c.b16 %v894, %v892
      %v973 = vpack.c.b16 %v897, %v895
      %v974 = vpack.c.b16 %v898, %v896
      %v975 = vpack.c.b16 %v901, %v899
      %v976 = vpack.c.b16 %v902, %v900
      %v977 = vpack.c.b16 %v905, %v903
      %v978 = vpack.c.b16 %v906, %v904
      %v979 = vpack.c.b16 %v909, %v907
      %v980 = vpack.c.b16 %v910, %v908
      %v981 = vpack.c.b16 %v913, %v911
      %v982 = vpack.c.b16 %v914, %v912
      %v983 = vpack.c.b16 %v917, %v915
      %v984 = vpack.c.b16 %v918, %v916
      %v985 = vpack.c.b16 %v921, %v919
      %v986 = vpack.c.b16 %v922, %v920
      %v987 = vpack.c.b16 %v925, %v923
      %v988 = vpack.c.b16 %v926, %v924
      %v989 = vpack.c.b16 %v929, %v927
      %v990 = vpack.c.b16 %v930, %v928
      %v991 = vpack.c.b16 %v933, %v931
      %v992 = vpack.c.b16 %v934, %v932
      %v993 = vpack.c.b16 %v937, %v935
      %v994 = vpack.c.b16 %v938, %v936
      %v995 = vpack.c.b16 %v941, %v939
      %v996 = vpack.c.b16 %v942, %v940
      %v997 = vpack.c.b16 %v945, %v943
      %v998 = vpack.c.b16 %v946, %v944
      %v999 = vpack.c.b16 %v949, %v947
      %v1000 = vpack.c.b16 %v950, %v948
      %v1001 = vpack.c.b16 %v953, %v951
      %v1002 = vpack.c.b16 %v954, %v952
      %1051 = vmatprep.subr.bf16.mxu0 %v956
      %1052 = vmatpush1.bf16.msra.mxu0 %v955
      %1053 = vmatprep.subr.bf16.mxu0 %v958
      %1054 = vmatpush1.bf16.msra.mxu0 %v957
      %1055 = vmatprep.subr.bf16.mxu0 %v960
      %1056 = vmatpush1.bf16.msra.mxu0 %v959
      %1057 = vmatprep.subr.bf16.mxu0 %v962
      %1058 = vmatpush1.bf16.msra.mxu0 %v961
      %1059 = vmatprep.subr.bf16.mxu0 %v964
      %1060 = vmatpush1.bf16.msra.mxu0 %v963
      %1061 = vmatprep.subr.bf16.mxu0 %v966
      %1062 = vmatpush1.bf16.msra.mxu0 %v965
      %1063 = vmatprep.subr.bf16.mxu0 %v968
      %1064 = vmatpush1.bf16.msra.mxu0 %v967
      %1065 = vmatprep.subr.bf16.mxu0 %v970
      %1066 = vmatpush1.bf16.msra.mxu0 %v969
      %1067 = vmatprep.subr.bf16.mxu0 %v972
      %1068 = vmatpush1.bf16.msra.mxu0 %v971
      %1069 = vmatprep.subr.bf16.mxu0 %v974
      %1070 = vmatpush1.bf16.msra.mxu0 %v973
      %1071 = vmatprep.subr.bf16.mxu0 %v976
      %1072 = vmatpush1.bf16.msra.mxu0 %v975
      %1073 = vmatprep.subr.bf16.mxu0 %v978
      %1074 = vmatpush1.bf16.msra.mxu0 %v977
      %1075 = vmatprep.subr.bf16.mxu0 %v980
      %1076 = vmatpush1.bf16.msra.mxu0 %v979
      %1077 = vmatprep.subr.bf16.mxu0 %v982
      %1078 = vmatpush1.bf16.msra.mxu0 %v981
      %1079 = vmatprep.subr.bf16.mxu0 %v984
      %1080 = vmatpush1.bf16.msra.mxu0 %v983
      %1081 = vmatprep.subr.bf16.mxu0 %v986
      %1082 = vmatpush1.bf16.msra.mxu0 %v985
      %1083 = vmatprep.mubr.bf16.mxu0 %v794
      %1084 = vmatmul.mubr.bf16.gmra.mrb[0].mxu0 %v793
      %v1085 = vpop.f32.mrb[0].mxu0
      %v1086 = vadd.f32 %v735, %v1085
      %v1087 = vpop.f32.mrb[0].mxu0
      %v1088 = vadd.f32 %v737, %v1087
      %v1089 = vpop.f32.mrb[0].mxu0
      %v1090 = vadd.f32 %v739, %v1089
      %v1091 = vpop.f32.mrb[0].mxu0
      %v1092 = vadd.f32 %v741, %v1091
      %1093 = vmatprep.mubr.bf16.mxu0 %v797
      %1094 = vmatmul.mubr.bf16.gmra.mrb[0].mxu0 %v796
      %v1095 = vpop.f32.mrb[0].mxu0
      %v1096 = vadd.f32 %v745, %v1095
      %v1097 = vpop.f32.mrb[0].mxu0
      %v1098 = vadd.f32 %v747, %v1097
      %v1099 = vpop.f32.mrb[0].mxu0
      %v1100 = vadd.f32 %v749, %v1099
      %v1101 = vpop.f32.mrb[0].mxu0
      %v1102 = vadd.f32 %v751, %v1101
      %1103 = vmatprep.mubr.bf16.mxu0 %v800
      %1104 = vmatmul.mubr.bf16.gmra.mrb[0].mxu0 %v799
      %v1105 = vpop.f32.mrb[0].mxu0
      %v1106 = vadd.f32 %v755, %v1105
      %v1107 = vpop.f32.mrb[0].mxu0
      %v1108 = vadd.f32 %v757, %v1107
      %v1109 = vpop.f32.mrb[0].mxu0
      %v1110 = vadd.f32 %v759, %v1109
      %v1111 = vpop.f32.mrb[0].mxu0
      %v1112 = vadd.f32 %v761, %v1111
      %1113 = vdwg.mxu0
      %1114 = vmatprep.subr.bf16.mxu0 %v988
      %1115 = vmatpush1.bf16.msra.mxu0 %v987
      %1116 = vmatprep.subr.bf16.mxu0 %v990
      %1117 = vmatpush1.bf16.msra.mxu0 %v989
      %1118 = vmatprep.subr.bf16.mxu0 %v992
      %1119 = vmatpush1.bf16.msra.mxu0 %v991
      %1120 = vmatprep.subr.bf16.mxu0 %v994
      %1121 = vmatpush1.bf16.msra.mxu0 %v993
      %1122 = vmatprep.subr.bf16.mxu0 %v996
      %1123 = vmatpush1.bf16.msra.mxu0 %v995
      %1124 = vmatprep.subr.bf16.mxu0 %v998
      %1125 = vmatpush1.bf16.msra.mxu0 %v997
      %1126 = vmatprep.subr.bf16.mxu0 %v1000
      %1127 = vmatpush1.bf16.msra.mxu0 %v999
      %1128 = vmatprep.subr.bf16.mxu0 %v1002
      %1129 = vmatpush1.bf16.msra.mxu0 %v1001
      %1130 = vmatprep.subr.bf16.mxu0 0
      %1131 = vmatpush1.bf16.msra.mxu0 0
      %1132 = vmatprep.subr.bf16.mxu0 0
      %1133 = vmatpush1.bf16.msra.mxu0 0
      %1134 = vmatprep.subr.bf16.mxu0 0
      %1135 = vmatpush1.bf16.msra.mxu0 0
      %1136 = vmatprep.subr.bf16.mxu0 0
      %1137 = vmatpush1.bf16.msra.mxu0 0
      %1138 = vmatprep.subr.bf16.mxu0 0
      %1139 = vmatpush1.bf16.msra.mxu0 0
      %1140 = vmatprep.subr.bf16.mxu0 0
      %1141 = vmatpush1.bf16.msra.mxu0 0
      %1142 = vmatprep.subr.bf16.mxu0 0
      %1143 = vmatpush1.bf16.msra.mxu0 0
      %1144 = vmatprep.subr.bf16.mxu0 0
      %1145 = vmatpush1.bf16.msra.mxu0 0
      %1146 = vmatprep.mubr.bf16.mxu0 0
      %1147 = vmatmul.mubr.bf16.gmra.mrb[0].mxu0 %v795
      %v1148 = vpop.f32.mrb[0].mxu0
      %v1149 = vadd.f32 %v1086, %v1148
      %v1150 = vpop.f32.mrb[0].mxu0
      %v1151 = vadd.f32 %v1088, %v1150
      %v1152 = vpop.f32.mrb[0].mxu0
      %v1153 = vadd.f32 %v1090, %v1152
      %v1154 = vpop.f32.mrb[0].mxu0
      %v1155 = vadd.f32 %v1092, %v1154
      %1156 = vmatprep.mubr.bf16.mxu0 0
      %1157 = vmatmul.mubr.bf16.gmra.mrb[0].mxu0 %v798
      %v1158 = vpop.f32.mrb[0].mxu0
      %v1159 = vadd.f32 %v1096, %v1158
      %v1160 = vpop.f32.mrb[0].mxu0
      %v1161 = vadd.f32 %v1098, %v1160
      %v1162 = vpop.f32.mrb[0].mxu0
      %v1163 = vadd.f32 %v1100, %v1162
      %v1164 = vpop.f32.mrb[0].mxu0
      %v1165 = vadd.f32 %v1102, %v1164
      %1166 = vmatprep.mubr.bf16.mxu0 0
      %1167 = vmatmul.mubr.bf16.gmra.mrb[0].mxu0 %v801
      %v1168 = vpop.f32.mrb[0].mxu0
      %v1169 = vadd.f32 %v1106, %v1168
      %v1170 = vpop.f32.mrb[0].mxu0
      %v1171 = vadd.f32 %v1108, %v1170
      %v1172 = vpop.f32.mrb[0].mxu0
      %v1173 = vadd.f32 %v1110, %v1172
      %v1174 = vpop.f32.mrb[0].mxu0
      %v1175 = vadd.f32 %v1112, %v1174
      %1176 = vdwg.mxu0
      %s1177 = sadd.s32 %s219, 8
      %s1178 = sshra.s32 %s1177, 3
      %s1179 = sand.u32 %s1177, 7
      %s1180 = smul.u32 %s1178, 3
      %s1181 = smul.addr %s1180, 4
      %s1182 = scalar_lea.vmem %s0, %s1181
      %v1183 = vld [vmem:[%s1182] sm:$0xff]
      %v1184 = vld [vmem:[%s1182 + $0x8] sm:$0xf]
      %v1185 = vld [vmem:[%s1182 + $0xc] sm:$0xff]
      %v1186 = vld [vmem:[%s1182 + $0x14] sm:$0xf]
      %v1187 = vld [vmem:[%s1182 + $0x18] sm:$0xff]
      %v1188 = vld [vmem:[%s1182 + $0x20] sm:$0xf]
      %v1189 = vld [vmem:[%s1182 + $0x24] sm:$0xff]
      %v1190 = vld [vmem:[%s1182 + $0x2c] sm:$0xf]
      %v1191 = vld [vmem:[%s1182 + $0x30] sm:$0xff]
      %v1192 = vld [vmem:[%s1182 + $0x38] sm:$0xf]
      %v1193 = vld [vmem:[%s1182 + $0x3c] sm:$0xff]
      %v1194 = vld [vmem:[%s1182 + $0x44] sm:$0xf]
      %s1195 = scalar_lea.vmem %s199, 768
      %v1196 = vld [vmem:[%s1195] sm:$0xff]
      %v1197 = vld [vmem:[%s1195 + $0x8] sm:$0xff]
      %v1198 = vld [vmem:[%s1195 + $0x10] sm:$0xff]
      %v1199 = vld [vmem:[%s1195 + $0x18] sm:$0xff]
      %v1200 = vld [vmem:[%s1195 + $0x20] sm:$0xff]
      %v1201 = vld [vmem:[%s1195 + $0x28] sm:$0xff]
      %v1202 = vld [vmem:[%s1195 + $0x30] sm:$0xff]
      %v1203 = vld [vmem:[%s1195 + $0x38] sm:$0xff]
      %v1204 = vld [vmem:[%s1195 + $0x40] sm:$0xff]
      %v1205 = vld [vmem:[%s1195 + $0x48] sm:$0xff]
      %v1206 = vld [vmem:[%s1195 + $0x50] sm:$0xff]
      %v1207 = vld [vmem:[%s1195 + $0x58] sm:$0xff]
      %v1208 = vld [vmem:[%s1195 + $0x60] sm:$0xff]
      %v1209 = vld [vmem:[%s1195 + $0x68] sm:$0xff]
      %v1210 = vld [vmem:[%s1195 + $0x70] sm:$0xff]
      %v1211 = vld [vmem:[%s1195 + $0x78] sm:$0xff]
      %v1212 = vld [vmem:[%s1195 + $0x80] sm:$0xff]
      %v1213 = vld [vmem:[%s1195 + $0x88] sm:$0xff]
      %v1214 = vld [vmem:[%s1195 + $0x90] sm:$0xff]
      %v1215 = vld [vmem:[%s1195 + $0x98] sm:$0xff]
      %v1216 = vld [vmem:[%s1195 + $0xa0] sm:$0xff]
      %v1217 = vld [vmem:[%s1195 + $0xa8] sm:$0xff]
      %v1218 = vld [vmem:[%s1195 + $0xb0] sm:$0xff]
      %v1219 = vld [vmem:[%s1195 + $0xb8] sm:$0xff]
      %v1220 = vld [vmem:[%s1195 + $0xc0] sm:$0xff]
      %v1221 = vld [vmem:[%s1195 + $0xc8] sm:$0xff]
      %v1222 = vld [vmem:[%s1195 + $0xd0] sm:$0xff]
      %v1223 = vld [vmem:[%s1195 + $0xd8] sm:$0xff]
      %v1224 = vld [vmem:[%s1195 + $0xe0] sm:$0xff]
      %v1225 = vld [vmem:[%s1195 + $0xe8] sm:$0xff]
      %v1226 = vld [vmem:[%s1195 + $0xf0] sm:$0xff]
      %v1227 = vld [vmem:[%s1195 + $0xf8] sm:$0xff]
      %v1228 = vld [vmem:[%s1195 + $0x100] sm:$0xff]
      %v1229 = vld [vmem:[%s1195 + $0x108] sm:$0xff]
      %v1230 = vld [vmem:[%s1195 + $0x110] sm:$0xff]
      %v1231 = vld [vmem:[%s1195 + $0x118] sm:$0xff]
      %v1232 = vld [vmem:[%s1195 + $0x120] sm:$0xff]
      %v1233 = vld [vmem:[%s1195 + $0x128] sm:$0xff]
      %v1234 = vld [vmem:[%s1195 + $0x130] sm:$0xff]
      %v1235 = vld [vmem:[%s1195 + $0x138] sm:$0xff]
      %v1236 = vld [vmem:[%s1195 + $0x140] sm:$0xff]
      %v1237 = vld [vmem:[%s1195 + $0x148] sm:$0xff]
      %v1238 = vld [vmem:[%s1195 + $0x150] sm:$0xff]
      %v1239 = vld [vmem:[%s1195 + $0x158] sm:$0xff]
      %v1240 = vld [vmem:[%s1195 + $0x160] sm:$0xff]
      %v1241 = vld [vmem:[%s1195 + $0x168] sm:$0xff]
      %v1242 = vld [vmem:[%s1195 + $0x170] sm:$0xff]
      %v1243 = vld [vmem:[%s1195 + $0x178] sm:$0xff]
      %v1256 = vunpack.c.l.b16 %v1183
      %v1257 = vunpack.c.h.b16 %v1183
      %v1258 = vunpack.c.l.b16 %v1184
      %v1259 = vunpack.c.l.b16 %v1185
      %v1260 = vunpack.c.h.b16 %v1185
      %v1261 = vunpack.c.l.b16 %v1186
      %v1262 = vunpack.c.l.b16 %v1187
      %v1263 = vunpack.c.h.b16 %v1187
      %v1264 = vunpack.c.l.b16 %v1188
      %v1265 = vunpack.c.l.b16 %v1189
      %v1266 = vunpack.c.h.b16 %v1189
      %v1267 = vunpack.c.l.b16 %v1190
      %v1268 = vunpack.c.l.b16 %v1191
      %v1269 = vunpack.c.h.b16 %v1191
      %v1270 = vunpack.c.l.b16 %v1192
      %v1271 = vunpack.c.l.b16 %v1193
      %v1272 = vunpack.c.h.b16 %v1193
      %v1273 = vunpack.c.l.b16 %v1194
      %v1274 = vpack.c.b16 %v1259, %v1256
      %v1275 = vpack.c.b16 %v1260, %v1257
      %v1276 = vpack.c.b16 %v1261, %v1258
      %v1277 = vpack.c.b16 %v1265, %v1262
      %v1278 = vpack.c.b16 %v1266, %v1263
      %v1279 = vpack.c.b16 %v1267, %v1264
      %v1280 = vpack.c.b16 %v1271, %v1268
      %v1281 = vpack.c.b16 %v1272, %v1269
      %v1282 = vpack.c.b16 %v1273, %v1270
      %v1340 = vunpack.c.l.b16 %v1196
      %v1341 = vunpack.c.h.b16 %v1196
      %v1342 = vunpack.c.l.b16 %v1197
      %v1343 = vunpack.c.h.b16 %v1197
      %v1344 = vunpack.c.l.b16 %v1198
      %v1345 = vunpack.c.h.b16 %v1198
      %v1346 = vunpack.c.l.b16 %v1199
      %v1347 = vunpack.c.h.b16 %v1199
      %v1348 = vunpack.c.l.b16 %v1200
      %v1349 = vunpack.c.h.b16 %v1200
      %v1350 = vunpack.c.l.b16 %v1201
      %v1351 = vunpack.c.h.b16 %v1201
      %v1352 = vunpack.c.l.b16 %v1202
      %v1353 = vunpack.c.h.b16 %v1202
      %v1354 = vunpack.c.l.b16 %v1203
      %v1355 = vunpack.c.h.b16 %v1203
      %v1356 = vunpack.c.l.b16 %v1204
      %v1357 = vunpack.c.h.b16 %v1204
      %v1358 = vunpack.c.l.b16 %v1205
      %v1359 = vunpack.c.h.b16 %v1205
      %v1360 = vunpack.c.l.b16 %v1206
      %v1361 = vunpack.c.h.b16 %v1206
      %v1362 = vunpack.c.l.b16 %v1207
      %v1363 = vunpack.c.h.b16 %v1207
      %v1364 = vunpack.c.l.b16 %v1208
      %v1365 = vunpack.c.h.b16 %v1208
      %v1366 = vunpack.c.l.b16 %v1209
      %v1367 = vunpack.c.h.b16 %v1209
      %v1368 = vunpack.c.l.b16 %v1210
      %v1369 = vunpack.c.h.b16 %v1210
      %v1370 = vunpack.c.l.b16 %v1211
      %v1371 = vunpack.c.h.b16 %v1211
      %v1372 = vunpack.c.l.b16 %v1212
      %v1373 = vunpack.c.h.b16 %v1212
      %v1374 = vunpack.c.l.b16 %v1213
      %v1375 = vunpack.c.h.b16 %v1213
      %v1376 = vunpack.c.l.b16 %v1214
      %v1377 = vunpack.c.h.b16 %v1214
      %v1378 = vunpack.c.l.b16 %v1215
      %v1379 = vunpack.c.h.b16 %v1215
      %v1380 = vunpack.c.l.b16 %v1216
      %v1381 = vunpack.c.h.b16 %v1216
      %v1382 = vunpack.c.l.b16 %v1217
      %v1383 = vunpack.c.h.b16 %v1217
      %v1384 = vunpack.c.l.b16 %v1218
      %v1385 = vunpack.c.h.b16 %v1218
      %v1386 = vunpack.c.l.b16 %v1219
      %v1387 = vunpack.c.h.b16 %v1219
      %v1388 = vunpack.c.l.b16 %v1220
      %v1389 = vunpack.c.h.b16 %v1220
      %v1390 = vunpack.c.l.b16 %v1221
      %v1391 = vunpack.c.h.b16 %v1221
      %v1392 = vunpack.c.l.b16 %v1222
      %v1393 = vunpack.c.h.b16 %v1222
      %v1394 = vunpack.c.l.b16 %v1223
      %v1395 = vunpack.c.h.b16 %v1223
      %v1396 = vunpack.c.l.b16 %v1224
      %v1397 = vunpack.c.h.b16 %v1224
      %v1398 = vunpack.c.l.b16 %v1225
      %v1399 = vunpack.c.h.b16 %v1225
      %v1400 = vunpack.c.l.b16 %v1226
      %v1401 = vunpack.c.h.b16 %v1226
      %v1402 = vunpack.c.l.b16 %v1227
      %v1403 = vunpack.c.h.b16 %v1227
      %v1404 = vunpack.c.l.b16 %v1228
      %v1405 = vunpack.c.h.b16 %v1228
      %v1406 = vunpack.c.l.b16 %v1229
      %v1407 = vunpack.c.h.b16 %v1229
      %v1408 = vunpack.c.l.b16 %v1230
      %v1409 = vunpack.c.h.b16 %v1230
      %v1410 = vunpack.c.l.b16 %v1231
      %v1411 = vunpack.c.h.b16 %v1231
      %v1412 = vunpack.c.l.b16 %v1232
      %v1413 = vunpack.c.h.b16 %v1232
      %v1414 = vunpack.c.l.b16 %v1233
      %v1415 = vunpack.c.h.b16 %v1233
      %v1416 = vunpack.c.l.b16 %v1234
      %v1417 = vunpack.c.h.b16 %v1234
      %v1418 = vunpack.c.l.b16 %v1235
      %v1419 = vunpack.c.h.b16 %v1235
      %v1420 = vunpack.c.l.b16 %v1236
      %v1421 = vunpack.c.h.b16 %v1236
      %v1422 = vunpack.c.l.b16 %v1237
      %v1423 = vunpack.c.h.b16 %v1237
      %v1424 = vunpack.c.l.b16 %v1238
      %v1425 = vunpack.c.h.b16 %v1238
      %v1426 = vunpack.c.l.b16 %v1239
      %v1427 = vunpack.c.h.b16 %v1239
      %v1428 = vunpack.c.l.b16 %v1240
      %v1429 = vunpack.c.h.b16 %v1240
      %v1430 = vunpack.c.l.b16 %v1241
      %v1431 = vunpack.c.h.b16 %v1241
      %v1432 = vunpack.c.l.b16 %v1242
      %v1433 = vunpack.c.h.b16 %v1242
      %v1434 = vunpack.c.l.b16 %v1243
      %v1435 = vunpack.c.h.b16 %v1243
      %v1436 = vpack.c.b16 %v1342, %v1340
      %v1437 = vpack.c.b16 %v1343, %v1341
      %v1438 = vpack.c.b16 %v1346, %v1344
      %v1439 = vpack.c.b16 %v1347, %v1345
      %v1440 = vpack.c.b16 %v1350, %v1348
      %v1441 = vpack.c.b16 %v1351, %v1349
      %v1442 = vpack.c.b16 %v1354, %v1352
      %v1443 = vpack.c.b16 %v1355, %v1353
      %v1444 = vpack.c.b16 %v1358, %v1356
      %v1445 = vpack.c.b16 %v1359, %v1357
      %v1446 = vpack.c.b16 %v1362, %v1360
      %v1447 = vpack.c.b16 %v1363, %v1361
      %v1448 = vpack.c.b16 %v1366, %v1364
      %v1449 = vpack.c.b16 %v1367, %v1365
      %v1450 = vpack.c.b16 %v1370, %v1368
      %v1451 = vpack.c.b16 %v1371, %v1369
      %v1452 = vpack.c.b16 %v1374, %v1372
      %v1453 = vpack.c.b16 %v1375, %v1373
      %v1454 = vpack.c.b16 %v1378, %v1376
      %v1455 = vpack.c.b16 %v1379, %v1377
      %v1456 = vpack.c.b16 %v1382, %v1380
      %v1457 = vpack.c.b16 %v1383, %v1381
      %v1458 = vpack.c.b16 %v1386, %v1384
      %v1459 = vpack.c.b16 %v1387, %v1385
      %v1460 = vpack.c.b16 %v1390, %v1388
      %v1461 = vpack.c.b16 %v1391, %v1389
      %v1462 = vpack.c.b16 %v1394, %v1392
      %v1463 = vpack.c.b16 %v1395, %v1393
      %v1464 = vpack.c.b16 %v1398, %v1396
      %v1465 = vpack.c.b16 %v1399, %v1397
      %v1466 = vpack.c.b16 %v1402, %v1400
      %v1467 = vpack.c.b16 %v1403, %v1401
      %v1468 = vpack.c.b16 %v1406, %v1404
      %v1469 = vpack.c.b16 %v1407, %v1405
      %v1470 = vpack.c.b16 %v1410, %v1408
      %v1471 = vpack.c.b16 %v1411, %v1409
      %v1472 = vpack.c.b16 %v1414, %v1412
      %v1473 = vpack.c.b16 %v1415, %v1413
      %v1474 = vpack.c.b16 %v1418, %v1416
      %v1475 = vpack.c.b16 %v1419, %v1417
      %v1476 = vpack.c.b16 %v1422, %v1420
      %v1477 = vpack.c.b16 %v1423, %v1421
      %v1478 = vpack.c.b16 %v1426, %v1424
      %v1479 = vpack.c.b16 %v1427, %v1425
      %v1480 = vpack.c.b16 %v1430, %v1428
      %v1481 = vpack.c.b16 %v1431, %v1429
      %v1482 = vpack.c.b16 %v1434, %v1432
      %v1483 = vpack.c.b16 %v1435, %v1433
      %1532 = vmatprep.subr.bf16.mxu0 %v1437
      %1533 = vmatpush1.bf16.msra.mxu0 %v1436
      %1534 = vmatprep.subr.bf16.mxu0 %v1439
      %1535 = vmatpush1.bf16.msra.mxu0 %v1438
      %1536 = vmatprep.subr.bf16.mxu0 %v1441
      %1537 = vmatpush1.bf16.msra.mxu0 %v1440
      %1538 = vmatprep.subr.bf16.mxu0 %v1443
      %1539 = vmatpush1.bf16.msra.mxu0 %v1442
      %1540 = vmatprep.subr.bf16.mxu0 %v1445
      %1541 = vmatpush1.bf16.msra.mxu0 %v1444
      %1542 = vmatprep.subr.bf16.mxu0 %v1447
      %1543 = vmatpush1.bf16.msra.mxu0 %v1446
      %1544 = vmatprep.subr.bf16.mxu0 %v1449
      %1545 = vmatpush1.bf16.msra.mxu0 %v1448
      %1546 = vmatprep.subr.bf16.mxu0 %v1451
      %1547 = vmatpush1.bf16.msra.mxu0 %v1450
      %1548 = vmatprep.subr.bf16.mxu0 %v1453
      %1549 = vmatpush1.bf16.msra.mxu0 %v1452
      %1550 = vmatprep.subr.bf16.mxu0 %v1455
      %1551 = vmatpush1.bf16.msra.mxu0 %v1454
      %1552 = vmatprep.subr.bf16.mxu0 %v1457
      %1553 = vmatpush1.bf16.msra.mxu0 %v1456
      %1554 = vmatprep.subr.bf16.mxu0 %v1459
      %1555 = vmatpush1.bf16.msra.mxu0 %v1458
      %1556 = vmatprep.subr.bf16.mxu0 %v1461
      %1557 = vmatpush1.bf16.msra.mxu0 %v1460
      %1558 = vmatprep.subr.bf16.mxu0 %v1463
      %1559 = vmatpush1.bf16.msra.mxu0 %v1462
      %1560 = vmatprep.subr.bf16.mxu0 %v1465
      %1561 = vmatpush1.bf16.msra.mxu0 %v1464
      %1562 = vmatprep.subr.bf16.mxu0 %v1467
      %1563 = vmatpush1.bf16.msra.mxu0 %v1466
      %1564 = vmatprep.mubr.bf16.mxu0 %v1275
      %1565 = vmatmul.mubr.bf16.gmra.mrb[0].mxu0 %v1274
      %v1566 = vpop.f32.mrb[0].mxu0
      %v1567 = vadd.f32 0.0, %v1566
      %v1568 = vpop.f32.mrb[0].mxu0
      %v1569 = vadd.f32 0.0, %v1568
      %v1570 = vpop.f32.mrb[0].mxu0
      %v1571 = vadd.f32 0.0, %v1570
      %v1572 = vpop.f32.mrb[0].mxu0
      %v1573 = vadd.f32 0.0, %v1572
      %1574 = vmatprep.mubr.bf16.mxu0 %v1278
      %1575 = vmatmul.mubr.bf16.gmra.mrb[0].mxu0 %v1277
      %v1576 = vpop.f32.mrb[0].mxu0
      %v1577 = vadd.f32 0.0, %v1576
      %v1578 = vpop.f32.mrb[0].mxu0
      %v1579 = vadd.f32 0.0, %v1578
      %v1580 = vpop.f32.mrb[0].mxu0
      %v1581 = vadd.f32 0.0, %v1580
      %v1582 = vpop.f32.mrb[0].mxu0
      %v1583 = vadd.f32 0.0, %v1582
      %1584 = vmatprep.mubr.bf16.mxu0 %v1281
      %1585 = vmatmul.mubr.bf16.gmra.mrb[0].mxu0 %v1280
      %v1586 = vpop.f32.mrb[0].mxu0
      %v1587 = vadd.f32 0.0, %v1586
      %v1588 = vpop.f32.mrb[0].mxu0
      %v1589 = vadd.f32 0.0, %v1588
      %v1590 = vpop.f32.mrb[0].mxu0
      %v1591 = vadd.f32 0.0, %v1590
      %v1592 = vpop.f32.mrb[0].mxu0
      %v1593 = vadd.f32 0.0, %v1592
      %1594 = vdwg.mxu0
      %1595 = vmatprep.subr.bf16.mxu0 %v1469
      %1596 = vmatpush1.bf16.msra.mxu0 %v1468
      %1597 = vmatprep.subr.bf16.mxu0 %v1471
      %1598 = vmatpush1.bf16.msra.mxu0 %v1470
      %1599 = vmatprep.subr.bf16.mxu0 %v1473
      %1600 = vmatpush1.bf16.msra.mxu0 %v1472
      %1601 = vmatprep.subr.bf16.mxu0 %v1475
      %1602 = vmatpush1.bf16.msra.mxu0 %v1474
      %1603 = vmatprep.subr.bf16.mxu0 %v1477
      %1604 = vmatpush1.bf16.msra.mxu0 %v1476
      %1605 = vmatprep.subr.bf16.mxu0 %v1479
      %1606 = vmatpush1.bf16.msra.mxu0 %v1478
      %1607 = vmatprep.subr.bf16.mxu0 %v1481
      %1608 = vmatpush1.bf16.msra.mxu0 %v1480
      %1609 = vmatprep.subr.bf16.mxu0 %v1483
      %1610 = vmatpush1.bf16.msra.mxu0 %v1482
      %1611 = vmatprep.subr.bf16.mxu0 0
      %1612 = vmatpush1.bf16.msra.mxu0 0
      %1613 = vmatprep.subr.bf16.mxu0 0
      %1614 = vmatpush1.bf16.msra.mxu0 0
      %1615 = vmatprep.subr.bf16.mxu0 0
      %1616 = vmatpush1.bf16.msra.mxu0 0
      %1617 = vmatprep.subr.bf16.mxu0 0
      %1618 = vmatpush1.bf16.msra.mxu0 0
      %1619 = vmatprep.subr.bf16.mxu0 0
      %1620 = vmatpush1.bf16.msra.mxu0 0
      %1621 = vmatprep.subr.bf16.mxu0 0
      %1622 = vmatpush1.bf16.msra.mxu0 0
      %1623 = vmatprep.subr.bf16.mxu0 0
      %1624 = vmatpush1.bf16.msra.mxu0 0
      %1625 = vmatprep.subr.bf16.mxu0 0
      %1626 = vmatpush1.bf16.msra.mxu0 0
      %1627 = vmatprep.mubr.bf16.mxu0 0
      %1628 = vmatmul.mubr.bf16.gmra.mrb[0].mxu0 %v1276
      %v1629 = vpop.f32.mrb[0].mxu0
      %v1630 = vadd.f32 %v1567, %v1629
      %v1631 = vpop.f32.mrb[0].mxu0
      %v1632 = vadd.f32 %v1569, %v1631
      %v1633 = vpop.f32.mrb[0].mxu0
      %v1634 = vadd.f32 %v1571, %v1633
      %v1635 = vpop.f32.mrb[0].mxu0
      %v1636 = vadd.f32 %v1573, %v1635
      %1637 = vmatprep.mubr.bf16.mxu0 0
      %1638 = vmatmul.mubr.bf16.gmra.mrb[0].mxu0 %v1279
      %v1639 = vpop.f32.mrb[0].mxu0
      %v1640 = vadd.f32 %v1577, %v1639
      %v1641 = vpop.f32.mrb[0].mxu0
      %v1642 = vadd.f32 %v1579, %v1641
      %v1643 = vpop.f32.mrb[0].mxu0
      %v1644 = vadd.f32 %v1581, %v1643
      %v1645 = vpop.f32.mrb[0].mxu0
      %v1646 = vadd.f32 %v1583, %v1645
      %1647 = vmatprep.mubr.bf16.mxu0 0
      %1648 = vmatmul.mubr.bf16.gmra.mrb[0].mxu0 %v1282
      %v1649 = vpop.f32.mrb[0].mxu0
      %v1650 = vadd.f32 %v1587, %v1649
      %v1651 = vpop.f32.mrb[0].mxu0
      %v1652 = vadd.f32 %v1589, %v1651
      %v1653 = vpop.f32.mrb[0].mxu0
      %v1654 = vadd.f32 %v1591, %v1653
      %v1655 = vpop.f32.mrb[0].mxu0
      %v1656 = vadd.f32 %v1593, %v1655
      %1657 = vdwg.mxu0
      %v1658 = vadd.f32 %v1149, %v1630
      %v1659 = vadd.f32 %v1151, %v1632
      %v1660 = vadd.f32 %v1153, %v1634
      %v1661 = vadd.f32 %v1155, %v1636
      %v1662 = vadd.f32 %v1159, %v1640
      %v1663 = vadd.f32 %v1161, %v1642
      %v1664 = vadd.f32 %v1163, %v1644
      %v1665 = vadd.f32 %v1165, %v1646
      %v1666 = vadd.f32 %v1169, %v1650
      %v1667 = vadd.f32 %v1171, %v1652
      %v1668 = vadd.f32 %v1173, %v1654
      %v1669 = vadd.f32 %v1175, %v1656
      %v1670 = vld [vmem:[%s204] sm:$0x3]
      %v1672 = vlaneseq
      %v1673 = vshrl.u32 %v1672, 7
      %v1674 = vsub.s32 0, %v1673
      %v1675 = vrot.slane %v1670, %v1674
      %v1676 = vlaneseq
      %v1677 = vshrl.u32 %v1676, 7
      %v1678 = vsub.s32 1, %v1677
      %v1679 = vrot.slane %v1670, %v1678
      %v1682 = vadd.f32 %v1658, %v1675
      %v1683 = vadd.f32 %v1659, %v1679
      %v1684 = vadd.f32 %v1660, %v1675
      %v1685 = vadd.f32 %v1661, %v1679
      %v1686 = vadd.f32 %v1662, %v1675
      %v1687 = vadd.f32 %v1663, %v1679
      %v1688 = vadd.f32 %v1664, %v1675
      %v1689 = vadd.f32 %v1665, %v1679
      %v1690 = vadd.f32 %v1666, %v1675
      %v1691 = vadd.f32 %v1667, %v1679
      %v1692 = vadd.f32 %v1668, %v1675
      %v1693 = vadd.f32 %v1669, %v1679
      %vm1694 = vcmp.ge.f32.partialorder %v1682, 0.0
      %vm1695 = vcmp.ge.f32.partialorder %v1683, 0.0
      %vm1696 = vcmp.ge.f32.partialorder %v1684, 0.0
      %vm1697 = vcmp.ge.f32.partialorder %v1685, 0.0
      %vm1698 = vcmp.ge.f32.partialorder %v1686, 0.0
      %vm1699 = vcmp.ge.f32.partialorder %v1687, 0.0
      %vm1700 = vcmp.ge.f32.partialorder %v1688, 0.0
      %vm1701 = vcmp.ge.f32.partialorder %v1689, 0.0
      %vm1702 = vcmp.ge.f32.partialorder %v1690, 0.0
      %vm1703 = vcmp.ge.f32.partialorder %v1691, 0.0
      %vm1704 = vcmp.ge.f32.partialorder %v1692, 0.0
      %vm1705 = vcmp.ge.f32.partialorder %v1693, 0.0
      %v1706 = vmul.f32 %v1682, 0.2
      %v1707 = vmul.f32 %v1683, 0.2
      %v1708 = vmul.f32 %v1684, 0.2
      %v1709 = vmul.f32 %v1685, 0.2
      %v1710 = vmul.f32 %v1686, 0.2
      %v1711 = vmul.f32 %v1687, 0.2
      %v1712 = vmul.f32 %v1688, 0.2
      %v1713 = vmul.f32 %v1689, 0.2
      %v1714 = vmul.f32 %v1690, 0.2
      %v1715 = vmul.f32 %v1691, 0.2
      %v1716 = vmul.f32 %v1692, 0.2
      %v1717 = vmul.f32 %v1693, 0.2
      %v1718 = vsel %vm1694, %v1682, %v1706
      %v1719 = vsel %vm1695, %v1683, %v1707
      %v1720 = vsel %vm1696, %v1684, %v1708
      %v1721 = vsel %vm1697, %v1685, %v1709
      %v1722 = vsel %vm1698, %v1686, %v1710
      %v1723 = vsel %vm1699, %v1687, %v1711
      %v1724 = vsel %vm1700, %v1688, %v1712
      %v1725 = vsel %vm1701, %v1689, %v1713
      %v1726 = vsel %vm1702, %v1690, %v1714
      %v1727 = vsel %vm1703, %v1691, %v1715
      %v1728 = vsel %vm1704, %v1692, %v1716
      %v1729 = vsel %vm1705, %v1693, %v1717
      %v1730 = vmul.f32 %v1718, 1.4142135
      %v1731 = vmul.f32 %v1719, 1.4142135
      %v1732 = vmul.f32 %v1720, 1.4142135
      %v1733 = vmul.f32 %v1721, 1.4142135
      %v1734 = vmul.f32 %v1722, 1.4142135
      %v1735 = vmul.f32 %v1723, 1.4142135
      %v1736 = vmul.f32 %v1724, 1.4142135
      %v1737 = vmul.f32 %v1725, 1.4142135
      %v1738 = vmul.f32 %v1726, 1.4142135
      %v1739 = vmul.f32 %v1727, 1.4142135
      %v1740 = vmul.f32 %v1728, 1.4142135
      %v1741 = vmul.f32 %v1729, 1.4142135
      %1742 = vst [vmem:[%s215] sm:$0xff] %v1730
      %1743 = vst [vmem:[%s215 + $0x8] sm:$0xff] %v1731
      %1744 = vst [vmem:[%s215 + $0x10] sm:$0xff] %v1732
      %1745 = vst [vmem:[%s215 + $0x18] sm:$0xff] %v1733
      %1746 = vst [vmem:[%s215 + $0x20] sm:$0xff] %v1734
      %1747 = vst [vmem:[%s215 + $0x28] sm:$0xff] %v1735
      %1748 = vst [vmem:[%s215 + $0x30] sm:$0xff] %v1736
      %1749 = vst [vmem:[%s215 + $0x38] sm:$0xff] %v1737
      %1750 = vst [vmem:[%s215 + $0x40] sm:$0xff] %v1738
      %1751 = vst [vmem:[%s215 + $0x48] sm:$0xff] %v1739
      %1752 = vst [vmem:[%s215 + $0x50] sm:$0xff] %v1740
      %1753 = vst [vmem:[%s215 + $0x58] sm:$0xff] %v1741
      %s1754 = smul.u32 6, %s18
      %s1755 = smul.u32 2, %s19
      %p1756 = scmp.lt.s32.totalorder %s1754, 17
      %s1757 = scalar_select %p1756, %s1754, 17
      %p1758 = scmp.lt.s32.totalorder %s1755, 1
      %s1759 = scalar_select %p1758, %s1755, 1
      %s1760 = smul.addr %s1757, 2
      %s1761 = sadd.s32 %s1759, %s1760
      %s1762 = smul.addr %s1761, 8
      %s1763 = scalar_lea.vmem %s3, %s1762
      // Predicated region
      $region33: #{conv_block_forward.3} parent=31 // pred_check
        %p1764 = pneg %p119
      $region34: #{conv_block_forward.3} parent=31 // pred_check_branch
        %1766 = sbr.rel (%p1764) target = $region36
      $region35: #{conv_block_forward.3} parent=31 // pred_region
        %s1767 = smul.u32 6, %s18
        %s1768 = smul.u32 2, %s19
      $region36: #{conv_block_forward.3} parent=31 // pred_fallthru
        _
    $region32: #{conv_block_forward.3} parent=5 // pred_fallthru
      _
    %p1769 = scmp.le.s32.totalorder 2, %s9
    // Predicated region
    $region37: #{conv_block_forward.3} parent=5 // pred_check
      %p1770 = pneg %p1769
    $region38: #{conv_block_forward.3} parent=5 // pred_check_branch
      %1772 = sbr.rel (%p1770) target = $region40
    $region39: #{conv_block_forward.3} parent=5 // pred_region
      %s1773 = ssub.s32 %s9, 2
      // Predicated region
      $region41: #{conv_block_forward.3} parent=39 // pred_check
        %p1774 = pneg %p125
      $region42: #{conv_block_forward.3} parent=39 // pred_check_branch
        %1776 = sbr.rel (%p1774) target = $region44
      $region43: #{conv_block_forward.3} parent=39 // pred_region
        %s1777 = smul.u32 6, %s20
        %s1778 = smul.u32 2, %s21
        %p1779 = scmp.lt.s32.totalorder %s1777, 17
        %s1780 = scalar_select %p1779, %s1777, 17
        %p1781 = scmp.lt.s32.totalorder %s1778, 1
        %s1782 = scalar_select %p1781, %s1778, 1
        %s1783 = smul.addr %s1780, 2
        %s1784 = sadd.s32 %s1782, %s1783
        %s1785 = smul.addr %s1784, 8
        %s1786 = scalar_lea.vmem %s3, %s1785
      $region44: #{conv_block_forward.3} parent=39 // pred_fallthru
        _
    $region40: #{conv_block_forward.3} parent=5 // pred_fallthru
      _
  $region6: #{conv_block_forward.3} parent=0 // loop_footer
    %s13 = sadd.s32 1, %s9
  $region7: #{conv_block_forward.3} parent=0 // loop_footer_branch
    %8 = sbr.rel target = $region3
  $region8: #{conv_block_forward.3} parent=0 // loop_exit
    _

</llo_original>
